<compile_context>
chip_gen: v7x
topology: tpu7x:2x2x1
jax: 0.10.0
libtpu: 0.0.40
codegen_flags: <defaults>
</compile_context>

<pallas_src>
import jax
import jax.numpy as jnp
from jax import lax
from jax.experimental import pallas as pl
from jax.experimental.pallas import tpu as pltpu


def _lane_pad(c):
    return ((c + 127) // 128) * 128


def _make_basic_block_kernel(H, W, Hp, Wp, S, Bt, M, Y, Cin, Cout):
    """Fused conv3x3+BN+ReLU -> conv3x3+BN -> (+identity) -> ReLU, fixed geometry."""
    lead = Wp + 8                 # 8-aligned offset of conv1's activation inside the y frame
    tail = Bt * S - M             # = 3*Wp output rows past the last real output (never read back)
    deep_k = Cin < 128            # deep-K im2col only where K=C is too shallow for the MXU
    taps = [(ky, kx) for ky in range(3) for kx in range(3)]
    inv_wp = 1.0 / Wp
    inv_hp = 1.0 / Hp

    def kernel(xf_ref, w1_ref, b1_ref, w2_ref, b2_ref, o_ref, y_ref):
        # ---- conv1 (BN1 scale folded into w1), f32 accumulation -----------------
        if deep_k:
            p1 = jnp.concatenate(
                [xf_ref[ky * Wp + kx:ky * Wp + kx + M, :] for ky, kx in taps], axis=-1)
            acc1 = jnp.dot(p1, w1_ref[...], preferred_element_type=jnp.float32)
        else:
            acc1 = jnp.zeros((M, Cout), jnp.float32)
            for t, (ky, kx) in enumerate(taps):
                acc1 = acc1 + jnp.dot(
                    xf_ref[ky * Wp + kx:ky * Wp + kx + M, :],
                    w1_ref[t * Cin:(t + 1) * Cin, :],
                    preferred_element_type=jnp.float32)

        # ---- (M,1) validity mask, generated in-kernel (no extra input channel) --
        # Division-free floor(m/Wp), floor(gr/Hp): exact for row counts < 2^21.
        idx = lax.broadcasted_iota(jnp.int32, (M, 1), 0).astype(jnp.float32)
        gr = jnp.floor((idx + 0.5) * inv_wp)      # m // Wp   (global output row)
        col = idx - gr * Wp                       # m %  Wp   (output pixel column)
        img = jnp.floor((gr + 0.5) * inv_hp)      # image index within the chunk
        row = gr - img * Hp                       # output pixel row within the image
        keep = (col < W) & (row < H)

        z1 = jnp.maximum(acc1 + b1_ref[...], 0.0)             # bn1 bias + relu
        out1 = jnp.where(keep, z1, 0.0).astype(jnp.bfloat16)  # zero the padding ring

        # ---- re-embed conv1 activation into the padded-frame scratch ------------
        # All three stores are sublane-aligned (Wp % 8 == 0, lead % 8 == 0, M % 8 == 0).
        y_ref[:lead, :] = jnp.zeros((lead, Cout), jnp.bfloat16)
        y_ref[lead + M:, :] = jnp.zeros((Y - lead - M, Cout), jnp.bfloat16)
        y_ref[lead:lead + M, :] = out1

        # ---- conv2 (BN2 scale folded into w2) ------------------------------------
        if deep_k:
            p2 = jnp.concatenate(
                [y_ref[ky * Wp + kx + 7:ky * Wp + kx + 7 + M, :] for ky, kx in taps],
                axis=-1)
            acc2 = jnp.dot(p2, w2_ref[...], preferred_element_type=jnp.float32)
        else:
            acc2 = jnp.zeros((M, Cout), jnp.float32)
            for t, (ky, kx) in enumerate(taps):
                acc2 = acc2 + jnp.dot(
                    y_ref[ky * Wp + kx + 7:ky * Wp + kx + 7 + M, :],
                    w2_ref[t * Cout:(t + 1) * Cout, :],
                    preferred_element_type=jnp.float32)

        # ---- bn2 bias + residual + relu, direct aligned stores -------------------
        identity = xf_ref[Wp + 1:Wp + 1 + M, :].astype(jnp.float32)
        out2 = jnp.maximum(acc2 + b2_ref[...] + identity, 0.0)
        o_ref[:M, :] = out2.astype(o_ref.dtype)
        o_ref[M:, :] = jnp.zeros((tail, Cout), o_ref.dtype)   # tail never read by wrapper
        # TODO(synk): for Cout < 128 the final store is lane-sparse (masked vst);
        # packing 128//Cout spatial positions per output row would fix it but changes
        # the output layout, so it is left out here.

    return kernel


def basic_block_forward(x_nchw, params, eps=1e-5):
    """BasicBlock forward (stride=1, downsample=None). NCHW in / NCHW out (f32)."""
    B, Cin, H, W = x_nchw.shape
    w1, g1, be1, m1, v1, w2, g2, be2, m2, v2 = params
    Cout = w1.shape[0]
    assert Cin == Cout, "identity shortcut requires inplanes == planes"
    # TODO(synk): stride != 1 and the downsample projection path are not implemented.

    # padded flat-frame geometry; Wp multiple of 8 => row-independent tap phases,
    # 8-aligned M / tail, and S (= Hp*Wp) automatically a multiple of 8.
    Wp = ((W + 2 + 7) // 8) * 8
    Hp = H + 3                      # 1 top zero row + H data rows + >=2 bottom zero rows
    S = Hp * Wp

    deep_k = Cin < 128

    # ---- corrected VMEM model (lane padding, pipeline double-buffers, weights,
    #      scratch, im2col / accumulator temporaries) -----------------------------
    def vmem_bytes(bt):
        rows = bt * S
        m = rows - 3 * Wp
        y = m + 3 * Wp + 8
        b = 2 * rows * _lane_pad(Cin) * 2          # streamed input block (bf16, x2 bufs)
        b += 2 * rows * _lane_pad(Cout) * 2        # streamed output block (bf16, x2 bufs)
        b += 9 * Cin * _lane_pad(Cout) * 2         # w1 (single-buffered, grid-invariant)
        b += 9 * Cout * _lane_pad(Cout) * 2        # w2
        b += 2 * 8 * _lane_pad(Cout) * 4           # biases (sublane-padded)
        b += y * _lane_pad(Cout) * 2               # persistent y scratch (bf16)
        b += m * _lane_pad(Cout) * 4               # f32 accumulator / out2
        b += m * _lane_pad(Cout) * 2               # out1 (bf16)
        b += 4 * ((m + 7) // 8) * 4096             # (M,1) iota/mask temporaries
        if deep_k:
            b += m * _lane_pad(9 * Cin) * 2        # p1 im2col slab
            b += m * _lane_pad(9 * Cout) * 2       # p2 im2col slab
        return b

    # per-generation ceiling: v7x 64 MiB per TensorCore, v5e/v6e 128 MiB physical.
    try:
        phys = int(getattr(pltpu.get_tpu_info(), "vmem_capacity_bytes", 64 << 20))
    except Exception:
        phys = 64 << 20
    budget = min(int(phys * 0.45), 40 << 20)
    vmem_limit = max(32 << 20, min(int(phys * 0.9), 100 << 20))

    # Bt = images per grid step: largest that fits the budget while keeping enough
    # chunks to (a) feed both v7x TensorCores and (b) overlap DMA with compute (v6e).
    min_chunks = min(B, 4)
    Bt = 1
    for d in range(1, B + 1):
        if B % d == 0 and d * min_chunks <= B and vmem_bytes(d) <= budget:
            Bt = d
    n_chunks = B // Bt
    M = Bt * S - 3 * Wp             # real conv-output rows per grid step (multiple of 8)
    Y = M + 3 * Wp + 8              # y-scratch rows (covers max conv2 tap offset 2*Wp+9)
    # TODO(synk): if even Bt=1 exceeds the budget (very large single images) a spatial
    # row-band tiling of the frame would be needed; not implemented.

    # ---- host-side prep ---------------------------------------------------------
    # NCHW -> NHWC bf16, embed into the zero-padded flat frame (B*S, Cin).
    # TODO(synk): for chained BasicBlocks, keep activations in this flat-frame layout
    # across blocks instead of re-padding / transposing around every block.
    x_nhwc = jnp.transpose(x_nchw, (0, 2, 3, 1)).astype(jnp.bfloat16)
    x_pad = jnp.pad(x_nhwc, ((0, 0), (1, Hp - H - 1), (1, Wp - W - 1), (0, 0)))
    xf = x_pad.reshape(B * S, Cin)

    # fold BatchNorm (eval mode): scale into conv weights, bias kept separate (f32)
    s1 = g1 / jnp.sqrt(v1 + eps)
    s2 = g2 / jnp.sqrt(v2 + eps)

    def fold(w, s):                  # (Cout,Cin,3,3) -> (9*Cin, Cout), tap-major
        co, ci = w.shape[0], w.shape[1]
        w = w * s[:, None, None, None]
        return jnp.transpose(w, (2, 3, 1, 0)).reshape(9 * ci, co).astype(jnp.bfloat16)

    w1m, w2m = fold(w1, s1), fold(w2, s2)
    b1v = (be1 - m1 * s1).reshape(1, Cout).astype(jnp.float32)
    b2v = (be2 - m2 * s2).reshape(1, Cout).astype(jnp.float32)

    kernel = _make_basic_block_kernel(H, W, Hp, Wp, S, Bt, M, Y, Cin, Cout)

    def const_spec(shape):           # grid-invariant operand -> single pipeline buffer
        idx = lambda i: (0, 0)
        if hasattr(pl, "Buffered"):
            try:
                return pl.BlockSpec(shape, idx, pipeline_mode=pl.Buffered(1))
            except TypeError:
                pass
        return pl.BlockSpec(shape, idx)

    out_flat = pl.pallas_call(
        kernel,
        out_shape=jax.ShapeDtypeStruct((B * S, Cout), jnp.bfloat16),
        grid_spec=pltpu.PrefetchScalarGridSpec(
            num_scalar_prefetch=0,
            grid=(n_chunks,),
            in_specs=[
                pl.BlockSpec((Bt * S, Cin), lambda i: (i, 0)),
                const_spec((9 * Cin, Cout)),
                const_spec((1, Cout)),
                const_spec((9 * Cout, Cout)),
                const_spec((1, Cout)),
            ],
            out_specs=pl.BlockSpec((Bt * S, Cout), lambda i: (i, 0)),
            scratch_shapes=[pltpu.VMEM((Y, Cout), jnp.bfloat16)],
        ),
        compiler_params=pltpu.CompilerParams(
            dimension_semantics=("parallel",),
            vmem_limit_bytes=int(vmem_limit)),
    )(xf, w1m, b1v, w2m, b2v)

    # wide flat frame -> NCHW f32 (module semantics)
    out = out_flat.reshape(B, Hp, Wp, Cout)[:, :H, :W, :]
    return jnp.transpose(out, (0, 3, 1, 2)).astype(jnp.float32)


def _reference_forward(x, params, eps=1e-5):
    """Pure-JAX f32 reference (lax conv) for numerical sanity check."""
    w1, g1, be1, m1, v1, w2, g2, be2, m2, v2 = params

    def conv(x, w):
        return lax.conv_general_dilated(
            x, w, window_strides=(1, 1), padding=((1, 1), (1, 1)),
            dimension_numbers=('NCHW', 'OIHW', 'NCHW'))

    def bn(x, g, b, m, v):
        g = g.reshape(1, -1, 1, 1); b = b.reshape(1, -1, 1, 1)
        m = m.reshape(1, -1, 1, 1); v = v.reshape(1, -1, 1, 1)
        return (x - m) / jnp.sqrt(v + eps) * g + b

    out = jax.nn.relu(bn(conv(x, w1), g1, be1, m1, v1))
    out = bn(conv(out, w2), g2, be2, m2, v2)
    return jax.nn.relu(out + x)


if __name__ == "__main__":
    def make_params(key, C, scale=0.1):
        ks = jax.random.split(key, 10)
        w1 = jax.random.normal(ks[0], (C, C, 3, 3), jnp.float32) * scale
        g1 = 0.5 + jax.random.uniform(ks[1], (C,), jnp.float32)
        be1 = jax.random.normal(ks[2], (C,), jnp.float32) * 0.1
        m1 = jax.random.normal(ks[3], (C,), jnp.float32) * 0.1
        v1 = 0.5 + jax.random.uniform(ks[4], (C,), jnp.float32)
        w2 = jax.random.normal(ks[5], (C, C, 3, 3), jnp.float32) * scale
        g2 = 0.5 + jax.random.uniform(ks[6], (C,), jnp.float32)
        be2 = jax.random.normal(ks[7], (C,), jnp.float32) * 0.1
        m2 = jax.random.normal(ks[8], (C,), jnp.float32) * 0.1
        v2 = 0.5 + jax.random.uniform(ks[9], (C,), jnp.float32)
        return (w1, g1, be1, m1, v1, w2, g2, be2, m2, v2)

    key = jax.random.PRNGKey(0)
    k0, k1, k2, k3 = jax.random.split(key, 4)

    # config A: tiny channels -> deep-K im2col path (same toy shape as before)
    x_a = jax.random.normal(k0, (2, 4, 16, 16), jnp.float32)
    p_a = make_params(k1, 4)
    out_a = jax.block_until_ready(basic_block_forward(x_a, p_a))
    ref_a = _reference_forward(x_a, p_a)
    assert out_a.shape == (2, 4, 16, 16)
    # bf16 MXU operands are intentional; tolerance relaxed accordingly.
    assert jnp.allclose(out_a, ref_a, atol=5e-2, rtol=5e-2), "mismatch vs reference (C=4)"

    # config B: lane-aligned channels -> 9 accumulated-dot path
    x_b = jax.random.normal(k2, (2, 128, 8, 8), jnp.float32)
    p_b = make_params(k3, 128, scale=0.05)
    out_b = jax.block_until_ready(basic_block_forward(x_b, p_b))
    ref_b = _reference_forward(x_b, p_b)
    assert out_b.shape == (2, 128, 8, 8)
    assert jnp.allclose(out_b, ref_b, atol=5e-2, rtol=5e-2), "mismatch vs reference (C=128)"

    print("KERNEL_OK")
</pallas_src>

<mosaic_0001>
module attributes {stable_mosaic.version = 11 : i64} {
  func.func @kernel(%arg0: i32, %arg1: memref<456x4xbf16, #tpu.memory_space<vmem>>, %arg2: memref<36x4xbf16, #tpu.memory_space<vmem>>, %arg3: memref<1x4xf32, #tpu.memory_space<vmem>>, %arg4: memref<36x4xbf16, #tpu.memory_space<vmem>>, %arg5: memref<1x4xf32, #tpu.memory_space<vmem>>, %arg6: memref<456x4xbf16, #tpu.memory_space<vmem>>, %arg7: memref<464x4xbf16, #tpu.memory_space<vmem>>) attributes {dimension_semantics = [#tpu.dimension_semantics<parallel>], iteration_bounds = array<i64: 2>, scalar_prefetch = 0 : i64, scratch_operands = 1 : i64, tpu.core_type = #tpu.core_type<tc>, window_params = [{transform_indices = @transform_0, window_bounds = array<i64: 456, 4>}, {pipeline_mode = #tpu.pipeline_mode<synchronous>, transform_indices = @transform_1, window_bounds = array<i64: 36, 4>}, {pipeline_mode = #tpu.pipeline_mode<synchronous>, transform_indices = @transform_2, window_bounds = array<i64: 1, 4>}, {pipeline_mode = #tpu.pipeline_mode<synchronous>, transform_indices = @transform_3, window_bounds = array<i64: 36, 4>}, {pipeline_mode = #tpu.pipeline_mode<synchronous>, transform_indices = @transform_4, window_bounds = array<i64: 1, 4>}, {transform_indices = @transform_5, window_bounds = array<i64: 456, 4>}]} {
    %c0 = arith.constant 0 : index
    %c0_0 = arith.constant 0 : index
    %0 = vector.load %arg1[%c0, %c0_0] : memref<456x4xbf16, #tpu.memory_space<vmem>>, vector<384x4xbf16>
    %c1 = arith.constant 1 : index
    %c0_1 = arith.constant 0 : index
    %1 = vector.load %arg1[%c1, %c0_1] : memref<456x4xbf16, #tpu.memory_space<vmem>>, vector<384x4xbf16>
    %c2 = arith.constant 2 : index
    %c0_2 = arith.constant 0 : index
    %2 = vector.load %arg1[%c2, %c0_2] : memref<456x4xbf16, #tpu.memory_space<vmem>>, vector<384x4xbf16>
    %c24 = arith.constant 24 : index
    %c0_3 = arith.constant 0 : index
    %3 = vector.load %arg1[%c24, %c0_3] : memref<456x4xbf16, #tpu.memory_space<vmem>>, vector<384x4xbf16>
    %c25 = arith.constant 25 : index
    %c0_4 = arith.constant 0 : index
    %4 = vector.load %arg1[%c25, %c0_4] : memref<456x4xbf16, #tpu.memory_space<vmem>>, vector<384x4xbf16>
    %c26 = arith.constant 26 : index
    %c0_5 = arith.constant 0 : index
    %5 = vector.load %arg1[%c26, %c0_5] : memref<456x4xbf16, #tpu.memory_space<vmem>>, vector<384x4xbf16>
    %c48 = arith.constant 48 : index
    %c0_6 = arith.constant 0 : index
    %6 = vector.load %arg1[%c48, %c0_6] : memref<456x4xbf16, #tpu.memory_space<vmem>>, vector<384x4xbf16>
    %c49 = arith.constant 49 : index
    %c0_7 = arith.constant 0 : index
    %7 = vector.load %arg1[%c49, %c0_7] : memref<456x4xbf16, #tpu.memory_space<vmem>>, vector<384x4xbf16>
    %c50 = arith.constant 50 : index
    %c0_8 = arith.constant 0 : index
    %8 = vector.load %arg1[%c50, %c0_8] : memref<456x4xbf16, #tpu.memory_space<vmem>>, vector<384x4xbf16>
    %9 = tpu.concatenate %0, %1, %2, %3, %4, %5, %6, %7, %8 in 1 : vector<384x4xbf16>, vector<384x4xbf16>, vector<384x4xbf16>, vector<384x4xbf16>, vector<384x4xbf16>, vector<384x4xbf16>, vector<384x4xbf16>, vector<384x4xbf16>, vector<384x4xbf16> -> vector<384x36xbf16>
    %c0_9 = arith.constant 0 : index
    %c0_10 = arith.constant 0 : index
    %10 = vector.load %arg2[%c0_9, %c0_10] : memref<36x4xbf16, #tpu.memory_space<vmem>>, vector<36x4xbf16>
    %cst = arith.constant dense<0.000000e+00> : vector<384x4xf32>
    %11 = tpu.matmul %9, %10, %cst {dimension_numbers = #tpu.dot_dimension_numbers<[1], [0], [0], [1], [0, 0, 1, 1], [], []>} : vector<384x36xbf16>, vector<36x4xbf16>, vector<384x4xf32> -> vector<384x4xf32>
    %12 = tpu.iota {dimensions = array<i32: 0>} : vector<384x1xi32>
    %13 = arith.sitofp %12 : vector<384x1xi32> to vector<384x1xf32>
    %cst_11 = arith.constant 5.000000e-01 : f32
    %14 = vector.broadcast %cst_11 : f32 to vector<384x1xf32>
    %15 = arith.addf %13, %14 : vector<384x1xf32>
    %cst_12 = arith.constant 0.0416666679 : f32
    %16 = vector.broadcast %cst_12 : f32 to vector<384x1xf32>
    %17 = arith.mulf %15, %16 : vector<384x1xf32>
    %18 = math.floor %17 : vector<384x1xf32>
    %cst_13 = arith.constant 2.400000e+01 : f32
    %19 = vector.broadcast %cst_13 : f32 to vector<384x1xf32>
    %20 = arith.mulf %18, %19 : vector<384x1xf32>
    %21 = arith.subf %13, %20 : vector<384x1xf32>
    %cst_14 = arith.constant 5.000000e-01 : f32
    %22 = vector.broadcast %cst_14 : f32 to vector<384x1xf32>
    %23 = arith.addf %18, %22 : vector<384x1xf32>
    %cst_15 = arith.constant 0.0526315793 : f32
    %24 = vector.broadcast %cst_15 : f32 to vector<384x1xf32>
    %25 = arith.mulf %23, %24 : vector<384x1xf32>
    %26 = math.floor %25 : vector<384x1xf32>
    %cst_16 = arith.constant 1.900000e+01 : f32
    %27 = vector.broadcast %cst_16 : f32 to vector<384x1xf32>
    %28 = arith.mulf %26, %27 : vector<384x1xf32>
    %29 = arith.subf %18, %28 : vector<384x1xf32>
    %cst_17 = arith.constant 1.600000e+01 : f32
    %30 = vector.broadcast %cst_17 : f32 to vector<384x1xf32>
    %31 = arith.cmpf olt, %21, %30 : vector<384x1xf32>
    %cst_18 = arith.constant 1.600000e+01 : f32
    %32 = vector.broadcast %cst_18 : f32 to vector<384x1xf32>
    %33 = arith.cmpf olt, %29, %32 : vector<384x1xf32>
    %34 = arith.andi %31, %33 : vector<384x1xi1>
    %c0_19 = arith.constant 0 : index
    %c0_20 = arith.constant 0 : index
    %35 = vector.load %arg3[%c0_19, %c0_20] : memref<1x4xf32, #tpu.memory_space<vmem>>, vector<1x4xf32>
    %36 = vector.broadcast %35 : vector<1x4xf32> to vector<384x4xf32>
    %37 = arith.addf %11, %36 : vector<384x4xf32>
    %cst_21 = arith.constant 0.000000e+00 : f32
    %38 = vector.broadcast %cst_21 : f32 to vector<384x4xf32>
    %39 = arith.maximumf %37, %38 : vector<384x4xf32>
    %cst_22 = arith.constant 0.000000e+00 : f32
    %40 = vector.shape_cast %34 : vector<384x1xi1> to vector<384x1xi1>
    %41 = vector.broadcast %40 : vector<384x1xi1> to vector<384x4xi1>
    %42 = vector.broadcast %cst_22 : f32 to vector<384x4xf32>
    %43 = arith.select %41, %39, %42 : vector<384x4xi1>, vector<384x4xf32>
    %44 = arith.truncf %43 : vector<384x4xf32> to vector<384x4xbf16>
    %cst_23 = arith.constant 0.000000e+00 : bf16
    %45 = vector.broadcast %cst_23 : bf16 to vector<32x4xbf16>
    %c0_24 = arith.constant 0 : index
    %c0_25 = arith.constant 0 : index
    %46 = vector.load %arg7[%c0_24, %c0_25] : memref<464x4xbf16, #tpu.memory_space<vmem>>, vector<32x4xbf16>
    tpu.vector_store %arg7[%c0_24, %c0_25], %45 {strides = array<i32>} : memref<464x4xbf16, #tpu.memory_space<vmem>>, vector<32x4xbf16>,
    %cst_26 = arith.constant 0.000000e+00 : bf16
    %47 = vector.broadcast %cst_26 : bf16 to vector<48x4xbf16>
    %c416 = arith.constant 416 : index
    %c0_27 = arith.constant 0 : index
    %48 = vector.load %arg7[%c416, %c0_27] : memref<464x4xbf16, #tpu.memory_space<vmem>>, vector<48x4xbf16>
    tpu.vector_store %arg7[%c416, %c0_27], %47 {strides = array<i32>} : memref<464x4xbf16, #tpu.memory_space<vmem>>, vector<48x4xbf16>,
    %c32 = arith.constant 32 : index
    %c0_28 = arith.constant 0 : index
    %49 = vector.load %arg7[%c32, %c0_28] : memref<464x4xbf16, #tpu.memory_space<vmem>>, vector<384x4xbf16>
    tpu.vector_store %arg7[%c32, %c0_28], %44 {strides = array<i32>} : memref<464x4xbf16, #tpu.memory_space<vmem>>, vector<384x4xbf16>,
    %c7 = arith.constant 7 : index
    %c0_29 = arith.constant 0 : index
    %50 = vector.load %arg7[%c7, %c0_29] : memref<464x4xbf16, #tpu.memory_space<vmem>>, vector<384x4xbf16>
    %c8 = arith.constant 8 : index
    %c0_30 = arith.constant 0 : index
    %51 = vector.load %arg7[%c8, %c0_30] : memref<464x4xbf16, #tpu.memory_space<vmem>>, vector<384x4xbf16>
    %c9 = arith.constant 9 : index
    %c0_31 = arith.constant 0 : index
    %52 = vector.load %arg7[%c9, %c0_31] : memref<464x4xbf16, #tpu.memory_space<vmem>>, vector<384x4xbf16>
    %c31 = arith.constant 31 : index
    %c0_32 = arith.constant 0 : index
    %53 = vector.load %arg7[%c31, %c0_32] : memref<464x4xbf16, #tpu.memory_space<vmem>>, vector<384x4xbf16>
    %c32_33 = arith.constant 32 : index
    %c0_34 = arith.constant 0 : index
    %54 = vector.load %arg7[%c32_33, %c0_34] : memref<464x4xbf16, #tpu.memory_space<vmem>>, vector<384x4xbf16>
    %c33 = arith.constant 33 : index
    %c0_35 = arith.constant 0 : index
    %55 = vector.load %arg7[%c33, %c0_35] : memref<464x4xbf16, #tpu.memory_space<vmem>>, vector<384x4xbf16>
    %c55 = arith.constant 55 : index
    %c0_36 = arith.constant 0 : index
    %56 = vector.load %arg7[%c55, %c0_36] : memref<464x4xbf16, #tpu.memory_space<vmem>>, vector<384x4xbf16>
    %c56 = arith.constant 56 : index
    %c0_37 = arith.constant 0 : index
    %57 = vector.load %arg7[%c56, %c0_37] : memref<464x4xbf16, #tpu.memory_space<vmem>>, vector<384x4xbf16>
    %c57 = arith.constant 57 : index
    %c0_38 = arith.constant 0 : index
    %58 = vector.load %arg7[%c57, %c0_38] : memref<464x4xbf16, #tpu.memory_space<vmem>>, vector<384x4xbf16>
    %59 = tpu.concatenate %50, %51, %52, %53, %54, %55, %56, %57, %58 in 1 : vector<384x4xbf16>, vector<384x4xbf16>, vector<384x4xbf16>, vector<384x4xbf16>, vector<384x4xbf16>, vector<384x4xbf16>, vector<384x4xbf16>, vector<384x4xbf16>, vector<384x4xbf16> -> vector<384x36xbf16>
    %c0_39 = arith.constant 0 : index
    %c0_40 = arith.constant 0 : index
    %60 = vector.load %arg4[%c0_39, %c0_40] : memref<36x4xbf16, #tpu.memory_space<vmem>>, vector<36x4xbf16>
    %cst_41 = arith.constant dense<0.000000e+00> : vector<384x4xf32>
    %61 = tpu.matmul %59, %60, %cst_41 {dimension_numbers = #tpu.dot_dimension_numbers<[1], [0], [0], [1], [0, 0, 1, 1], [], []>} : vector<384x36xbf16>, vector<36x4xbf16>, vector<384x4xf32> -> vector<384x4xf32>
    %c25_42 = arith.constant 25 : index
    %c0_43 = arith.constant 0 : index
    %62 = vector.load %arg1[%c25_42, %c0_43] : memref<456x4xbf16, #tpu.memory_space<vmem>>, vector<384x4xbf16>
    %63 = arith.extf %62 : vector<384x4xbf16> to vector<384x4xf32>
    %c0_44 = arith.constant 0 : index
    %c0_45 = arith.constant 0 : index
    %64 = vector.load %arg5[%c0_44, %c0_45] : memref<1x4xf32, #tpu.memory_space<vmem>>, vector<1x4xf32>
    %65 = vector.broadcast %64 : vector<1x4xf32> to vector<384x4xf32>
    %66 = arith.addf %61, %65 : vector<384x4xf32>
    %67 = arith.addf %66, %63 : vector<384x4xf32>
    %cst_46 = arith.constant 0.000000e+00 : f32
    %68 = vector.broadcast %cst_46 : f32 to vector<384x4xf32>
    %69 = arith.maximumf %67, %68 : vector<384x4xf32>
    %70 = arith.truncf %69 : vector<384x4xf32> to vector<384x4xbf16>
    %c0_47 = arith.constant 0 : index
    %c0_48 = arith.constant 0 : index
    %71 = vector.load %arg6[%c0_47, %c0_48] : memref<456x4xbf16, #tpu.memory_space<vmem>>, vector<384x4xbf16>
    tpu.vector_store %arg6[%c0_47, %c0_48], %70 {strides = array<i32>} : memref<456x4xbf16, #tpu.memory_space<vmem>>, vector<384x4xbf16>,
    %cst_49 = arith.constant 0.000000e+00 : bf16
    %72 = vector.broadcast %cst_49 : bf16 to vector<72x4xbf16>
    %c384 = arith.constant 384 : index
    %c0_50 = arith.constant 0 : index
    %73 = vector.load %arg6[%c384, %c0_50] : memref<456x4xbf16, #tpu.memory_space<vmem>>, vector<72x4xbf16>
    tpu.vector_store %arg6[%c384, %c0_50], %72 {strides = array<i32>} : memref<456x4xbf16, #tpu.memory_space<vmem>>, vector<72x4xbf16>,
    return
  }
  func.func @transform_0(%arg0: i32) -> (i32, i32) {
    %c0_i32 = arith.constant 0 : i32
    %c0_i32_0 = arith.constant 0 : i32
    return %arg0, %c0_i32 : i32, i32
  }
  func.func @transform_1(%arg0: i32) -> (i32, i32) {
    %c0_i32 = arith.constant 0 : i32
    %c0_i32_0 = arith.constant 0 : i32
    %c0_i32_1 = arith.constant 0 : i32
    return %c0_i32, %c0_i32_0 : i32, i32
  }
  func.func @transform_2(%arg0: i32) -> (i32, i32) {
    %c0_i32 = arith.constant 0 : i32
    %c0_i32_0 = arith.constant 0 : i32
    %c0_i32_1 = arith.constant 0 : i32
    return %c0_i32, %c0_i32_0 : i32, i32
  }
  func.func @transform_3(%arg0: i32) -> (i32, i32) {
    %c0_i32 = arith.constant 0 : i32
    %c0_i32_0 = arith.constant 0 : i32
    %c0_i32_1 = arith.constant 0 : i32
    return %c0_i32, %c0_i32_0 : i32, i32
  }
  func.func @transform_4(%arg0: i32) -> (i32, i32) {
    %c0_i32 = arith.constant 0 : i32
    %c0_i32_0 = arith.constant 0 : i32
    %c0_i32_1 = arith.constant 0 : i32
    return %c0_i32, %c0_i32_0 : i32, i32
  }
  func.func @transform_5(%arg0: i32) -> (i32, i32) {
    %c0_i32 = arith.constant 0 : i32
    %c0_i32_0 = arith.constant 0 : i32
    return %arg0, %c0_i32 : i32, i32
  }
}

</mosaic_0001>

<llo_original>
// kernel: tpu_custom_call.1
$region0: #{tpu_custom_call.1}
  #allocation0 [shape = 'u32[]', space=smem, size = 0x4, offset = 0x4, fixed_abs, tag = 'smem constant byte address 0x4 - core index']
  #allocation1 [shape = 'u32[144,128]{1,0:T(1,128)}', space=vmem, size = 0x12000, scoped, tag = 'internal scratch']
  #allocation2 [shape = 'bf16[464,4]{1,0:T(16,128)(2,1)}', space=vmem, size = 0x1d000, scoped, tag = 'scratch operand']
  %s0 = inlined_call_operand.vmem [shape: bf16[912,4], index: 0, kind: input, shape index: {}]
  %s1 = inlined_call_operand.vmem [shape: bf16[36,4], index: 1, kind: input, shape index: {}]
  %s2 = inlined_call_operand.vmem [shape: f32[1,4], index: 2, kind: input, shape index: {}]
  %s3 = inlined_call_operand.vmem [shape: bf16[36,4], index: 3, kind: input, shape index: {}]
  %s4 = inlined_call_operand.vmem [shape: f32[1,4], index: 4, kind: input, shape index: {}]
  %s5 = inlined_call_operand.vmem [shape: bf16[912,4], index: 5, kind: output, shape index: {}]
  %s6 = sld [smem:[#allocation0]]
  $region53: #{tpu_custom_call.1} parent=0
    _
  %s8 = ssub.s32 1, %s6
  %s9 = scalar_select 0, %s8, %s6
  loop: start=0, step=1, limit=4
  $region2: #{tpu_custom_call.1} parent=0 // loop_pre_header
    _
  $region3: #{tpu_custom_call.1} parent=0 // loop_header
    %s11 = sphi 0, %s15
    %p12 = scmp.ge.s32.totalorder %s11, 4
    %s21 = sphi 0, %s23
    %s24 = sphi 0, %s21
    %s25 = sphi 0, %s24
    %s41 = sphi 0, %s25
    %s45 = sphi 0, %s45
    %s47 = sphi 0, %s45
    %s48 = sphi 0, %s47
    %s62 = sphi 0, %s48
    %s66 = sphi 0, %s66
    %s68 = sphi 0, %s66
    %s69 = sphi 0, %s68
    %s83 = sphi 0, %s69
    %s87 = sphi 0, %s87
    %s89 = sphi 0, %s87
    %s90 = sphi 0, %s89
    %s104 = sphi 0, %s90
    %s108 = sphi 0, %s108
    %s110 = sphi 0, %s108
    %s111 = sphi 0, %s110
    %s125 = sphi 0, %s111
    %s131 = sphi 0, %s133
    %s134 = sphi 0, %s131
    %s135 = sphi 0, %s134
    %s151 = sphi 0, %s135
  $region4: #{tpu_custom_call.1} parent=0 // loop_header_branch
    %14 = sbr.rel (%p12) target = $region8
  $region5: #{tpu_custom_call.1} parent=0 // loop_body
    %s16 = ssub.s32 %s11, 1
    %s17 = ssub.s32 %s11, 2
    %s18 = sadd.s32 %s11, 1
    %s19 = ssub.s32 %s11, %s18
    %p20 = scmp.eq.s32.totalorder %s19, 0
    %s22 = sadd.s32 %s21, 1
    %s23 = scalar_select %p20, %s21, %s22
    %p26 = pneg %p20
    %p27 = scmp.eq.s32.totalorder %s11, 1
    %p28 = por %p26, %p27
    %p29 = scmp.ne.s32.totalorder %s21, %s24
    %p30 = scmp.eq.s32.totalorder %s11, 0
    %p31 = por %p29, %p30
    %p32 = scmp.ne.s32.totalorder %s21, %s24
    %p33 = scmp.eq.s32.totalorder %s16, 1
    %p34 = por %p32, %p33
    %p35 = scmp.ne.s32.totalorder %s24, %s25
    %p36 = scmp.eq.s32.totalorder %s16, 0
    %p37 = por %p35, %p36
    %p38 = scmp.ne.s32.totalorder %s24, %s25
    %p39 = scmp.eq.s32.totalorder %s17, 1
    %p40 = por %p38, %p39
    %p42 = scmp.ne.s32.totalorder %s25, %s41
    %p43 = scmp.eq.s32.totalorder %s17, 0
    %p44 = por %p42, %p43
    %s46 = sadd.s32 %s45, 1
    %p49 = scmp.eq.s32.totalorder %s11, 1
    %p50 = scmp.ne.s32.totalorder %s45, %s47
    %p51 = scmp.eq.s32.totalorder %s11, 0
    %p52 = por %p50, %p51
    %p53 = scmp.ne.s32.totalorder %s45, %s47
    %p54 = scmp.eq.s32.totalorder %s16, 1
    %p55 = por %p53, %p54
    %p56 = scmp.ne.s32.totalorder %s47, %s48
    %p57 = scmp.eq.s32.totalorder %s16, 0
    %p58 = por %p56, %p57
    %p59 = scmp.ne.s32.totalorder %s47, %s48
    %p60 = scmp.eq.s32.totalorder %s17, 1
    %p61 = por %p59, %p60
    %p63 = scmp.ne.s32.totalorder %s48, %s62
    %p64 = scmp.eq.s32.totalorder %s17, 0
    %p65 = por %p63, %p64
    %s67 = sadd.s32 %s66, 1
    %p70 = scmp.eq.s32.totalorder %s11, 1
    %p71 = scmp.ne.s32.totalorder %s66, %s68
    %p72 = scmp.eq.s32.totalorder %s11, 0
    %p73 = por %p71, %p72
    %p74 = scmp.ne.s32.totalorder %s66, %s68
    %p75 = scmp.eq.s32.totalorder %s16, 1
    %p76 = por %p74, %p75
    %p77 = scmp.ne.s32.totalorder %s68, %s69
    %p78 = scmp.eq.s32.totalorder %s16, 0
    %p79 = por %p77, %p78
    %p80 = scmp.ne.s32.totalorder %s68, %s69
    %p81 = scmp.eq.s32.totalorder %s17, 1
    %p82 = por %p80, %p81
    %p84 = scmp.ne.s32.totalorder %s69, %s83
    %p85 = scmp.eq.s32.totalorder %s17, 0
    %p86 = por %p84, %p85
    %s88 = sadd.s32 %s87, 1
    %p91 = scmp.eq.s32.totalorder %s11, 1
    %p92 = scmp.ne.s32.totalorder %s87, %s89
    %p93 = scmp.eq.s32.totalorder %s11, 0
    %p94 = por %p92, %p93
    %p95 = scmp.ne.s32.totalorder %s87, %s89
    %p96 = scmp.eq.s32.totalorder %s16, 1
    %p97 = por %p95, %p96
    %p98 = scmp.ne.s32.totalorder %s89, %s90
    %p99 = scmp.eq.s32.totalorder %s16, 0
    %p100 = por %p98, %p99
    %p101 = scmp.ne.s32.totalorder %s89, %s90
    %p102 = scmp.eq.s32.totalorder %s17, 1
    %p103 = por %p101, %p102
    %p105 = scmp.ne.s32.totalorder %s90, %s104
    %p106 = scmp.eq.s32.totalorder %s17, 0
    %p107 = por %p105, %p106
    %s109 = sadd.s32 %s108, 1
    %p112 = scmp.eq.s32.totalorder %s11, 1
    %p113 = scmp.ne.s32.totalorder %s108, %s110
    %p114 = scmp.eq.s32.totalorder %s11, 0
    %p115 = por %p113, %p114
    %p116 = scmp.ne.s32.totalorder %s108, %s110
    %p117 = scmp.eq.s32.totalorder %s16, 1
    %p118 = por %p116, %p117
    %p119 = scmp.ne.s32.totalorder %s110, %s111
    %p120 = scmp.eq.s32.totalorder %s16, 0
    %p121 = por %p119, %p120
    %p122 = scmp.ne.s32.totalorder %s110, %s111
    %p123 = scmp.eq.s32.totalorder %s17, 1
    %p124 = por %p122, %p123
    %p126 = scmp.ne.s32.totalorder %s111, %s125
    %p127 = scmp.eq.s32.totalorder %s17, 0
    %p128 = por %p126, %p127
    %s129 = ssub.s32 %s11, %s18
    %p130 = scmp.eq.s32.totalorder %s129, 0
    %s132 = sadd.s32 %s131, 1
    %s133 = scalar_select %p130, %s131, %s132
    %p136 = pneg %p130
    %p137 = scmp.eq.s32.totalorder %s11, 1
    %p138 = por %p136, %p137
    %p139 = scmp.ne.s32.totalorder %s131, %s134
    %p140 = scmp.eq.s32.totalorder %s11, 0
    %p141 = por %p139, %p140
    %p142 = scmp.ne.s32.totalorder %s131, %s134
    %p143 = scmp.eq.s32.totalorder %s16, 1
    %p144 = por %p142, %p143
    %p145 = scmp.ne.s32.totalorder %s134, %s135
    %p146 = scmp.eq.s32.totalorder %s16, 0
    %p147 = por %p145, %p146
    %p148 = scmp.ne.s32.totalorder %s134, %s135
    %p149 = scmp.eq.s32.totalorder %s17, 1
    %p150 = por %p148, %p149
    %p152 = scmp.ne.s32.totalorder %s135, %s151
    %p153 = scmp.eq.s32.totalorder %s17, 0
    %p154 = por %p152, %p153
    %p155 = scmp.le.s32.totalorder 1, %s11
    %p156 = scmp.lt.s32.totalorder %s11, 3
    %p157 = pnand %p155, %p156
    %p158 = pneg %p157
    // Predicated region
    $region9: #{tpu_custom_call.1} parent=5 // pred_check
      _
    $region10: #{tpu_custom_call.1} parent=5 // pred_check_branch
      %160 = sbr.rel (%p157) target = $region12
    $region11: #{tpu_custom_call.1} parent=5 // pred_region
      %s161 = ssub.s32 %s11, 1
      // Predicated region
      $region13: #{tpu_custom_call.1} parent=11 // pred_check
        %p162 = pneg %p58
      $region14: #{tpu_custom_call.1} parent=11 // pred_check_branch
        %164 = sbr.rel (%p162) target = $region16
      $region15: #{tpu_custom_call.1} parent=11 // pred_region
        _
      $region16: #{tpu_custom_call.1} parent=11 // pred_fallthru
        _
      // Predicated region
      $region17: #{tpu_custom_call.1} parent=11 // pred_check
        %p165 = pneg %p79
      $region18: #{tpu_custom_call.1} parent=11 // pred_check_branch
        %167 = sbr.rel (%p165) target = $region20
      $region19: #{tpu_custom_call.1} parent=11 // pred_region
        _
      $region20: #{tpu_custom_call.1} parent=11 // pred_fallthru
        _
      // Predicated region
      $region21: #{tpu_custom_call.1} parent=11 // pred_check
        %p168 = pneg %p100
      $region22: #{tpu_custom_call.1} parent=11 // pred_check_branch
        %170 = sbr.rel (%p168) target = $region24
      $region23: #{tpu_custom_call.1} parent=11 // pred_region
        _
      $region24: #{tpu_custom_call.1} parent=11 // pred_fallthru
        _
      // Predicated region
      $region25: #{tpu_custom_call.1} parent=11 // pred_check
        %p171 = pneg %p121
      $region26: #{tpu_custom_call.1} parent=11 // pred_check_branch
        %173 = sbr.rel (%p171) target = $region28
      $region27: #{tpu_custom_call.1} parent=11 // pred_region
        _
      $region28: #{tpu_custom_call.1} parent=11 // pred_fallthru
        _
    $region12: #{tpu_custom_call.1} parent=5 // pred_fallthru
      _
    %p174 = scmp.lt.s32.totalorder %s11, 2
    // Predicated region
    $region29: #{tpu_custom_call.1} parent=5 // pred_check
      %p175 = pneg %p174
    $region30: #{tpu_custom_call.1} parent=5 // pred_check_branch
      %177 = sbr.rel (%p175) target = $region32
    $region31: #{tpu_custom_call.1} parent=5 // pred_region
      // Predicated region
      $region33: #{tpu_custom_call.1} parent=31 // pred_check
        %p178 = pneg %p31
      $region34: #{tpu_custom_call.1} parent=31 // pred_check_branch
        %180 = sbr.rel (%p178) target = $region36
      $region35: #{tpu_custom_call.1} parent=31 // pred_region
        %s181 = smul.u32 57, %s11
        %p182 = scmp.lt.s32.totalorder %s181, 113
        %s183 = scalar_select %p182, %s181, 113
        %s184 = smul.addr %s183, 4
        %s185 = scalar_lea.vmem %s0, %s184
        %s186 = smul.u32 57, %s11
      $region36: #{tpu_custom_call.1} parent=31 // pred_fallthru
        _
    $region32: #{tpu_custom_call.1} parent=5 // pred_fallthru
      _
    %p187 = scmp.le.s32.totalorder 1, %s11
    %p188 = scmp.lt.s32.totalorder %s11, 3
    %p189 = pnand %p187, %p188
    %p190 = pneg %p189
    // Predicated region
    $region37: #{tpu_custom_call.1} parent=5 // pred_check
      _
    $region38: #{tpu_custom_call.1} parent=5 // pred_check_branch
      %192 = sbr.rel (%p189) target = $region40
    $region39: #{tpu_custom_call.1} parent=5 // pred_region
      %s193 = ssub.s32 %s11, 1
      %s194 = smul.u32 57, %s16
      %p195 = scmp.lt.s32.totalorder %s194, 113
      %s196 = scalar_select %p195, %s194, 113
      %s197 = smul.addr %s196, 4
      %s198 = scalar_lea.vmem %s0, %s197
      %p199 = pneg %p37
      %p200 = pneg %p34
      %p201 = pneg %p58
      %p202 = pneg %p55
      %p203 = pneg %p79
      %p204 = pneg %p76
      %p205 = pneg %p100
      %p206 = pneg %p97
      %p207 = pneg %p121
      %p208 = pneg %p118
      %p209 = pneg %p147
      %p210 = pneg %p144
      %s211 = smul.u32 57, %s16
      %p212 = scmp.lt.s32.totalorder %s211, 113
      %s213 = scalar_select %p212, %s211, 113
      %s214 = smul.addr %s213, 4
      %s215 = scalar_lea.vmem %s5, %s214
      %s216 = smul.u32 57, %s16
      %p217 = scmp.lt.s32.totalorder %s216, 113
      %s218 = scalar_select %p217, %s216, 113
      %s219 = smul.addr %s218, 4
      %s220 = scalar_lea.vmem %s0, %s219
      %s221 = smul.u32 57, %s16
      %s222 = smul.u32 57, %s16
      %p223 = scmp.lt.s32.totalorder %s222, 113
      %s224 = scalar_select %p223, %s222, 113
      %s225 = smul.addr %s224, 4
      %s226 = scalar_lea.vmem %s5, %s225
      %s227 = smul.u32 57, %s16
      %v229 = vld [vmem:[%s220] sm:$0xf]
      %v230 = vld [vmem:[%s220 + $0x4] sm:$0xf]
      %v231 = vld [vmem:[%s220 + $0x8] sm:$0xf]
      %v232 = vld [vmem:[%s220 + $0xc] sm:$0xf]
      %v233 = vld [vmem:[%s220 + $0x10] sm:$0xf]
      %v234 = vld [vmem:[%s220 + $0x14] sm:$0xf]
      %v235 = vld [vmem:[%s220 + $0x18] sm:$0xf]
      %v236 = vld [vmem:[%s220 + $0x1c] sm:$0xf]
      %v237 = vld [vmem:[%s220 + $0x20] sm:$0xf]
      %v238 = vld [vmem:[%s220 + $0x24] sm:$0xf]
      %v239 = vld [vmem:[%s220 + $0x28] sm:$0xf]
      %v240 = vld [vmem:[%s220 + $0x2c] sm:$0xf]
      %v241 = vld [vmem:[%s220 + $0x30] sm:$0xf]
      %v242 = vld [vmem:[%s220 + $0x34] sm:$0xf]
      %v243 = vld [vmem:[%s220 + $0x38] sm:$0xf]
      %v244 = vld [vmem:[%s220 + $0x3c] sm:$0xf]
      %v245 = vld [vmem:[%s220 + $0x40] sm:$0xf]
      %v246 = vld [vmem:[%s220 + $0x44] sm:$0xf]
      %v247 = vld [vmem:[%s220 + $0x48] sm:$0xf]
      %v248 = vld [vmem:[%s220 + $0x4c] sm:$0xf]
      %v249 = vld [vmem:[%s220 + $0x50] sm:$0xf]
      %v250 = vld [vmem:[%s220 + $0x54] sm:$0xf]
      %v251 = vld [vmem:[%s220 + $0x58] sm:$0xf]
      %v252 = vld [vmem:[%s220 + $0x5c] sm:$0xf]
      %v253 = vld [vmem:[%s220 + $0x60] sm:$0xf]
      %v254 = vld [vmem:[%s220 + $0x64] sm:$0xf]
      %v255 = vld [vmem:[%s220 + $0x68] sm:$0xf]
      %v256 = vld [vmem:[%s220 + $0x6c] sm:$0xf]
      %v257 = vld [vmem:[%s220 + $0x70] sm:$0xf]
      %v258 = vld [vmem:[%s220 + $0x74] sm:$0xf]
      %v259 = vld [vmem:[%s220 + $0x78] sm:$0xf]
      %v260 = vld [vmem:[%s220 + $0x7c] sm:$0xf]
      %v261 = vld [vmem:[%s220 + $0x80] sm:$0xf]
      %v262 = vld [vmem:[%s220 + $0x84] sm:$0xf]
      %v263 = vld [vmem:[%s220 + $0x88] sm:$0xf]
      %v264 = vld [vmem:[%s220 + $0x8c] sm:$0xf]
      %v265 = vld [vmem:[%s220 + $0x90] sm:$0xf]
      %v266 = vld [vmem:[%s220 + $0x94] sm:$0xf]
      %v267 = vld [vmem:[%s220 + $0x98] sm:$0xf]
      %v268 = vld [vmem:[%s220 + $0x9c] sm:$0xf]
      %v269 = vld [vmem:[%s220 + $0xa0] sm:$0xf]
      %v270 = vld [vmem:[%s220 + $0xa4] sm:$0xf]
      %v271 = vld [vmem:[%s220 + $0xa8] sm:$0xf]
      %v272 = vld [vmem:[%s220 + $0xac] sm:$0xf]
      %v273 = vld [vmem:[%s220 + $0xb0] sm:$0xf]
      %v274 = vld [vmem:[%s220 + $0xb4] sm:$0xf]
      %v275 = vld [vmem:[%s220 + $0xb8] sm:$0xf]
      %v276 = vld [vmem:[%s220 + $0xbc] sm:$0xf]
      %v277 = vld [vmem:[%s220 + $0xc0] sm:$0x1]
      %v278 = vld [vmem:[%s220] sm:$0xe]
      %v279 = vld [vmem:[%s220 + $0xc0] sm:$0xf]
      %v280 = vld [vmem:[%s220 + $0xc4] sm:$0xf]
      %v281 = vld [vmem:[%s220 + $0xc8] sm:$0xf]
      %v282 = vld [vmem:[%s220 + $0xcc] sm:$0x1]
      %v283 = vld [vmem:[%s220 + $0xc] sm:$0xe]
      %v284 = vld [vmem:[%s220 + $0xcc] sm:$0xf]
      %v285 = vld [vmem:[%s220 + $0xd0] sm:$0xf]
      %v286 = vld [vmem:[%s220 + $0xd4] sm:$0xf]
      %v287 = vld [vmem:[%s220 + $0xd8] sm:$0x1]
      %v288 = vld [vmem:[%s220 + $0x18] sm:$0xe]
      %v337 = vunpack.c.l.b16 %v229
      %v338 = vunpack.c.l.b16 %v230
      %v339 = vunpack.c.l.b16 %v231
      %v340 = vunpack.c.l.b16 %v232
      %v341 = vunpack.c.l.b16 %v233
      %v342 = vunpack.c.l.b16 %v234
      %v343 = vunpack.c.l.b16 %v235
      %v344 = vunpack.c.l.b16 %v236
      %v345 = vunpack.c.l.b16 %v237
      %v346 = vunpack.c.l.b16 %v238
      %v347 = vunpack.c.l.b16 %v239
      %v348 = vunpack.c.l.b16 %v240
      %v349 = vunpack.c.l.b16 %v241
      %v350 = vunpack.c.l.b16 %v242
      %v351 = vunpack.c.l.b16 %v243
      %v352 = vunpack.c.l.b16 %v244
      %v353 = vunpack.c.l.b16 %v245
      %v354 = vunpack.c.l.b16 %v246
      %v355 = vunpack.c.l.b16 %v247
      %v356 = vunpack.c.l.b16 %v248
      %v357 = vunpack.c.l.b16 %v249
      %v358 = vunpack.c.l.b16 %v250
      %v359 = vunpack.c.l.b16 %v251
      %v360 = vunpack.c.l.b16 %v252
      %v361 = vunpack.c.l.b16 %v253
      %v362 = vunpack.c.l.b16 %v254
      %v363 = vunpack.c.l.b16 %v255
      %v364 = vunpack.c.l.b16 %v256
      %v365 = vunpack.c.l.b16 %v257
      %v366 = vunpack.c.l.b16 %v258
      %v367 = vunpack.c.l.b16 %v259
      %v368 = vunpack.c.l.b16 %v260
      %v369 = vunpack.c.l.b16 %v261
      %v370 = vunpack.c.l.b16 %v262
      %v371 = vunpack.c.l.b16 %v263
      %v372 = vunpack.c.l.b16 %v264
      %v373 = vunpack.c.l.b16 %v265
      %v374 = vunpack.c.l.b16 %v266
      %v375 = vunpack.c.l.b16 %v267
      %v376 = vunpack.c.l.b16 %v268
      %v377 = vunpack.c.l.b16 %v269
      %v378 = vunpack.c.l.b16 %v270
      %v379 = vunpack.c.l.b16 %v271
      %v380 = vunpack.c.l.b16 %v272
      %v381 = vunpack.c.l.b16 %v273
      %v382 = vunpack.c.l.b16 %v274
      %v383 = vunpack.c.l.b16 %v275
      %v384 = vunpack.c.l.b16 %v276
      %v385 = vpack.c.b16 %v338, %v337
      %v386 = vpack.c.b16 %v340, %v339
      %v387 = vpack.c.b16 %v342, %v341
      %v388 = vpack.c.b16 %v344, %v343
      %v389 = vpack.c.b16 %v346, %v345
      %v390 = vpack.c.b16 %v348, %v347
      %v391 = vpack.c.b16 %v350, %v349
      %v392 = vpack.c.b16 %v352, %v351
      %v393 = vpack.c.b16 %v354, %v353
      %v394 = vpack.c.b16 %v356, %v355
      %v395 = vpack.c.b16 %v358, %v357
      %v396 = vpack.c.b16 %v360, %v359
      %v397 = vpack.c.b16 %v362, %v361
      %v398 = vpack.c.b16 %v364, %v363
      %v399 = vpack.c.b16 %v366, %v365
      %v400 = vpack.c.b16 %v368, %v367
      %v401 = vpack.c.b16 %v370, %v369
      %v402 = vpack.c.b16 %v372, %v371
      %v403 = vpack.c.b16 %v374, %v373
      %v404 = vpack.c.b16 %v376, %v375
      %v405 = vpack.c.b16 %v378, %v377
      %v406 = vpack.c.b16 %v380, %v379
      %v407 = vpack.c.b16 %v382, %v381
      %v408 = vpack.c.b16 %v384, %v383
      %v410 = vunpack.c.l.b16 %v277
      %v411 = vpack.c.b16 %v410, %v410
      %vm412 = vsmask.f32 7424
      %v414 = vshrl.u32 %v385, 16
      %v416 = vshll.u32 %v385, 16
      %v418 = vrot.slane %v416, 1
      %v419 = vor.u32 %v414, %v418
      %v421 = vshll.u32 %v386, 16
      %v423 = vrot.slane %v421, 1
      %v424 = vsel %vm412, %v419, %v423
      %v425 = vshrl.u32 %v386, 16
      %v427 = vor.u32 %v425, %v423
      %v429 = vshll.u32 %v387, 16
      %v431 = vrot.slane %v429, 1
      %v432 = vsel %vm412, %v427, %v431
      %v433 = vshrl.u32 %v387, 16
      %v435 = vor.u32 %v433, %v431
      %v437 = vshll.u32 %v388, 16
      %v439 = vrot.slane %v437, 1
      %v440 = vsel %vm412, %v435, %v439
      %v441 = vshrl.u32 %v388, 16
      %v443 = vor.u32 %v441, %v439
      %v445 = vshll.u32 %v389, 16
      %v447 = vrot.slane %v445, 1
      %v448 = vsel %vm412, %v443, %v447
      %v449 = vshrl.u32 %v389, 16
      %v451 = vor.u32 %v449, %v447
      %v453 = vshll.u32 %v390, 16
      %v455 = vrot.slane %v453, 1
      %v456 = vsel %vm412, %v451, %v455
      %v457 = vshrl.u32 %v390, 16
      %v459 = vor.u32 %v457, %v455
      %v461 = vshll.u32 %v391, 16
      %v463 = vrot.slane %v461, 1
      %v464 = vsel %vm412, %v459, %v463
      %v465 = vshrl.u32 %v391, 16
      %v467 = vor.u32 %v465, %v463
      %v469 = vshll.u32 %v392, 16
      %v471 = vrot.slane %v469, 1
      %v472 = vsel %vm412, %v467, %v471
      %v473 = vshrl.u32 %v392, 16
      %v475 = vor.u32 %v473, %v471
      %v477 = vshll.u32 %v393, 16
      %v479 = vrot.slane %v477, 1
      %v480 = vsel %vm412, %v475, %v479
      %v481 = vshrl.u32 %v393, 16
      %v483 = vor.u32 %v481, %v479
      %v485 = vshll.u32 %v394, 16
      %v487 = vrot.slane %v485, 1
      %v488 = vsel %vm412, %v483, %v487
      %v489 = vshrl.u32 %v394, 16
      %v491 = vor.u32 %v489, %v487
      %v493 = vshll.u32 %v395, 16
      %v495 = vrot.slane %v493, 1
      %v496 = vsel %vm412, %v491, %v495
      %v497 = vshrl.u32 %v395, 16
      %v499 = vor.u32 %v497, %v495
      %v501 = vshll.u32 %v396, 16
      %v503 = vrot.slane %v501, 1
      %v504 = vsel %vm412, %v499, %v503
      %v505 = vshrl.u32 %v396, 16
      %v507 = vor.u32 %v505, %v503
      %v509 = vshll.u32 %v397, 16
      %v511 = vrot.slane %v509, 1
      %v512 = vsel %vm412, %v507, %v511
      %v513 = vshrl.u32 %v397, 16
      %v515 = vor.u32 %v513, %v511
      %v517 = vshll.u32 %v398, 16
      %v519 = vrot.slane %v517, 1
      %v520 = vsel %vm412, %v515, %v519
      %v521 = vshrl.u32 %v398, 16
      %v523 = vor.u32 %v521, %v519
      %v525 = vshll.u32 %v399, 16
      %v527 = vrot.slane %v525, 1
      %v528 = vsel %vm412, %v523, %v527
      %v529 = vshrl.u32 %v399, 16
      %v531 = vor.u32 %v529, %v527
      %v533 = vshll.u32 %v400, 16
      %v535 = vrot.slane %v533, 1
      %v536 = vsel %vm412, %v531, %v535
      %v537 = vshrl.u32 %v400, 16
      %v539 = vor.u32 %v537, %v535
      %v541 = vshll.u32 %v401, 16
      %v543 = vrot.slane %v541, 1
      %v544 = vsel %vm412, %v539, %v543
      %v545 = vshrl.u32 %v401, 16
      %v547 = vor.u32 %v545, %v543
      %v549 = vshll.u32 %v402, 16
      %v551 = vrot.slane %v549, 1
      %v552 = vsel %vm412, %v547, %v551
      %v553 = vshrl.u32 %v402, 16
      %v555 = vor.u32 %v553, %v551
      %v557 = vshll.u32 %v403, 16
      %v559 = vrot.slane %v557, 1
      %v560 = vsel %vm412, %v555, %v559
      %v561 = vshrl.u32 %v403, 16
      %v563 = vor.u32 %v561, %v559
      %v565 = vshll.u32 %v404, 16
      %v567 = vrot.slane %v565, 1
      %v568 = vsel %vm412, %v563, %v567
      %v569 = vshrl.u32 %v404, 16
      %v571 = vor.u32 %v569, %v567
      %v573 = vshll.u32 %v405, 16
      %v575 = vrot.slane %v573, 1
      %v576 = vsel %vm412, %v571, %v575
      %v577 = vshrl.u32 %v405, 16
      %v579 = vor.u32 %v577, %v575
      %v581 = vshll.u32 %v406, 16
      %v583 = vrot.slane %v581, 1
      %v584 = vsel %vm412, %v579, %v583
      %v585 = vshrl.u32 %v406, 16
      %v587 = vor.u32 %v585, %v583
      %v589 = vshll.u32 %v407, 16
      %v591 = vrot.slane %v589, 1
      %v592 = vsel %vm412, %v587, %v591
      %v593 = vshrl.u32 %v407, 16
      %v595 = vor.u32 %v593, %v591
      %v597 = vshll.u32 %v408, 16
      %v599 = vrot.slane %v597, 1
      %v600 = vsel %vm412, %v595, %v599
      %v601 = vshrl.u32 %v408, 16
      %v603 = vor.u32 %v601, %v599
      %v605 = vshll.u32 %v411, 16
      %v607 = vrot.slane %v605, 1
      %v608 = vsel %vm412, %v603, %v607
      %609 = vrot.lane.b32.xlu0 %v424, 4
      %v610 = vpop.permute.xlu0 %609
      %611 = vrot.lane.b32.xlu0 %v432, 4
      %v612 = vpop.permute.xlu0 %611
      %613 = vrot.lane.b32.xlu0 %v440, 4
      %v614 = vpop.permute.xlu0 %613
      %615 = vrot.lane.b32.xlu0 %v448, 4
      %v616 = vpop.permute.xlu0 %615
      %617 = vrot.lane.b32.xlu0 %v456, 4
      %v618 = vpop.permute.xlu0 %617
      %619 = vrot.lane.b32.xlu0 %v464, 4
      %v620 = vpop.permute.xlu0 %619
      %621 = vrot.lane.b32.xlu0 %v472, 4
      %v622 = vpop.permute.xlu0 %621
      %623 = vrot.lane.b32.xlu0 %v480, 4
      %v624 = vpop.permute.xlu0 %623
      %625 = vrot.lane.b32.xlu0 %v488, 4
      %v626 = vpop.permute.xlu0 %625
      %627 = vrot.lane.b32.xlu0 %v496, 4
      %v628 = vpop.permute.xlu0 %627
      %629 = vrot.lane.b32.xlu0 %v504, 4
      %v630 = vpop.permute.xlu0 %629
      %631 = vrot.lane.b32.xlu0 %v512, 4
      %v632 = vpop.permute.xlu0 %631
      %633 = vrot.lane.b32.xlu0 %v520, 4
      %v634 = vpop.permute.xlu0 %633
      %635 = vrot.lane.b32.xlu0 %v528, 4
      %v636 = vpop.permute.xlu0 %635
      %637 = vrot.lane.b32.xlu0 %v536, 4
      %v638 = vpop.permute.xlu0 %637
      %639 = vrot.lane.b32.xlu0 %v544, 4
      %v640 = vpop.permute.xlu0 %639
      %641 = vrot.lane.b32.xlu0 %v552, 4
      %v642 = vpop.permute.xlu0 %641
      %643 = vrot.lane.b32.xlu0 %v560, 4
      %v644 = vpop.permute.xlu0 %643
      %645 = vrot.lane.b32.xlu0 %v568, 4
      %v646 = vpop.permute.xlu0 %645
      %647 = vrot.lane.b32.xlu0 %v576, 4
      %v648 = vpop.permute.xlu0 %647
      %649 = vrot.lane.b32.xlu0 %v584, 4
      %v650 = vpop.permute.xlu0 %649
      %651 = vrot.lane.b32.xlu0 %v592, 4
      %v652 = vpop.permute.xlu0 %651
      %653 = vrot.lane.b32.xlu0 %v600, 4
      %v654 = vpop.permute.xlu0 %653
      %655 = vrot.lane.b32.xlu0 %v608, 4
      %v656 = vpop.permute.xlu0 %655
      %v658 = vunpack.c.l.b16 %v278
      %v659 = vpack.c.b16 %v338, %v658
      %vm660 = vcmask 1046528
      %v661 = vrot.slane %v659, 1
      %v662 = vrot.slane %v386, 1
      %v663 = vsel %vm660, %v661, %v662
      %v664 = vrot.slane %v387, 1
      %v665 = vsel %vm660, %v662, %v664
      %v666 = vrot.slane %v388, 1
      %v667 = vsel %vm660, %v664, %v666
      %v668 = vrot.slane %v389, 1
      %v669 = vsel %vm660, %v666, %v668
      %v670 = vrot.slane %v390, 1
      %v671 = vsel %vm660, %v668, %v670
      %v672 = vrot.slane %v391, 1
      %v673 = vsel %vm660, %v670, %v672
      %v674 = vrot.slane %v392, 1
      %v675 = vsel %vm660, %v672, %v674
      %v676 = vrot.slane %v393, 1
      %v677 = vsel %vm660, %v674, %v676
      %v678 = vrot.slane %v394, 1
      %v679 = vsel %vm660, %v676, %v678
      %v680 = vrot.slane %v395, 1
      %v681 = vsel %vm660, %v678, %v680
      %v682 = vrot.slane %v396, 1
      %v683 = vsel %vm660, %v680, %v682
      %v684 = vrot.slane %v397, 1
      %v685 = vsel %vm660, %v682, %v684
      %v686 = vrot.slane %v398, 1
      %v687 = vsel %vm660, %v684, %v686
      %v688 = vrot.slane %v399, 1
      %v689 = vsel %vm660, %v686, %v688
      %v690 = vrot.slane %v400, 1
      %v691 = vsel %vm660, %v688, %v690
      %v692 = vrot.slane %v401, 1
      %v693 = vsel %vm660, %v690, %v692
      %v694 = vrot.slane %v402, 1
      %v695 = vsel %vm660, %v692, %v694
      %v696 = vrot.slane %v403, 1
      %v697 = vsel %vm660, %v694, %v696
      %v698 = vrot.slane %v404, 1
      %v699 = vsel %vm660, %v696, %v698
      %v700 = vrot.slane %v405, 1
      %v701 = vsel %vm660, %v698, %v700
      %v702 = vrot.slane %v406, 1
      %v703 = vsel %vm660, %v700, %v702
      %v704 = vrot.slane %v407, 1
      %v705 = vsel %vm660, %v702, %v704
      %v706 = vrot.slane %v408, 1
      %v707 = vsel %vm660, %v704, %v706
      %v708 = vrot.slane %v411, 1
      %v709 = vsel %vm660, %v706, %v708
      %710 = vrot.lane.b32.xlu0 %v663, 8
      %v711 = vpop.permute.xlu0 %710
      %712 = vrot.lane.b32.xlu0 %v665, 8
      %v713 = vpop.permute.xlu0 %712
      %714 = vrot.lane.b32.xlu0 %v667, 8
      %v715 = vpop.permute.xlu0 %714
      %716 = vrot.lane.b32.xlu0 %v669, 8
      %v717 = vpop.permute.xlu0 %716
      %718 = vrot.lane.b32.xlu0 %v671, 8
      %v719 = vpop.permute.xlu0 %718
      %720 = vrot.lane.b32.xlu0 %v673, 8
      %v721 = vpop.permute.xlu0 %720
      %722 = vrot.lane.b32.xlu0 %v675, 8
      %v723 = vpop.permute.xlu0 %722
      %724 = vrot.lane.b32.xlu0 %v677, 8
      %v725 = vpop.permute.xlu0 %724
      %726 = vrot.lane.b32.xlu0 %v679, 8
      %v727 = vpop.permute.xlu0 %726
      %728 = vrot.lane.b32.xlu0 %v681, 8
      %v729 = vpop.permute.xlu0 %728
      %730 = vrot.lane.b32.xlu0 %v683, 8
      %v731 = vpop.permute.xlu0 %730
      %732 = vrot.lane.b32.xlu0 %v685, 8
      %v733 = vpop.permute.xlu0 %732
      %734 = vrot.lane.b32.xlu0 %v687, 8
      %v735 = vpop.permute.xlu0 %734
      %736 = vrot.lane.b32.xlu0 %v689, 8
      %v737 = vpop.permute.xlu0 %736
      %738 = vrot.lane.b32.xlu0 %v691, 8
      %v739 = vpop.permute.xlu0 %738
      %740 = vrot.lane.b32.xlu0 %v693, 8
      %v741 = vpop.permute.xlu0 %740
      %742 = vrot.lane.b32.xlu0 %v695, 8
      %v743 = vpop.permute.xlu0 %742
      %744 = vrot.lane.b32.xlu0 %v697, 8
      %v745 = vpop.permute.xlu0 %744
      %746 = vrot.lane.b32.xlu0 %v699, 8
      %v747 = vpop.permute.xlu0 %746
      %748 = vrot.lane.b32.xlu0 %v701, 8
      %v749 = vpop.permute.xlu0 %748
      %750 = vrot.lane.b32.xlu0 %v703, 8
      %v751 = vpop.permute.xlu0 %750
      %752 = vrot.lane.b32.xlu0 %v705, 8
      %v753 = vpop.permute.xlu0 %752
      %754 = vrot.lane.b32.xlu0 %v707, 8
      %v755 = vpop.permute.xlu0 %754
      %756 = vrot.lane.b32.xlu0 %v709, 8
      %v757 = vpop.permute.xlu0 %756
      %v761 = vunpack.c.l.b16 %v279
      %v762 = vunpack.c.l.b16 %v280
      %v763 = vunpack.c.l.b16 %v281
      %v764 = vpack.c.b16 %v341, %v340
      %v765 = vpack.c.b16 %v343, %v342
      %v766 = vpack.c.b16 %v345, %v344
      %v767 = vpack.c.b16 %v347, %v346
      %v768 = vpack.c.b16 %v349, %v348
      %v769 = vpack.c.b16 %v351, %v350
      %v770 = vpack.c.b16 %v353, %v352
      %v771 = vpack.c.b16 %v355, %v354
      %v772 = vpack.c.b16 %v357, %v356
      %v773 = vpack.c.b16 %v359, %v358
      %v774 = vpack.c.b16 %v361, %v360
      %v775 = vpack.c.b16 %v363, %v362
      %v776 = vpack.c.b16 %v365, %v364
      %v777 = vpack.c.b16 %v367, %v366
      %v778 = vpack.c.b16 %v369, %v368
      %v779 = vpack.c.b16 %v371, %v370
      %v780 = vpack.c.b16 %v373, %v372
      %v781 = vpack.c.b16 %v375, %v374
      %v782 = vpack.c.b16 %v377, %v376
      %v783 = vpack.c.b16 %v379, %v378
      %v784 = vpack.c.b16 %v381, %v380
      %v785 = vpack.c.b16 %v383, %v382
      %v786 = vpack.c.b16 %v761, %v384
      %v787 = vpack.c.b16 %v763, %v762
      %788 = vrot.lane.b32.xlu0 %v764, 12
      %v789 = vpop.permute.xlu0 %788
      %790 = vrot.lane.b32.xlu0 %v765, 12
      %v791 = vpop.permute.xlu0 %790
      %792 = vrot.lane.b32.xlu0 %v766, 12
      %v793 = vpop.permute.xlu0 %792
      %794 = vrot.lane.b32.xlu0 %v767, 12
      %v795 = vpop.permute.xlu0 %794
      %796 = vrot.lane.b32.xlu0 %v768, 12
      %v797 = vpop.permute.xlu0 %796
      %798 = vrot.lane.b32.xlu0 %v769, 12
      %v799 = vpop.permute.xlu0 %798
      %800 = vrot.lane.b32.xlu0 %v770, 12
      %v801 = vpop.permute.xlu0 %800
      %802 = vrot.lane.b32.xlu0 %v771, 12
      %v803 = vpop.permute.xlu0 %802
      %804 = vrot.lane.b32.xlu0 %v772, 12
      %v805 = vpop.permute.xlu0 %804
      %806 = vrot.lane.b32.xlu0 %v773, 12
      %v807 = vpop.permute.xlu0 %806
      %808 = vrot.lane.b32.xlu0 %v774, 12
      %v809 = vpop.permute.xlu0 %808
      %810 = vrot.lane.b32.xlu0 %v775, 12
      %v811 = vpop.permute.xlu0 %810
      %812 = vrot.lane.b32.xlu0 %v776, 12
      %v813 = vpop.permute.xlu0 %812
      %814 = vrot.lane.b32.xlu0 %v777, 12
      %v815 = vpop.permute.xlu0 %814
      %816 = vrot.lane.b32.xlu0 %v778, 12
      %v817 = vpop.permute.xlu0 %816
      %818 = vrot.lane.b32.xlu0 %v779, 12
      %v819 = vpop.permute.xlu0 %818
      %820 = vrot.lane.b32.xlu0 %v780, 12
      %v821 = vpop.permute.xlu0 %820
      %822 = vrot.lane.b32.xlu0 %v781, 12
      %v823 = vpop.permute.xlu0 %822
      %824 = vrot.lane.b32.xlu0 %v782, 12
      %v825 = vpop.permute.xlu0 %824
      %826 = vrot.lane.b32.xlu0 %v783, 12
      %v827 = vpop.permute.xlu0 %826
      %828 = vrot.lane.b32.xlu0 %v784, 12
      %v829 = vpop.permute.xlu0 %828
      %830 = vrot.lane.b32.xlu0 %v785, 12
      %v831 = vpop.permute.xlu0 %830
      %832 = vrot.lane.b32.xlu0 %v786, 12
      %v833 = vpop.permute.xlu0 %832
      %834 = vrot.lane.b32.xlu0 %v787, 12
      %v835 = vpop.permute.xlu0 %834
      %v837 = vunpack.c.l.b16 %v282
      %v838 = vpack.c.b16 %v837, %v837
      %v840 = vshrl.u32 %v764, 16
      %v842 = vshll.u32 %v764, 16
      %v844 = vrot.slane %v842, 1
      %v845 = vor.u32 %v840, %v844
      %v847 = vshll.u32 %v765, 16
      %v849 = vrot.slane %v847, 1
      %v850 = vsel %vm412, %v845, %v849
      %v851 = vshrl.u32 %v765, 16
      %v853 = vor.u32 %v851, %v849
      %v855 = vshll.u32 %v766, 16
      %v857 = vrot.slane %v855, 1
      %v858 = vsel %vm412, %v853, %v857
      %v859 = vshrl.u32 %v766, 16
      %v861 = vor.u32 %v859, %v857
      %v863 = vshll.u32 %v767, 16
      %v865 = vrot.slane %v863, 1
      %v866 = vsel %vm412, %v861, %v865
      %v867 = vshrl.u32 %v767, 16
      %v869 = vor.u32 %v867, %v865
      %v871 = vshll.u32 %v768, 16
      %v873 = vrot.slane %v871, 1
      %v874 = vsel %vm412, %v869, %v873
      %v875 = vshrl.u32 %v768, 16
      %v877 = vor.u32 %v875, %v873
      %v879 = vshll.u32 %v769, 16
      %v881 = vrot.slane %v879, 1
      %v882 = vsel %vm412, %v877, %v881
      %v883 = vshrl.u32 %v769, 16
      %v885 = vor.u32 %v883, %v881
      %v887 = vshll.u32 %v770, 16
      %v889 = vrot.slane %v887, 1
      %v890 = vsel %vm412, %v885, %v889
      %v891 = vshrl.u32 %v770, 16
      %v893 = vor.u32 %v891, %v889
      %v895 = vshll.u32 %v771, 16
      %v897 = vrot.slane %v895, 1
      %v898 = vsel %vm412, %v893, %v897
      %v899 = vshrl.u32 %v771, 16
      %v901 = vor.u32 %v899, %v897
      %v903 = vshll.u32 %v772, 16
      %v905 = vrot.slane %v903, 1
      %v906 = vsel %vm412, %v901, %v905
      %v907 = vshrl.u32 %v772, 16
      %v909 = vor.u32 %v907, %v905
      %v911 = vshll.u32 %v773, 16
      %v913 = vrot.slane %v911, 1
      %v914 = vsel %vm412, %v909, %v913
      %v915 = vshrl.u32 %v773, 16
      %v917 = vor.u32 %v915, %v913
      %v919 = vshll.u32 %v774, 16
      %v921 = vrot.slane %v919, 1
      %v922 = vsel %vm412, %v917, %v921
      %v923 = vshrl.u32 %v774, 16
      %v925 = vor.u32 %v923, %v921
      %v927 = vshll.u32 %v775, 16
      %v929 = vrot.slane %v927, 1
      %v930 = vsel %vm412, %v925, %v929
      %v931 = vshrl.u32 %v775, 16
      %v933 = vor.u32 %v931, %v929
      %v935 = vshll.u32 %v776, 16
      %v937 = vrot.slane %v935, 1
      %v938 = vsel %vm412, %v933, %v937
      %v939 = vshrl.u32 %v776, 16
      %v941 = vor.u32 %v939, %v937
      %v943 = vshll.u32 %v777, 16
      %v945 = vrot.slane %v943, 1
      %v946 = vsel %vm412, %v941, %v945
      %v947 = vshrl.u32 %v777, 16
      %v949 = vor.u32 %v947, %v945
      %v951 = vshll.u32 %v778, 16
      %v953 = vrot.slane %v951, 1
      %v954 = vsel %vm412, %v949, %v953
      %v955 = vshrl.u32 %v778, 16
      %v957 = vor.u32 %v955, %v953
      %v959 = vshll.u32 %v779, 16
      %v961 = vrot.slane %v959, 1
      %v962 = vsel %vm412, %v957, %v961
      %v963 = vshrl.u32 %v779, 16
      %v965 = vor.u32 %v963, %v961
      %v967 = vshll.u32 %v780, 16
      %v969 = vrot.slane %v967, 1
      %v970 = vsel %vm412, %v965, %v969
      %v971 = vshrl.u32 %v780, 16
      %v973 = vor.u32 %v971, %v969
      %v975 = vshll.u32 %v781, 16
      %v977 = vrot.slane %v975, 1
      %v978 = vsel %vm412, %v973, %v977
      %v979 = vshrl.u32 %v781, 16
      %v981 = vor.u32 %v979, %v977
      %v983 = vshll.u32 %v782, 16
      %v985 = vrot.slane %v983, 1
      %v986 = vsel %vm412, %v981, %v985
      %v987 = vshrl.u32 %v782, 16
      %v989 = vor.u32 %v987, %v985
      %v991 = vshll.u32 %v783, 16
      %v993 = vrot.slane %v991, 1
      %v994 = vsel %vm412, %v989, %v993
      %v995 = vshrl.u32 %v783, 16
      %v997 = vor.u32 %v995, %v993
      %v999 = vshll.u32 %v784, 16
      %v1001 = vrot.slane %v999, 1
      %v1002 = vsel %vm412, %v997, %v1001
      %v1003 = vshrl.u32 %v784, 16
      %v1005 = vor.u32 %v1003, %v1001
      %v1007 = vshll.u32 %v785, 16
      %v1009 = vrot.slane %v1007, 1
      %v1010 = vsel %vm412, %v1005, %v1009
      %v1011 = vshrl.u32 %v785, 16
      %v1013 = vor.u32 %v1011, %v1009
      %v1015 = vshll.u32 %v786, 16
      %v1017 = vrot.slane %v1015, 1
      %v1018 = vsel %vm412, %v1013, %v1017
      %v1019 = vshrl.u32 %v786, 16
      %v1021 = vor.u32 %v1019, %v1017
      %v1023 = vshll.u32 %v787, 16
      %v1025 = vrot.slane %v1023, 1
      %v1026 = vsel %vm412, %v1021, %v1025
      %v1027 = vshrl.u32 %v787, 16
      %v1029 = vor.u32 %v1027, %v1025
      %v1031 = vshll.u32 %v838, 16
      %v1033 = vrot.slane %v1031, 1
      %v1034 = vsel %vm412, %v1029, %v1033
      %1035 = vrot.lane.b32.xlu0 %v850, 16
      %v1036 = vpop.permute.xlu0 %1035
      %1037 = vrot.lane.b32.xlu0 %v858, 16
      %v1038 = vpop.permute.xlu0 %1037
      %1039 = vrot.lane.b32.xlu0 %v866, 16
      %v1040 = vpop.permute.xlu0 %1039
      %1041 = vrot.lane.b32.xlu0 %v874, 16
      %v1042 = vpop.permute.xlu0 %1041
      %1043 = vrot.lane.b32.xlu0 %v882, 16
      %v1044 = vpop.permute.xlu0 %1043
      %1045 = vrot.lane.b32.xlu0 %v890, 16
      %v1046 = vpop.permute.xlu0 %1045
      %1047 = vrot.lane.b32.xlu0 %v898, 16
      %v1048 = vpop.permute.xlu0 %1047
      %1049 = vrot.lane.b32.xlu0 %v906, 16
      %v1050 = vpop.permute.xlu0 %1049
      %1051 = vrot.lane.b32.xlu0 %v914, 16
      %v1052 = vpop.permute.xlu0 %1051
      %1053 = vrot.lane.b32.xlu0 %v922, 16
      %v1054 = vpop.permute.xlu0 %1053
      %1055 = vrot.lane.b32.xlu0 %v930, 16
      %v1056 = vpop.permute.xlu0 %1055
      %1057 = vrot.lane.b32.xlu0 %v938, 16
      %v1058 = vpop.permute.xlu0 %1057
      %1059 = vrot.lane.b32.xlu0 %v946, 16
      %v1060 = vpop.permute.xlu0 %1059
      %1061 = vrot.lane.b32.xlu0 %v954, 16
      %v1062 = vpop.permute.xlu0 %1061
      %1063 = vrot.lane.b32.xlu0 %v962, 16
      %v1064 = vpop.permute.xlu0 %1063
      %1065 = vrot.lane.b32.xlu0 %v970, 16
      %v1066 = vpop.permute.xlu0 %1065
      %1067 = vrot.lane.b32.xlu0 %v978, 16
      %v1068 = vpop.permute.xlu0 %1067
      %1069 = vrot.lane.b32.xlu0 %v986, 16
      %v1070 = vpop.permute.xlu0 %1069
      %1071 = vrot.lane.b32.xlu0 %v994, 16
      %v1072 = vpop.permute.xlu0 %1071
      %1073 = vrot.lane.b32.xlu0 %v1002, 16
      %v1074 = vpop.permute.xlu0 %1073
      %1075 = vrot.lane.b32.xlu0 %v1010, 16
      %v1076 = vpop.permute.xlu0 %1075
      %1077 = vrot.lane.b32.xlu0 %v1018, 16
      %v1078 = vpop.permute.xlu0 %1077
      %1079 = vrot.lane.b32.xlu0 %v1026, 16
      %v1080 = vpop.permute.xlu0 %1079
      %1081 = vrot.lane.b32.xlu0 %v1034, 16
      %v1082 = vpop.permute.xlu0 %1081
      %v1084 = vunpack.c.l.b16 %v283
      %v1085 = vpack.c.b16 %v341, %v1084
      %v1086 = vrot.slane %v1085, 1
      %v1087 = vrot.slane %v765, 1
      %v1088 = vsel %vm660, %v1086, %v1087
      %v1089 = vrot.slane %v766, 1
      %v1090 = vsel %vm660, %v1087, %v1089
      %v1091 = vrot.slane %v767, 1
      %v1092 = vsel %vm660, %v1089, %v1091
      %v1093 = vrot.slane %v768, 1
      %v1094 = vsel %vm660, %v1091, %v1093
      %v1095 = vrot.slane %v769, 1
      %v1096 = vsel %vm660, %v1093, %v1095
      %v1097 = vrot.slane %v770, 1
      %v1098 = vsel %vm660, %v1095, %v1097
      %v1099 = vrot.slane %v771, 1
      %v1100 = vsel %vm660, %v1097, %v1099
      %v1101 = vrot.slane %v772, 1
      %v1102 = vsel %vm660, %v1099, %v1101
      %v1103 = vrot.slane %v773, 1
      %v1104 = vsel %vm660, %v1101, %v1103
      %v1105 = vrot.slane %v774, 1
      %v1106 = vsel %vm660, %v1103, %v1105
      %v1107 = vrot.slane %v775, 1
      %v1108 = vsel %vm660, %v1105, %v1107
      %v1109 = vrot.slane %v776, 1
      %v1110 = vsel %vm660, %v1107, %v1109
      %v1111 = vrot.slane %v777, 1
      %v1112 = vsel %vm660, %v1109, %v1111
      %v1113 = vrot.slane %v778, 1
      %v1114 = vsel %vm660, %v1111, %v1113
      %v1115 = vrot.slane %v779, 1
      %v1116 = vsel %vm660, %v1113, %v1115
      %v1117 = vrot.slane %v780, 1
      %v1118 = vsel %vm660, %v1115, %v1117
      %v1119 = vrot.slane %v781, 1
      %v1120 = vsel %vm660, %v1117, %v1119
      %v1121 = vrot.slane %v782, 1
      %v1122 = vsel %vm660, %v1119, %v1121
      %v1123 = vrot.slane %v783, 1
      %v1124 = vsel %vm660, %v1121, %v1123
      %v1125 = vrot.slane %v784, 1
      %v1126 = vsel %vm660, %v1123, %v1125
      %v1127 = vrot.slane %v785, 1
      %v1128 = vsel %vm660, %v1125, %v1127
      %v1129 = vrot.slane %v786, 1
      %v1130 = vsel %vm660, %v1127, %v1129
      %v1131 = vrot.slane %v787, 1
      %v1132 = vsel %vm660, %v1129, %v1131
      %v1133 = vrot.slane %v838, 1
      %v1134 = vsel %vm660, %v1131, %v1133
      %1135 = vrot.lane.b32.xlu0 %v1088, 20
      %v1136 = vpop.permute.xlu0 %1135
      %1137 = vrot.lane.b32.xlu0 %v1090, 20
      %v1138 = vpop.permute.xlu0 %1137
      %1139 = vrot.lane.b32.xlu0 %v1092, 20
      %v1140 = vpop.permute.xlu0 %1139
      %1141 = vrot.lane.b32.xlu0 %v1094, 20
      %v1142 = vpop.permute.xlu0 %1141
      %1143 = vrot.lane.b32.xlu0 %v1096, 20
      %v1144 = vpop.permute.xlu0 %1143
      %1145 = vrot.lane.b32.xlu0 %v1098, 20
      %v1146 = vpop.permute.xlu0 %1145
      %1147 = vrot.lane.b32.xlu0 %v1100, 20
      %v1148 = vpop.permute.xlu0 %1147
      %1149 = vrot.lane.b32.xlu0 %v1102, 20
      %v1150 = vpop.permute.xlu0 %1149
      %1151 = vrot.lane.b32.xlu0 %v1104, 20
      %v1152 = vpop.permute.xlu0 %1151
      %1153 = vrot.lane.b32.xlu0 %v1106, 20
      %v1154 = vpop.permute.xlu0 %1153
      %1155 = vrot.lane.b32.xlu0 %v1108, 20
      %v1156 = vpop.permute.xlu0 %1155
      %1157 = vrot.lane.b32.xlu0 %v1110, 20
      %v1158 = vpop.permute.xlu0 %1157
      %1159 = vrot.lane.b32.xlu0 %v1112, 20
      %v1160 = vpop.permute.xlu0 %1159
      %1161 = vrot.lane.b32.xlu0 %v1114, 20
      %v1162 = vpop.permute.xlu0 %1161
      %1163 = vrot.lane.b32.xlu0 %v1116, 20
      %v1164 = vpop.permute.xlu0 %1163
      %1165 = vrot.lane.b32.xlu0 %v1118, 20
      %v1166 = vpop.permute.xlu0 %1165
      %1167 = vrot.lane.b32.xlu0 %v1120, 20
      %v1168 = vpop.permute.xlu0 %1167
      %1169 = vrot.lane.b32.xlu0 %v1122, 20
      %v1170 = vpop.permute.xlu0 %1169
      %1171 = vrot.lane.b32.xlu0 %v1124, 20
      %v1172 = vpop.permute.xlu0 %1171
      %1173 = vrot.lane.b32.xlu0 %v1126, 20
      %v1174 = vpop.permute.xlu0 %1173
      %1175 = vrot.lane.b32.xlu0 %v1128, 20
      %v1176 = vpop.permute.xlu0 %1175
      %1177 = vrot.lane.b32.xlu0 %v1130, 20
      %v1178 = vpop.permute.xlu0 %1177
      %1179 = vrot.lane.b32.xlu0 %v1132, 20
      %v1180 = vpop.permute.xlu0 %1179
      %1181 = vrot.lane.b32.xlu0 %v1134, 20
      %v1182 = vpop.permute.xlu0 %1181
      %v1186 = vunpack.c.l.b16 %v284
      %v1187 = vunpack.c.l.b16 %v285
      %v1188 = vunpack.c.l.b16 %v286
      %v1189 = vpack.c.b16 %v762, %v761
      %v1190 = vpack.c.b16 %v1186, %v763
      %v1191 = vpack.c.b16 %v1188, %v1187
      %1192 = vrot.lane.b32.xlu0 %v388, 24
      %v1193 = vpop.permute.xlu0 %1192
      %1194 = vrot.lane.b32.xlu0 %v389, 24
      %v1195 = vpop.permute.xlu0 %1194
      %1196 = vrot.lane.b32.xlu0 %v390, 24
      %v1197 = vpop.permute.xlu0 %1196
      %1198 = vrot.lane.b32.xlu0 %v391, 24
      %v1199 = vpop.permute.xlu0 %1198
      %1200 = vrot.lane.b32.xlu0 %v392, 24
      %v1201 = vpop.permute.xlu0 %1200
      %1202 = vrot.lane.b32.xlu0 %v393, 24
      %v1203 = vpop.permute.xlu0 %1202
      %1204 = vrot.lane.b32.xlu0 %v394, 24
      %v1205 = vpop.permute.xlu0 %1204
      %1206 = vrot.lane.b32.xlu0 %v395, 24
      %v1207 = vpop.permute.xlu0 %1206
      %1208 = vrot.lane.b32.xlu0 %v396, 24
      %v1209 = vpop.permute.xlu0 %1208
      %1210 = vrot.lane.b32.xlu0 %v397, 24
      %v1211 = vpop.permute.xlu0 %1210
      %1212 = vrot.lane.b32.xlu0 %v398, 24
      %v1213 = vpop.permute.xlu0 %1212
      %1214 = vrot.lane.b32.xlu0 %v399, 24
      %v1215 = vpop.permute.xlu0 %1214
      %1216 = vrot.lane.b32.xlu0 %v400, 24
      %v1217 = vpop.permute.xlu0 %1216
      %1218 = vrot.lane.b32.xlu0 %v401, 24
      %v1219 = vpop.permute.xlu0 %1218
      %1220 = vrot.lane.b32.xlu0 %v402, 24
      %v1221 = vpop.permute.xlu0 %1220
      %1222 = vrot.lane.b32.xlu0 %v403, 24
      %v1223 = vpop.permute.xlu0 %1222
      %1224 = vrot.lane.b32.xlu0 %v404, 24
      %v1225 = vpop.permute.xlu0 %1224
      %1226 = vrot.lane.b32.xlu0 %v405, 24
      %v1227 = vpop.permute.xlu0 %1226
      %1228 = vrot.lane.b32.xlu0 %v406, 24
      %v1229 = vpop.permute.xlu0 %1228
      %1230 = vrot.lane.b32.xlu0 %v407, 24
      %v1231 = vpop.permute.xlu0 %1230
      %1232 = vrot.lane.b32.xlu0 %v408, 24
      %v1233 = vpop.permute.xlu0 %1232
      %1234 = vrot.lane.b32.xlu0 %v1189, 24
      %v1235 = vpop.permute.xlu0 %1234
      %1236 = vrot.lane.b32.xlu0 %v1190, 24
      %v1237 = vpop.permute.xlu0 %1236
      %1238 = vrot.lane.b32.xlu0 %v1191, 24
      %v1239 = vpop.permute.xlu0 %1238
      %v1241 = vunpack.c.l.b16 %v287
      %v1242 = vpack.c.b16 %v1241, %v1241
      %v1244 = vshll.u32 %v1189, 16
      %v1246 = vrot.slane %v1244, 1
      %v1247 = vsel %vm412, %v603, %v1246
      %v1248 = vshrl.u32 %v1189, 16
      %v1250 = vor.u32 %v1248, %v1246
      %v1252 = vshll.u32 %v1190, 16
      %v1254 = vrot.slane %v1252, 1
      %v1255 = vsel %vm412, %v1250, %v1254
      %v1256 = vshrl.u32 %v1190, 16
      %v1258 = vor.u32 %v1256, %v1254
      %v1260 = vshll.u32 %v1191, 16
      %v1262 = vrot.slane %v1260, 1
      %v1263 = vsel %vm412, %v1258, %v1262
      %v1264 = vshrl.u32 %v1191, 16
      %v1266 = vor.u32 %v1264, %v1262
      %v1268 = vshll.u32 %v1242, 16
      %v1270 = vrot.slane %v1268, 1
      %v1271 = vsel %vm412, %v1266, %v1270
      %1272 = vrot.lane.b32.xlu0 %v448, 28
      %v1273 = vpop.permute.xlu0 %1272
      %1274 = vrot.lane.b32.xlu0 %v456, 28
      %v1275 = vpop.permute.xlu0 %1274
      %1276 = vrot.lane.b32.xlu0 %v464, 28
      %v1277 = vpop.permute.xlu0 %1276
      %1278 = vrot.lane.b32.xlu0 %v472, 28
      %v1279 = vpop.permute.xlu0 %1278
      %1280 = vrot.lane.b32.xlu0 %v480, 28
      %v1281 = vpop.permute.xlu0 %1280
      %1282 = vrot.lane.b32.xlu0 %v488, 28
      %v1283 = vpop.permute.xlu0 %1282
      %1284 = vrot.lane.b32.xlu0 %v496, 28
      %v1285 = vpop.permute.xlu0 %1284
      %1286 = vrot.lane.b32.xlu0 %v504, 28
      %v1287 = vpop.permute.xlu0 %1286
      %1288 = vrot.lane.b32.xlu0 %v512, 28
      %v1289 = vpop.permute.xlu0 %1288
      %1290 = vrot.lane.b32.xlu0 %v520, 28
      %v1291 = vpop.permute.xlu0 %1290
      %1292 = vrot.lane.b32.xlu0 %v528, 28
      %v1293 = vpop.permute.xlu0 %1292
      %1294 = vrot.lane.b32.xlu0 %v536, 28
      %v1295 = vpop.permute.xlu0 %1294
      %1296 = vrot.lane.b32.xlu0 %v544, 28
      %v1297 = vpop.permute.xlu0 %1296
      %1298 = vrot.lane.b32.xlu0 %v552, 28
      %v1299 = vpop.permute.xlu0 %1298
      %1300 = vrot.lane.b32.xlu0 %v560, 28
      %v1301 = vpop.permute.xlu0 %1300
      %1302 = vrot.lane.b32.xlu0 %v568, 28
      %v1303 = vpop.permute.xlu0 %1302
      %1304 = vrot.lane.b32.xlu0 %v576, 28
      %v1305 = vpop.permute.xlu0 %1304
      %1306 = vrot.lane.b32.xlu0 %v584, 28
      %v1307 = vpop.permute.xlu0 %1306
      %1308 = vrot.lane.b32.xlu0 %v592, 28
      %v1309 = vpop.permute.xlu0 %1308
      %1310 = vrot.lane.b32.xlu0 %v600, 28
      %v1311 = vpop.permute.xlu0 %1310
      %1312 = vrot.lane.b32.xlu0 %v1247, 28
      %v1313 = vpop.permute.xlu0 %1312
      %1314 = vrot.lane.b32.xlu0 %v1255, 28
      %v1315 = vpop.permute.xlu0 %1314
      %1316 = vrot.lane.b32.xlu0 %v1263, 28
      %v1317 = vpop.permute.xlu0 %1316
      %1318 = vrot.lane.b32.xlu0 %v1271, 28
      %v1319 = vpop.permute.xlu0 %1318
      %v1321 = vunpack.c.l.b16 %v288
      %v1322 = vpack.c.b16 %v344, %v1321
      %v1323 = vrot.slane %v1322, 1
      %v1324 = vsel %vm660, %v1323, %v668
      %v1325 = vrot.slane %v1189, 1
      %v1326 = vsel %vm660, %v706, %v1325
      %v1327 = vrot.slane %v1190, 1
      %v1328 = vsel %vm660, %v1325, %v1327
      %v1329 = vrot.slane %v1191, 1
      %v1330 = vsel %vm660, %v1327, %v1329
      %v1331 = vrot.slane %v1242, 1
      %v1332 = vsel %vm660, %v1329, %v1331
      %1333 = vrot.lane.b32.xlu0 %v1324, 32
      %v1334 = vpop.permute.xlu0 %1333
      %1335 = vrot.lane.b32.xlu0 %v671, 32
      %v1336 = vpop.permute.xlu0 %1335
      %1337 = vrot.lane.b32.xlu0 %v673, 32
      %v1338 = vpop.permute.xlu0 %1337
      %1339 = vrot.lane.b32.xlu0 %v675, 32
      %v1340 = vpop.permute.xlu0 %1339
      %1341 = vrot.lane.b32.xlu0 %v677, 32
      %v1342 = vpop.permute.xlu0 %1341
      %1343 = vrot.lane.b32.xlu0 %v679, 32
      %v1344 = vpop.permute.xlu0 %1343
      %1345 = vrot.lane.b32.xlu0 %v681, 32
      %v1346 = vpop.permute.xlu0 %1345
      %1347 = vrot.lane.b32.xlu0 %v683, 32
      %v1348 = vpop.permute.xlu0 %1347
      %1349 = vrot.lane.b32.xlu0 %v685, 32
      %v1350 = vpop.permute.xlu0 %1349
      %1351 = vrot.lane.b32.xlu0 %v687, 32
      %v1352 = vpop.permute.xlu0 %1351
      %1353 = vrot.lane.b32.xlu0 %v689, 32
      %v1354 = vpop.permute.xlu0 %1353
      %1355 = vrot.lane.b32.xlu0 %v691, 32
      %v1356 = vpop.permute.xlu0 %1355
      %1357 = vrot.lane.b32.xlu0 %v693, 32
      %v1358 = vpop.permute.xlu0 %1357
      %1359 = vrot.lane.b32.xlu0 %v695, 32
      %v1360 = vpop.permute.xlu0 %1359
      %1361 = vrot.lane.b32.xlu0 %v697, 32
      %v1362 = vpop.permute.xlu0 %1361
      %1363 = vrot.lane.b32.xlu0 %v699, 32
      %v1364 = vpop.permute.xlu0 %1363
      %1365 = vrot.lane.b32.xlu0 %v701, 32
      %v1366 = vpop.permute.xlu0 %1365
      %1367 = vrot.lane.b32.xlu0 %v703, 32
      %v1368 = vpop.permute.xlu0 %1367
      %1369 = vrot.lane.b32.xlu0 %v705, 32
      %v1370 = vpop.permute.xlu0 %1369
      %1371 = vrot.lane.b32.xlu0 %v707, 32
      %v1372 = vpop.permute.xlu0 %1371
      %1373 = vrot.lane.b32.xlu0 %v1326, 32
      %v1374 = vpop.permute.xlu0 %1373
      %1375 = vrot.lane.b32.xlu0 %v1328, 32
      %v1376 = vpop.permute.xlu0 %1375
      %1377 = vrot.lane.b32.xlu0 %v1330, 32
      %v1378 = vpop.permute.xlu0 %1377
      %1379 = vrot.lane.b32.xlu0 %v1332, 32
      %v1380 = vpop.permute.xlu0 %1379
      %vm1381 = vcmask 31744
      %v1383 = vsel %vm1381, %v385, %v610
      %v1385 = vsel %vm1381, %v386, %v612
      %v1387 = vsel %vm1381, %v387, %v614
      %v1389 = vsel %vm1381, %v388, %v616
      %v1391 = vsel %vm1381, %v389, %v618
      %v1393 = vsel %vm1381, %v390, %v620
      %v1395 = vsel %vm1381, %v391, %v622
      %v1397 = vsel %vm1381, %v392, %v624
      %v1399 = vsel %vm1381, %v393, %v626
      %v1401 = vsel %vm1381, %v394, %v628
      %v1403 = vsel %vm1381, %v395, %v630
      %v1405 = vsel %vm1381, %v396, %v632
      %v1407 = vsel %vm1381, %v397, %v634
      %v1409 = vsel %vm1381, %v398, %v636
      %v1411 = vsel %vm1381, %v399, %v638
      %v1413 = vsel %vm1381, %v400, %v640
      %v1415 = vsel %vm1381, %v401, %v642
      %v1417 = vsel %vm1381, %v402, %v644
      %v1419 = vsel %vm1381, %v403, %v646
      %v1421 = vsel %vm1381, %v404, %v648
      %v1423 = vsel %vm1381, %v405, %v650
      %v1425 = vsel %vm1381, %v406, %v652
      %v1427 = vsel %vm1381, %v407, %v654
      %v1429 = vsel %vm1381, %v408, %v656
      %vm1430 = vcmask 64512
      %v1432 = vsel %vm1430, %v1383, %v711
      %v1434 = vsel %vm1430, %v1385, %v713
      %v1436 = vsel %vm1430, %v1387, %v715
      %v1438 = vsel %vm1430, %v1389, %v717
      %v1440 = vsel %vm1430, %v1391, %v719
      %v1442 = vsel %vm1430, %v1393, %v721
      %v1444 = vsel %vm1430, %v1395, %v723
      %v1446 = vsel %vm1430, %v1397, %v725
      %v1448 = vsel %vm1430, %v1399, %v727
      %v1450 = vsel %vm1430, %v1401, %v729
      %v1452 = vsel %vm1430, %v1403, %v731
      %v1454 = vsel %vm1430, %v1405, %v733
      %v1456 = vsel %vm1430, %v1407, %v735
      %v1458 = vsel %vm1430, %v1409, %v737
      %v1460 = vsel %vm1430, %v1411, %v739
      %v1462 = vsel %vm1430, %v1413, %v741
      %v1464 = vsel %vm1430, %v1415, %v743
      %v1466 = vsel %vm1430, %v1417, %v745
      %v1468 = vsel %vm1430, %v1419, %v747
      %v1470 = vsel %vm1430, %v1421, %v749
      %v1472 = vsel %vm1430, %v1423, %v751
      %v1474 = vsel %vm1430, %v1425, %v753
      %v1476 = vsel %vm1430, %v1427, %v755
      %v1478 = vsel %vm1430, %v1429, %v757
      %vm1479 = vcmask 97280
      %v1481 = vsel %vm1479, %v1432, %v789
      %v1483 = vsel %vm1479, %v1434, %v791
      %v1485 = vsel %vm1479, %v1436, %v793
      %v1487 = vsel %vm1479, %v1438, %v795
      %v1489 = vsel %vm1479, %v1440, %v797
      %v1491 = vsel %vm1479, %v1442, %v799
      %v1493 = vsel %vm1479, %v1444, %v801
      %v1495 = vsel %vm1479, %v1446, %v803
      %v1497 = vsel %vm1479, %v1448, %v805
      %v1499 = vsel %vm1479, %v1450, %v807
      %v1501 = vsel %vm1479, %v1452, %v809
      %v1503 = vsel %vm1479, %v1454, %v811
      %v1505 = vsel %vm1479, %v1456, %v813
      %v1507 = vsel %vm1479, %v1458, %v815
      %v1509 = vsel %vm1479, %v1460, %v817
      %v1511 = vsel %vm1479, %v1462, %v819
      %v1513 = vsel %vm1479, %v1464, %v821
      %v1515 = vsel %vm1479, %v1466, %v823
      %v1517 = vsel %vm1479, %v1468, %v825
      %v1519 = vsel %vm1479, %v1470, %v827
      %v1521 = vsel %vm1479, %v1472, %v829
      %v1523 = vsel %vm1479, %v1474, %v831
      %v1525 = vsel %vm1479, %v1476, %v833
      %v1527 = vsel %vm1479, %v1478, %v835
      %vm1528 = vcmask 130048
      %v1530 = vsel %vm1528, %v1481, %v1036
      %v1532 = vsel %vm1528, %v1483, %v1038
      %v1534 = vsel %vm1528, %v1485, %v1040
      %v1536 = vsel %vm1528, %v1487, %v1042
      %v1538 = vsel %vm1528, %v1489, %v1044
      %v1540 = vsel %vm1528, %v1491, %v1046
      %v1542 = vsel %vm1528, %v1493, %v1048
      %v1544 = vsel %vm1528, %v1495, %v1050
      %v1546 = vsel %vm1528, %v1497, %v1052
      %v1548 = vsel %vm1528, %v1499, %v1054
      %v1550 = vsel %vm1528, %v1501, %v1056
      %v1552 = vsel %vm1528, %v1503, %v1058
      %v1554 = vsel %vm1528, %v1505, %v1060
      %v1556 = vsel %vm1528, %v1507, %v1062
      %v1558 = vsel %vm1528, %v1509, %v1064
      %v1560 = vsel %vm1528, %v1511, %v1066
      %v1562 = vsel %vm1528, %v1513, %v1068
      %v1564 = vsel %vm1528, %v1515, %v1070
      %v1566 = vsel %vm1528, %v1517, %v1072
      %v1568 = vsel %vm1528, %v1519, %v1074
      %v1570 = vsel %vm1528, %v1521, %v1076
      %v1572 = vsel %vm1528, %v1523, %v1078
      %v1574 = vsel %vm1528, %v1525, %v1080
      %v1576 = vsel %vm1528, %v1527, %v1082
      %vm1577 = vcmask 162816
      %v1579 = vsel %vm1577, %v1530, %v1136
      %v1581 = vsel %vm1577, %v1532, %v1138
      %v1583 = vsel %vm1577, %v1534, %v1140
      %v1585 = vsel %vm1577, %v1536, %v1142
      %v1587 = vsel %vm1577, %v1538, %v1144
      %v1589 = vsel %vm1577, %v1540, %v1146
      %v1591 = vsel %vm1577, %v1542, %v1148
      %v1593 = vsel %vm1577, %v1544, %v1150
      %v1595 = vsel %vm1577, %v1546, %v1152
      %v1597 = vsel %vm1577, %v1548, %v1154
      %v1599 = vsel %vm1577, %v1550, %v1156
      %v1601 = vsel %vm1577, %v1552, %v1158
      %v1603 = vsel %vm1577, %v1554, %v1160
      %v1605 = vsel %vm1577, %v1556, %v1162
      %v1607 = vsel %vm1577, %v1558, %v1164
      %v1609 = vsel %vm1577, %v1560, %v1166
      %v1611 = vsel %vm1577, %v1562, %v1168
      %v1613 = vsel %vm1577, %v1564, %v1170
      %v1615 = vsel %vm1577, %v1566, %v1172
      %v1617 = vsel %vm1577, %v1568, %v1174
      %v1619 = vsel %vm1577, %v1570, %v1176
      %v1621 = vsel %vm1577, %v1572, %v1178
      %v1623 = vsel %vm1577, %v1574, %v1180
      %v1625 = vsel %vm1577, %v1576, %v1182
      %vm1626 = vcmask 195584
      %v1628 = vsel %vm1626, %v1579, %v1193
      %v1630 = vsel %vm1626, %v1581, %v1195
      %v1632 = vsel %vm1626, %v1583, %v1197
      %v1634 = vsel %vm1626, %v1585, %v1199
      %v1636 = vsel %vm1626, %v1587, %v1201
      %v1638 = vsel %vm1626, %v1589, %v1203
      %v1640 = vsel %vm1626, %v1591, %v1205
      %v1642 = vsel %vm1626, %v1593, %v1207
      %v1644 = vsel %vm1626, %v1595, %v1209
      %v1646 = vsel %vm1626, %v1597, %v1211
      %v1648 = vsel %vm1626, %v1599, %v1213
      %v1650 = vsel %vm1626, %v1601, %v1215
      %v1652 = vsel %vm1626, %v1603, %v1217
      %v1654 = vsel %vm1626, %v1605, %v1219
      %v1656 = vsel %vm1626, %v1607, %v1221
      %v1658 = vsel %vm1626, %v1609, %v1223
      %v1660 = vsel %vm1626, %v1611, %v1225
      %v1662 = vsel %vm1626, %v1613, %v1227
      %v1664 = vsel %vm1626, %v1615, %v1229
      %v1666 = vsel %vm1626, %v1617, %v1231
      %v1668 = vsel %vm1626, %v1619, %v1233
      %v1670 = vsel %vm1626, %v1621, %v1235
      %v1672 = vsel %vm1626, %v1623, %v1237
      %v1674 = vsel %vm1626, %v1625, %v1239
      %vm1675 = vcmask 228352
      %v1677 = vsel %vm1675, %v1628, %v1273
      %v1679 = vsel %vm1675, %v1630, %v1275
      %v1681 = vsel %vm1675, %v1632, %v1277
      %v1683 = vsel %vm1675, %v1634, %v1279
      %v1685 = vsel %vm1675, %v1636, %v1281
      %v1687 = vsel %vm1675, %v1638, %v1283
      %v1689 = vsel %vm1675, %v1640, %v1285
      %v1691 = vsel %vm1675, %v1642, %v1287
      %v1693 = vsel %vm1675, %v1644, %v1289
      %v1695 = vsel %vm1675, %v1646, %v1291
      %v1697 = vsel %vm1675, %v1648, %v1293
      %v1699 = vsel %vm1675, %v1650, %v1295
      %v1701 = vsel %vm1675, %v1652, %v1297
      %v1703 = vsel %vm1675, %v1654, %v1299
      %v1705 = vsel %vm1675, %v1656, %v1301
      %v1707 = vsel %vm1675, %v1658, %v1303
      %v1709 = vsel %vm1675, %v1660, %v1305
      %v1711 = vsel %vm1675, %v1662, %v1307
      %v1713 = vsel %vm1675, %v1664, %v1309
      %v1715 = vsel %vm1675, %v1666, %v1311
      %v1717 = vsel %vm1675, %v1668, %v1313
      %v1719 = vsel %vm1675, %v1670, %v1315
      %v1721 = vsel %vm1675, %v1672, %v1317
      %v1723 = vsel %vm1675, %v1674, %v1319
      %vm1724 = vcmask 261120
      %v1726 = vsel %vm1724, %v1677, %v1334
      %v1728 = vsel %vm1724, %v1679, %v1336
      %v1730 = vsel %vm1724, %v1681, %v1338
      %v1732 = vsel %vm1724, %v1683, %v1340
      %v1734 = vsel %vm1724, %v1685, %v1342
      %v1736 = vsel %vm1724, %v1687, %v1344
      %v1738 = vsel %vm1724, %v1689, %v1346
      %v1740 = vsel %vm1724, %v1691, %v1348
      %v1742 = vsel %vm1724, %v1693, %v1350
      %v1744 = vsel %vm1724, %v1695, %v1352
      %v1746 = vsel %vm1724, %v1697, %v1354
      %v1748 = vsel %vm1724, %v1699, %v1356
      %v1750 = vsel %vm1724, %v1701, %v1358
      %v1752 = vsel %vm1724, %v1703, %v1360
      %v1754 = vsel %vm1724, %v1705, %v1362
      %v1756 = vsel %vm1724, %v1707, %v1364
      %v1758 = vsel %vm1724, %v1709, %v1366
      %v1760 = vsel %vm1724, %v1711, %v1368
      %v1762 = vsel %vm1724, %v1713, %v1370
      %v1764 = vsel %vm1724, %v1715, %v1372
      %v1766 = vsel %vm1724, %v1717, %v1374
      %v1768 = vsel %vm1724, %v1719, %v1376
      %v1770 = vsel %vm1724, %v1721, %v1378
      %v1772 = vsel %vm1724, %v1723, %v1380
      %v1773 = vld [vmem:[%s1] sm:$0xf]
      %v1774 = vld [vmem:[%s1 + $0x4] sm:$0xf]
      %v1775 = vld [vmem:[%s1 + $0x8] sm:$0xf]
      %v1776 = vld [vmem:[%s1 + $0xc] sm:$0xf]
      %v1777 = vld [vmem:[%s1 + $0x10] sm:$0x3]
      %v1778 = vlaneseq
      %v1779 = vshrl.u32 %v1778, 7
      %v1780 = vadd.s32 %v1779, 8
      %v1781 = vadd.s32 %v1779, 16
      %v1782 = vadd.s32 %v1779, 24
      %v1783 = vadd.s32 %v1779, 32
      %v1784 = vadd.s32 %v1779, 40
      %v1785 = vadd.s32 %v1779, 48
      %v1786 = vadd.s32 %v1779, 56
      %v1787 = vadd.s32 %v1779, 64
      %v1788 = vadd.s32 %v1779, 72
      %v1789 = vadd.s32 %v1779, 80
      %v1790 = vadd.s32 %v1779, 88
      %v1791 = vadd.s32 %v1779, 96
      %v1792 = vadd.s32 %v1779, 104
      %v1793 = vadd.s32 %v1779, 112
      %v1794 = vadd.s32 %v1779, 120
      %v1795 = vadd.s32 %v1779, 128
      %v1796 = vadd.s32 %v1779, 136
      %v1797 = vadd.s32 %v1779, 144
      %v1798 = vadd.s32 %v1779, 152
      %v1799 = vadd.s32 %v1779, 160
      %v1800 = vadd.s32 %v1779, 168
      %v1801 = vadd.s32 %v1779, 176
      %v1802 = vadd.s32 %v1779, 184
      %v1803 = vadd.s32 %v1779, 192
      %v1804 = vadd.s32 %v1779, 200
      %v1805 = vadd.s32 %v1779, 208
      %v1806 = vadd.s32 %v1779, 216
      %v1807 = vadd.s32 %v1779, 224
      %v1808 = vadd.s32 %v1779, 232
      %v1809 = vadd.s32 %v1779, 240
      %v1810 = vadd.s32 %v1779, 248
      %v1811 = vadd.s32 %v1779, 256
      %v1812 = vadd.s32 %v1779, 264
      %v1813 = vadd.s32 %v1779, 272
      %v1814 = vadd.s32 %v1779, 280
      %v1815 = vadd.s32 %v1779, 288
      %v1816 = vadd.s32 %v1779, 296
      %v1817 = vadd.s32 %v1779, 304
      %v1818 = vadd.s32 %v1779, 312
      %v1819 = vadd.s32 %v1779, 320
      %v1820 = vadd.s32 %v1779, 328
      %v1821 = vadd.s32 %v1779, 336
      %v1822 = vadd.s32 %v1779, 344
      %v1823 = vadd.s32 %v1779, 352
      %v1824 = vadd.s32 %v1779, 360
      %v1825 = vadd.s32 %v1779, 368
      %v1826 = vadd.s32 %v1779, 376
      %v1827 = vcvt.s32.f32 %v1779
      %v1828 = vcvt.s32.f32 %v1780
      %v1829 = vcvt.s32.f32 %v1781
      %v1830 = vcvt.s32.f32 %v1782
      %v1831 = vcvt.s32.f32 %v1783
      %v1832 = vcvt.s32.f32 %v1784
      %v1833 = vcvt.s32.f32 %v1785
      %v1834 = vcvt.s32.f32 %v1786
      %v1835 = vcvt.s32.f32 %v1787
      %v1836 = vcvt.s32.f32 %v1788
      %v1837 = vcvt.s32.f32 %v1789
      %v1838 = vcvt.s32.f32 %v1790
      %v1839 = vcvt.s32.f32 %v1791
      %v1840 = vcvt.s32.f32 %v1792
      %v1841 = vcvt.s32.f32 %v1793
      %v1842 = vcvt.s32.f32 %v1794
      %v1843 = vcvt.s32.f32 %v1795
      %v1844 = vcvt.s32.f32 %v1796
      %v1845 = vcvt.s32.f32 %v1797
      %v1846 = vcvt.s32.f32 %v1798
      %v1847 = vcvt.s32.f32 %v1799
      %v1848 = vcvt.s32.f32 %v1800
      %v1849 = vcvt.s32.f32 %v1801
      %v1850 = vcvt.s32.f32 %v1802
      %v1851 = vcvt.s32.f32 %v1803
      %v1852 = vcvt.s32.f32 %v1804
      %v1853 = vcvt.s32.f32 %v1805
      %v1854 = vcvt.s32.f32 %v1806
      %v1855 = vcvt.s32.f32 %v1807
      %v1856 = vcvt.s32.f32 %v1808
      %v1857 = vcvt.s32.f32 %v1809
      %v1858 = vcvt.s32.f32 %v1810
      %v1859 = vcvt.s32.f32 %v1811
      %v1860 = vcvt.s32.f32 %v1812
      %v1861 = vcvt.s32.f32 %v1813
      %v1862 = vcvt.s32.f32 %v1814
      %v1863 = vcvt.s32.f32 %v1815
      %v1864 = vcvt.s32.f32 %v1816
      %v1865 = vcvt.s32.f32 %v1817
      %v1866 = vcvt.s32.f32 %v1818
      %v1867 = vcvt.s32.f32 %v1819
      %v1868 = vcvt.s32.f32 %v1820
      %v1869 = vcvt.s32.f32 %v1821
      %v1870 = vcvt.s32.f32 %v1822
      %v1871 = vcvt.s32.f32 %v1823
      %v1872 = vcvt.s32.f32 %v1824
      %v1873 = vcvt.s32.f32 %v1825
      %v1874 = vcvt.s32.f32 %v1826
      %v1875 = vadd.f32 %v1827, 0.5
      %v1876 = vadd.f32 %v1828, 0.5
      %v1877 = vadd.f32 %v1829, 0.5
      %v1878 = vadd.f32 %v1830, 0.5
      %v1879 = vadd.f32 %v1831, 0.5
      %v1880 = vadd.f32 %v1832, 0.5
      %v1881 = vadd.f32 %v1833, 0.5
      %v1882 = vadd.f32 %v1834, 0.5
      %v1883 = vadd.f32 %v1835, 0.5
      %v1884 = vadd.f32 %v1836, 0.5
      %v1885 = vadd.f32 %v1837, 0.5
      %v1886 = vadd.f32 %v1838, 0.5
      %v1887 = vadd.f32 %v1839, 0.5
      %v1888 = vadd.f32 %v1840, 0.5
      %v1889 = vadd.f32 %v1841, 0.5
      %v1890 = vadd.f32 %v1842, 0.5
      %v1891 = vadd.f32 %v1843, 0.5
      %v1892 = vadd.f32 %v1844, 0.5
      %v1893 = vadd.f32 %v1845, 0.5
      %v1894 = vadd.f32 %v1846, 0.5
      %v1895 = vadd.f32 %v1847, 0.5
      %v1896 = vadd.f32 %v1848, 0.5
      %v1897 = vadd.f32 %v1849, 0.5
      %v1898 = vadd.f32 %v1850, 0.5
      %v1899 = vadd.f32 %v1851, 0.5
      %v1900 = vadd.f32 %v1852, 0.5
      %v1901 = vadd.f32 %v1853, 0.5
      %v1902 = vadd.f32 %v1854, 0.5
      %v1903 = vadd.f32 %v1855, 0.5
      %v1904 = vadd.f32 %v1856, 0.5
      %v1905 = vadd.f32 %v1857, 0.5
      %v1906 = vadd.f32 %v1858, 0.5
      %v1907 = vadd.f32 %v1859, 0.5
      %v1908 = vadd.f32 %v1860, 0.5
      %v1909 = vadd.f32 %v1861, 0.5
      %v1910 = vadd.f32 %v1862, 0.5
      %v1911 = vadd.f32 %v1863, 0.5
      %v1912 = vadd.f32 %v1864, 0.5
      %v1913 = vadd.f32 %v1865, 0.5
      %v1914 = vadd.f32 %v1866, 0.5
      %v1915 = vadd.f32 %v1867, 0.5
      %v1916 = vadd.f32 %v1868, 0.5
      %v1917 = vadd.f32 %v1869, 0.5
      %v1918 = vadd.f32 %v1870, 0.5
      %v1919 = vadd.f32 %v1871, 0.5
      %v1920 = vadd.f32 %v1872, 0.5
      %v1921 = vadd.f32 %v1873, 0.5
      %v1922 = vadd.f32 %v1874, 0.5
      %v1923 = vmul.f32 %v1875, 0.041666668
      %v1924 = vmul.f32 %v1876, 0.041666668
      %v1925 = vmul.f32 %v1877, 0.041666668
      %v1926 = vmul.f32 %v1878, 0.041666668
      %v1927 = vmul.f32 %v1879, 0.041666668
      %v1928 = vmul.f32 %v1880, 0.041666668
      %v1929 = vmul.f32 %v1881, 0.041666668
      %v1930 = vmul.f32 %v1882, 0.041666668
      %v1931 = vmul.f32 %v1883, 0.041666668
      %v1932 = vmul.f32 %v1884, 0.041666668
      %v1933 = vmul.f32 %v1885, 0.041666668
      %v1934 = vmul.f32 %v1886, 0.041666668
      %v1935 = vmul.f32 %v1887, 0.041666668
      %v1936 = vmul.f32 %v1888, 0.041666668
      %v1937 = vmul.f32 %v1889, 0.041666668
      %v1938 = vmul.f32 %v1890, 0.041666668
      %v1939 = vmul.f32 %v1891, 0.041666668
      %v1940 = vmul.f32 %v1892, 0.041666668
      %v1941 = vmul.f32 %v1893, 0.041666668
      %v1942 = vmul.f32 %v1894, 0.041666668
      %v1943 = vmul.f32 %v1895, 0.041666668
      %v1944 = vmul.f32 %v1896, 0.041666668
      %v1945 = vmul.f32 %v1897, 0.041666668
      %v1946 = vmul.f32 %v1898, 0.041666668
      %v1947 = vmul.f32 %v1899, 0.041666668
      %v1948 = vmul.f32 %v1900, 0.041666668
      %v1949 = vmul.f32 %v1901, 0.041666668
      %v1950 = vmul.f32 %v1902, 0.041666668
      %v1951 = vmul.f32 %v1903, 0.041666668
      %v1952 = vmul.f32 %v1904, 0.041666668
      %v1953 = vmul.f32 %v1905, 0.041666668
      %v1954 = vmul.f32 %v1906, 0.041666668
      %v1955 = vmul.f32 %v1907, 0.041666668
      %v1956 = vmul.f32 %v1908, 0.041666668
      %v1957 = vmul.f32 %v1909, 0.041666668
      %v1958 = vmul.f32 %v1910, 0.041666668
      %v1959 = vmul.f32 %v1911, 0.041666668
      %v1960 = vmul.f32 %v1912, 0.041666668
      %v1961 = vmul.f32 %v1913, 0.041666668
      %v1962 = vmul.f32 %v1914, 0.041666668
      %v1963 = vmul.f32 %v1915, 0.041666668
      %v1964 = vmul.f32 %v1916, 0.041666668
      %v1965 = vmul.f32 %v1917, 0.041666668
      %v1966 = vmul.f32 %v1918, 0.041666668
      %v1967 = vmul.f32 %v1919, 0.041666668
      %v1968 = vmul.f32 %v1920, 0.041666668
      %v1969 = vmul.f32 %v1921, 0.041666668
      %v1970 = vmul.f32 %v1922, 0.041666668
      %v1971 = vfloor.f32 %v1923
      %v1972 = vfloor.f32 %v1924
      %v1973 = vfloor.f32 %v1925
      %v1974 = vfloor.f32 %v1926
      %v1975 = vfloor.f32 %v1927
      %v1976 = vfloor.f32 %v1928
      %v1977 = vfloor.f32 %v1929
      %v1978 = vfloor.f32 %v1930
      %v1979 = vfloor.f32 %v1931
      %v1980 = vfloor.f32 %v1932
      %v1981 = vfloor.f32 %v1933
      %v1982 = vfloor.f32 %v1934
      %v1983 = vfloor.f32 %v1935
      %v1984 = vfloor.f32 %v1936
      %v1985 = vfloor.f32 %v1937
      %v1986 = vfloor.f32 %v1938
      %v1987 = vfloor.f32 %v1939
      %v1988 = vfloor.f32 %v1940
      %v1989 = vfloor.f32 %v1941
      %v1990 = vfloor.f32 %v1942
      %v1991 = vfloor.f32 %v1943
      %v1992 = vfloor.f32 %v1944
      %v1993 = vfloor.f32 %v1945
      %v1994 = vfloor.f32 %v1946
      %v1995 = vfloor.f32 %v1947
      %v1996 = vfloor.f32 %v1948
      %v1997 = vfloor.f32 %v1949
      %v1998 = vfloor.f32 %v1950
      %v1999 = vfloor.f32 %v1951
      %v2000 = vfloor.f32 %v1952
      %v2001 = vfloor.f32 %v1953
      %v2002 = vfloor.f32 %v1954
      %v2003 = vfloor.f32 %v1955
      %v2004 = vfloor.f32 %v1956
      %v2005 = vfloor.f32 %v1957
      %v2006 = vfloor.f32 %v1958
      %v2007 = vfloor.f32 %v1959
      %v2008 = vfloor.f32 %v1960
      %v2009 = vfloor.f32 %v1961
      %v2010 = vfloor.f32 %v1962
      %v2011 = vfloor.f32 %v1963
      %v2012 = vfloor.f32 %v1964
      %v2013 = vfloor.f32 %v1965
      %v2014 = vfloor.f32 %v1966
      %v2015 = vfloor.f32 %v1967
      %v2016 = vfloor.f32 %v1968
      %v2017 = vfloor.f32 %v1969
      %v2018 = vfloor.f32 %v1970
      %v2019 = vmul.f32 %v1971, 24.0
      %v2020 = vmul.f32 %v1972, 24.0
      %v2021 = vmul.f32 %v1973, 24.0
      %v2022 = vmul.f32 %v1974, 24.0
      %v2023 = vmul.f32 %v1975, 24.0
      %v2024 = vmul.f32 %v1976, 24.0
      %v2025 = vmul.f32 %v1977, 24.0
      %v2026 = vmul.f32 %v1978, 24.0
      %v2027 = vmul.f32 %v1979, 24.0
      %v2028 = vmul.f32 %v1980, 24.0
      %v2029 = vmul.f32 %v1981, 24.0
      %v2030 = vmul.f32 %v1982, 24.0
      %v2031 = vmul.f32 %v1983, 24.0
      %v2032 = vmul.f32 %v1984, 24.0
      %v2033 = vmul.f32 %v1985, 24.0
      %v2034 = vmul.f32 %v1986, 24.0
      %v2035 = vmul.f32 %v1987, 24.0
      %v2036 = vmul.f32 %v1988, 24.0
      %v2037 = vmul.f32 %v1989, 24.0
      %v2038 = vmul.f32 %v1990, 24.0
      %v2039 = vmul.f32 %v1991, 24.0
      %v2040 = vmul.f32 %v1992, 24.0
      %v2041 = vmul.f32 %v1993, 24.0
      %v2042 = vmul.f32 %v1994, 24.0
      %v2043 = vmul.f32 %v1995, 24.0
      %v2044 = vmul.f32 %v1996, 24.0
      %v2045 = vmul.f32 %v1997, 24.0
      %v2046 = vmul.f32 %v1998, 24.0
      %v2047 = vmul.f32 %v1999, 24.0
      %v2048 = vmul.f32 %v2000, 24.0
      %v2049 = vmul.f32 %v2001, 24.0
      %v2050 = vmul.f32 %v2002, 24.0
      %v2051 = vmul.f32 %v2003, 24.0
      %v2052 = vmul.f32 %v2004, 24.0
      %v2053 = vmul.f32 %v2005, 24.0
      %v2054 = vmul.f32 %v2006, 24.0
      %v2055 = vmul.f32 %v2007, 24.0
      %v2056 = vmul.f32 %v2008, 24.0
      %v2057 = vmul.f32 %v2009, 24.0
      %v2058 = vmul.f32 %v2010, 24.0
      %v2059 = vmul.f32 %v2011, 24.0
      %v2060 = vmul.f32 %v2012, 24.0
      %v2061 = vmul.f32 %v2013, 24.0
      %v2062 = vmul.f32 %v2014, 24.0
      %v2063 = vmul.f32 %v2015, 24.0
      %v2064 = vmul.f32 %v2016, 24.0
      %v2065 = vmul.f32 %v2017, 24.0
      %v2066 = vmul.f32 %v2018, 24.0
      %v2067 = vsub.f32 %v1827, %v2019
      %v2068 = vsub.f32 %v1828, %v2020
      %v2069 = vsub.f32 %v1829, %v2021
      %v2070 = vsub.f32 %v1830, %v2022
      %v2071 = vsub.f32 %v1831, %v2023
      %v2072 = vsub.f32 %v1832, %v2024
      %v2073 = vsub.f32 %v1833, %v2025
      %v2074 = vsub.f32 %v1834, %v2026
      %v2075 = vsub.f32 %v1835, %v2027
      %v2076 = vsub.f32 %v1836, %v2028
      %v2077 = vsub.f32 %v1837, %v2029
      %v2078 = vsub.f32 %v1838, %v2030
      %v2079 = vsub.f32 %v1839, %v2031
      %v2080 = vsub.f32 %v1840, %v2032
      %v2081 = vsub.f32 %v1841, %v2033
      %v2082 = vsub.f32 %v1842, %v2034
      %v2083 = vsub.f32 %v1843, %v2035
      %v2084 = vsub.f32 %v1844, %v2036
      %v2085 = vsub.f32 %v1845, %v2037
      %v2086 = vsub.f32 %v1846, %v2038
      %v2087 = vsub.f32 %v1847, %v2039
      %v2088 = vsub.f32 %v1848, %v2040
      %v2089 = vsub.f32 %v1849, %v2041
      %v2090 = vsub.f32 %v1850, %v2042
      %v2091 = vsub.f32 %v1851, %v2043
      %v2092 = vsub.f32 %v1852, %v2044
      %v2093 = vsub.f32 %v1853, %v2045
      %v2094 = vsub.f32 %v1854, %v2046
      %v2095 = vsub.f32 %v1855, %v2047
      %v2096 = vsub.f32 %v1856, %v2048
      %v2097 = vsub.f32 %v1857, %v2049
      %v2098 = vsub.f32 %v1858, %v2050
      %v2099 = vsub.f32 %v1859, %v2051
      %v2100 = vsub.f32 %v1860, %v2052
      %v2101 = vsub.f32 %v1861, %v2053
      %v2102 = vsub.f32 %v1862, %v2054
      %v2103 = vsub.f32 %v1863, %v2055
      %v2104 = vsub.f32 %v1864, %v2056
      %v2105 = vsub.f32 %v1865, %v2057
      %v2106 = vsub.f32 %v1866, %v2058
      %v2107 = vsub.f32 %v1867, %v2059
      %v2108 = vsub.f32 %v1868, %v2060
      %v2109 = vsub.f32 %v1869, %v2061
      %v2110 = vsub.f32 %v1870, %v2062
      %v2111 = vsub.f32 %v1871, %v2063
      %v2112 = vsub.f32 %v1872, %v2064
      %v2113 = vsub.f32 %v1873, %v2065
      %v2114 = vsub.f32 %v1874, %v2066
      %v2115 = vadd.f32 %v1971, 0.5
      %v2116 = vadd.f32 %v1972, 0.5
      %v2117 = vadd.f32 %v1973, 0.5
      %v2118 = vadd.f32 %v1974, 0.5
      %v2119 = vadd.f32 %v1975, 0.5
      %v2120 = vadd.f32 %v1976, 0.5
      %v2121 = vadd.f32 %v1977, 0.5
      %v2122 = vadd.f32 %v1978, 0.5
      %v2123 = vadd.f32 %v1979, 0.5
      %v2124 = vadd.f32 %v1980, 0.5
      %v2125 = vadd.f32 %v1981, 0.5
      %v2126 = vadd.f32 %v1982, 0.5
      %v2127 = vadd.f32 %v1983, 0.5
      %v2128 = vadd.f32 %v1984, 0.5
      %v2129 = vadd.f32 %v1985, 0.5
      %v2130 = vadd.f32 %v1986, 0.5
      %v2131 = vadd.f32 %v1987, 0.5
      %v2132 = vadd.f32 %v1988, 0.5
      %v2133 = vadd.f32 %v1989, 0.5
      %v2134 = vadd.f32 %v1990, 0.5
      %v2135 = vadd.f32 %v1991, 0.5
      %v2136 = vadd.f32 %v1992, 0.5
      %v2137 = vadd.f32 %v1993, 0.5
      %v2138 = vadd.f32 %v1994, 0.5
      %v2139 = vadd.f32 %v1995, 0.5
      %v2140 = vadd.f32 %v1996, 0.5
      %v2141 = vadd.f32 %v1997, 0.5
      %v2142 = vadd.f32 %v1998, 0.5
      %v2143 = vadd.f32 %v1999, 0.5
      %v2144 = vadd.f32 %v2000, 0.5
      %v2145 = vadd.f32 %v2001, 0.5
      %v2146 = vadd.f32 %v2002, 0.5
      %v2147 = vadd.f32 %v2003, 0.5
      %v2148 = vadd.f32 %v2004, 0.5
      %v2149 = vadd.f32 %v2005, 0.5
      %v2150 = vadd.f32 %v2006, 0.5
      %v2151 = vadd.f32 %v2007, 0.5
      %v2152 = vadd.f32 %v2008, 0.5
      %v2153 = vadd.f32 %v2009, 0.5
      %v2154 = vadd.f32 %v2010, 0.5
      %v2155 = vadd.f32 %v2011, 0.5
      %v2156 = vadd.f32 %v2012, 0.5
      %v2157 = vadd.f32 %v2013, 0.5
      %v2158 = vadd.f32 %v2014, 0.5
      %v2159 = vadd.f32 %v2015, 0.5
      %v2160 = vadd.f32 %v2016, 0.5
      %v2161 = vadd.f32 %v2017, 0.5
      %v2162 = vadd.f32 %v2018, 0.5
      %v2163 = vmul.f32 %v2115, 0.05263158
      %v2164 = vmul.f32 %v2116, 0.05263158
      %v2165 = vmul.f32 %v2117, 0.05263158
      %v2166 = vmul.f32 %v2118, 0.05263158
      %v2167 = vmul.f32 %v2119, 0.05263158
      %v2168 = vmul.f32 %v2120, 0.05263158
      %v2169 = vmul.f32 %v2121, 0.05263158
      %v2170 = vmul.f32 %v2122, 0.05263158
      %v2171 = vmul.f32 %v2123, 0.05263158
      %v2172 = vmul.f32 %v2124, 0.05263158
      %v2173 = vmul.f32 %v2125, 0.05263158
      %v2174 = vmul.f32 %v2126, 0.05263158
      %v2175 = vmul.f32 %v2127, 0.05263158
      %v2176 = vmul.f32 %v2128, 0.05263158
      %v2177 = vmul.f32 %v2129, 0.05263158
      %v2178 = vmul.f32 %v2130, 0.05263158
      %v2179 = vmul.f32 %v2131, 0.05263158
      %v2180 = vmul.f32 %v2132, 0.05263158
      %v2181 = vmul.f32 %v2133, 0.05263158
      %v2182 = vmul.f32 %v2134, 0.05263158
      %v2183 = vmul.f32 %v2135, 0.05263158
      %v2184 = vmul.f32 %v2136, 0.05263158
      %v2185 = vmul.f32 %v2137, 0.05263158
      %v2186 = vmul.f32 %v2138, 0.05263158
      %v2187 = vmul.f32 %v2139, 0.05263158
      %v2188 = vmul.f32 %v2140, 0.05263158
      %v2189 = vmul.f32 %v2141, 0.05263158
      %v2190 = vmul.f32 %v2142, 0.05263158
      %v2191 = vmul.f32 %v2143, 0.05263158
      %v2192 = vmul.f32 %v2144, 0.05263158
      %v2193 = vmul.f32 %v2145, 0.05263158
      %v2194 = vmul.f32 %v2146, 0.05263158
      %v2195 = vmul.f32 %v2147, 0.05263158
      %v2196 = vmul.f32 %v2148, 0.05263158
      %v2197 = vmul.f32 %v2149, 0.05263158
      %v2198 = vmul.f32 %v2150, 0.05263158
      %v2199 = vmul.f32 %v2151, 0.05263158
      %v2200 = vmul.f32 %v2152, 0.05263158
      %v2201 = vmul.f32 %v2153, 0.05263158
      %v2202 = vmul.f32 %v2154, 0.05263158
      %v2203 = vmul.f32 %v2155, 0.05263158
      %v2204 = vmul.f32 %v2156, 0.05263158
      %v2205 = vmul.f32 %v2157, 0.05263158
      %v2206 = vmul.f32 %v2158, 0.05263158
      %v2207 = vmul.f32 %v2159, 0.05263158
      %v2208 = vmul.f32 %v2160, 0.05263158
      %v2209 = vmul.f32 %v2161, 0.05263158
      %v2210 = vmul.f32 %v2162, 0.05263158
      %v2211 = vfloor.f32 %v2163
      %v2212 = vfloor.f32 %v2164
      %v2213 = vfloor.f32 %v2165
      %v2214 = vfloor.f32 %v2166
      %v2215 = vfloor.f32 %v2167
      %v2216 = vfloor.f32 %v2168
      %v2217 = vfloor.f32 %v2169
      %v2218 = vfloor.f32 %v2170
      %v2219 = vfloor.f32 %v2171
      %v2220 = vfloor.f32 %v2172
      %v2221 = vfloor.f32 %v2173
      %v2222 = vfloor.f32 %v2174
      %v2223 = vfloor.f32 %v2175
      %v2224 = vfloor.f32 %v2176
      %v2225 = vfloor.f32 %v2177
      %v2226 = vfloor.f32 %v2178
      %v2227 = vfloor.f32 %v2179
      %v2228 = vfloor.f32 %v2180
      %v2229 = vfloor.f32 %v2181
      %v2230 = vfloor.f32 %v2182
      %v2231 = vfloor.f32 %v2183
      %v2232 = vfloor.f32 %v2184
      %v2233 = vfloor.f32 %v2185
      %v2234 = vfloor.f32 %v2186
      %v2235 = vfloor.f32 %v2187
      %v2236 = vfloor.f32 %v2188
      %v2237 = vfloor.f32 %v2189
      %v2238 = vfloor.f32 %v2190
      %v2239 = vfloor.f32 %v2191
      %v2240 = vfloor.f32 %v2192
      %v2241 = vfloor.f32 %v2193
      %v2242 = vfloor.f32 %v2194
      %v2243 = vfloor.f32 %v2195
      %v2244 = vfloor.f32 %v2196
      %v2245 = vfloor.f32 %v2197
      %v2246 = vfloor.f32 %v2198
      %v2247 = vfloor.f32 %v2199
      %v2248 = vfloor.f32 %v2200
      %v2249 = vfloor.f32 %v2201
      %v2250 = vfloor.f32 %v2202
      %v2251 = vfloor.f32 %v2203
      %v2252 = vfloor.f32 %v2204
      %v2253 = vfloor.f32 %v2205
      %v2254 = vfloor.f32 %v2206
      %v2255 = vfloor.f32 %v2207
      %v2256 = vfloor.f32 %v2208
      %v2257 = vfloor.f32 %v2209
      %v2258 = vfloor.f32 %v2210
      %v2259 = vmul.f32 %v2211, 19.0
      %v2260 = vmul.f32 %v2212, 19.0
      %v2261 = vmul.f32 %v2213, 19.0
      %v2262 = vmul.f32 %v2214, 19.0
      %v2263 = vmul.f32 %v2215, 19.0
      %v2264 = vmul.f32 %v2216, 19.0
      %v2265 = vmul.f32 %v2217, 19.0
      %v2266 = vmul.f32 %v2218, 19.0
      %v2267 = vmul.f32 %v2219, 19.0
      %v2268 = vmul.f32 %v2220, 19.0
      %v2269 = vmul.f32 %v2221, 19.0
      %v2270 = vmul.f32 %v2222, 19.0
      %v2271 = vmul.f32 %v2223, 19.0
      %v2272 = vmul.f32 %v2224, 19.0
      %v2273 = vmul.f32 %v2225, 19.0
      %v2274 = vmul.f32 %v2226, 19.0
      %v2275 = vmul.f32 %v2227, 19.0
      %v2276 = vmul.f32 %v2228, 19.0
      %v2277 = vmul.f32 %v2229, 19.0
      %v2278 = vmul.f32 %v2230, 19.0
      %v2279 = vmul.f32 %v2231, 19.0
      %v2280 = vmul.f32 %v2232, 19.0
      %v2281 = vmul.f32 %v2233, 19.0
      %v2282 = vmul.f32 %v2234, 19.0
      %v2283 = vmul.f32 %v2235, 19.0
      %v2284 = vmul.f32 %v2236, 19.0
      %v2285 = vmul.f32 %v2237, 19.0
      %v2286 = vmul.f32 %v2238, 19.0
      %v2287 = vmul.f32 %v2239, 19.0
      %v2288 = vmul.f32 %v2240, 19.0
      %v2289 = vmul.f32 %v2241, 19.0
      %v2290 = vmul.f32 %v2242, 19.0
      %v2291 = vmul.f32 %v2243, 19.0
      %v2292 = vmul.f32 %v2244, 19.0
      %v2293 = vmul.f32 %v2245, 19.0
      %v2294 = vmul.f32 %v2246, 19.0
      %v2295 = vmul.f32 %v2247, 19.0
      %v2296 = vmul.f32 %v2248, 19.0
      %v2297 = vmul.f32 %v2249, 19.0
      %v2298 = vmul.f32 %v2250, 19.0
      %v2299 = vmul.f32 %v2251, 19.0
      %v2300 = vmul.f32 %v2252, 19.0
      %v2301 = vmul.f32 %v2253, 19.0
      %v2302 = vmul.f32 %v2254, 19.0
      %v2303 = vmul.f32 %v2255, 19.0
      %v2304 = vmul.f32 %v2256, 19.0
      %v2305 = vmul.f32 %v2257, 19.0
      %v2306 = vmul.f32 %v2258, 19.0
      %v2307 = vsub.f32 %v1971, %v2259
      %v2308 = vsub.f32 %v1972, %v2260
      %v2309 = vsub.f32 %v1973, %v2261
      %v2310 = vsub.f32 %v1974, %v2262
      %v2311 = vsub.f32 %v1975, %v2263
      %v2312 = vsub.f32 %v1976, %v2264
      %v2313 = vsub.f32 %v1977, %v2265
      %v2314 = vsub.f32 %v1978, %v2266
      %v2315 = vsub.f32 %v1979, %v2267
      %v2316 = vsub.f32 %v1980, %v2268
      %v2317 = vsub.f32 %v1981, %v2269
      %v2318 = vsub.f32 %v1982, %v2270
      %v2319 = vsub.f32 %v1983, %v2271
      %v2320 = vsub.f32 %v1984, %v2272
      %v2321 = vsub.f32 %v1985, %v2273
      %v2322 = vsub.f32 %v1986, %v2274
      %v2323 = vsub.f32 %v1987, %v2275
      %v2324 = vsub.f32 %v1988, %v2276
      %v2325 = vsub.f32 %v1989, %v2277
      %v2326 = vsub.f32 %v1990, %v2278
      %v2327 = vsub.f32 %v1991, %v2279
      %v2328 = vsub.f32 %v1992, %v2280
      %v2329 = vsub.f32 %v1993, %v2281
      %v2330 = vsub.f32 %v1994, %v2282
      %v2331 = vsub.f32 %v1995, %v2283
      %v2332 = vsub.f32 %v1996, %v2284
      %v2333 = vsub.f32 %v1997, %v2285
      %v2334 = vsub.f32 %v1998, %v2286
      %v2335 = vsub.f32 %v1999, %v2287
      %v2336 = vsub.f32 %v2000, %v2288
      %v2337 = vsub.f32 %v2001, %v2289
      %v2338 = vsub.f32 %v2002, %v2290
      %v2339 = vsub.f32 %v2003, %v2291
      %v2340 = vsub.f32 %v2004, %v2292
      %v2341 = vsub.f32 %v2005, %v2293
      %v2342 = vsub.f32 %v2006, %v2294
      %v2343 = vsub.f32 %v2007, %v2295
      %v2344 = vsub.f32 %v2008, %v2296
      %v2345 = vsub.f32 %v2009, %v2297
      %v2346 = vsub.f32 %v2010, %v2298
      %v2347 = vsub.f32 %v2011, %v2299
      %v2348 = vsub.f32 %v2012, %v2300
      %v2349 = vsub.f32 %v2013, %v2301
      %v2350 = vsub.f32 %v2014, %v2302
      %v2351 = vsub.f32 %v2015, %v2303
      %v2352 = vsub.f32 %v2016, %v2304
      %v2353 = vsub.f32 %v2017, %v2305
      %v2354 = vsub.f32 %v2018, %v2306
      %vm2355 = vcmp.lt.f32.partialorder %v2067, 16.0
      %vm2356 = vcmp.lt.f32.partialorder %v2068, 16.0
      %vm2357 = vcmp.lt.f32.partialorder %v2069, 16.0
      %vm2358 = vcmp.lt.f32.partialorder %v2070, 16.0
      %vm2359 = vcmp.lt.f32.partialorder %v2071, 16.0
      %vm2360 = vcmp.lt.f32.partialorder %v2072, 16.0
      %vm2361 = vcmp.lt.f32.partialorder %v2073, 16.0
      %vm2362 = vcmp.lt.f32.partialorder %v2074, 16.0
      %vm2363 = vcmp.lt.f32.partialorder %v2075, 16.0
      %vm2364 = vcmp.lt.f32.partialorder %v2076, 16.0
      %vm2365 = vcmp.lt.f32.partialorder %v2077, 16.0
      %vm2366 = vcmp.lt.f32.partialorder %v2078, 16.0
      %vm2367 = vcmp.lt.f32.partialorder %v2079, 16.0
      %vm2368 = vcmp.lt.f32.partialorder %v2080, 16.0
      %vm2369 = vcmp.lt.f32.partialorder %v2081, 16.0
      %vm2370 = vcmp.lt.f32.partialorder %v2082, 16.0
      %vm2371 = vcmp.lt.f32.partialorder %v2083, 16.0
      %vm2372 = vcmp.lt.f32.partialorder %v2084, 16.0
      %vm2373 = vcmp.lt.f32.partialorder %v2085, 16.0
      %vm2374 = vcmp.lt.f32.partialorder %v2086, 16.0
      %vm2375 = vcmp.lt.f32.partialorder %v2087, 16.0
      %vm2376 = vcmp.lt.f32.partialorder %v2088, 16.0
      %vm2377 = vcmp.lt.f32.partialorder %v2089, 16.0
      %vm2378 = vcmp.lt.f32.partialorder %v2090, 16.0
      %vm2379 = vcmp.lt.f32.partialorder %v2091, 16.0
      %vm2380 = vcmp.lt.f32.partialorder %v2092, 16.0
      %vm2381 = vcmp.lt.f32.partialorder %v2093, 16.0
      %vm2382 = vcmp.lt.f32.partialorder %v2094, 16.0
      %vm2383 = vcmp.lt.f32.partialorder %v2095, 16.0
      %vm2384 = vcmp.lt.f32.partialorder %v2096, 16.0
      %vm2385 = vcmp.lt.f32.partialorder %v2097, 16.0
      %vm2386 = vcmp.lt.f32.partialorder %v2098, 16.0
      %vm2387 = vcmp.lt.f32.partialorder %v2099, 16.0
      %vm2388 = vcmp.lt.f32.partialorder %v2100, 16.0
      %vm2389 = vcmp.lt.f32.partialorder %v2101, 16.0
      %vm2390 = vcmp.lt.f32.partialorder %v2102, 16.0
      %vm2391 = vcmp.lt.f32.partialorder %v2103, 16.0
      %vm2392 = vcmp.lt.f32.partialorder %v2104, 16.0
      %vm2393 = vcmp.lt.f32.partialorder %v2105, 16.0
      %vm2394 = vcmp.lt.f32.partialorder %v2106, 16.0
      %vm2395 = vcmp.lt.f32.partialorder %v2107, 16.0
      %vm2396 = vcmp.lt.f32.partialorder %v2108, 16.0
      %vm2397 = vcmp.lt.f32.partialorder %v2109, 16.0
      %vm2398 = vcmp.lt.f32.partialorder %v2110, 16.0
      %vm2399 = vcmp.lt.f32.partialorder %v2111, 16.0
      %vm2400 = vcmp.lt.f32.partialorder %v2112, 16.0
      %vm2401 = vcmp.lt.f32.partialorder %v2113, 16.0
      %vm2402 = vcmp.lt.f32.partialorder %v2114, 16.0
      %vm2403 = vcmp.lt.f32.partialorder %v2307, 16.0
      %vm2404 = vcmp.lt.f32.partialorder %v2308, 16.0
      %vm2405 = vcmp.lt.f32.partialorder %v2309, 16.0
      %vm2406 = vcmp.lt.f32.partialorder %v2310, 16.0
      %vm2407 = vcmp.lt.f32.partialorder %v2311, 16.0
      %vm2408 = vcmp.lt.f32.partialorder %v2312, 16.0
      %vm2409 = vcmp.lt.f32.partialorder %v2313, 16.0
      %vm2410 = vcmp.lt.f32.partialorder %v2314, 16.0
      %vm2411 = vcmp.lt.f32.partialorder %v2315, 16.0
      %vm2412 = vcmp.lt.f32.partialorder %v2316, 16.0
      %vm2413 = vcmp.lt.f32.partialorder %v2317, 16.0
      %vm2414 = vcmp.lt.f32.partialorder %v2318, 16.0
      %vm2415 = vcmp.lt.f32.partialorder %v2319, 16.0
      %vm2416 = vcmp.lt.f32.partialorder %v2320, 16.0
      %vm2417 = vcmp.lt.f32.partialorder %v2321, 16.0
      %vm2418 = vcmp.lt.f32.partialorder %v2322, 16.0
      %vm2419 = vcmp.lt.f32.partialorder %v2323, 16.0
      %vm2420 = vcmp.lt.f32.partialorder %v2324, 16.0
      %vm2421 = vcmp.lt.f32.partialorder %v2325, 16.0
      %vm2422 = vcmp.lt.f32.partialorder %v2326, 16.0
      %vm2423 = vcmp.lt.f32.partialorder %v2327, 16.0
      %vm2424 = vcmp.lt.f32.partialorder %v2328, 16.0
      %vm2425 = vcmp.lt.f32.partialorder %v2329, 16.0
      %vm2426 = vcmp.lt.f32.partialorder %v2330, 16.0
      %vm2427 = vcmp.lt.f32.partialorder %v2331, 16.0
      %vm2428 = vcmp.lt.f32.partialorder %v2332, 16.0
      %vm2429 = vcmp.lt.f32.partialorder %v2333, 16.0
      %vm2430 = vcmp.lt.f32.partialorder %v2334, 16.0
      %vm2431 = vcmp.lt.f32.partialorder %v2335, 16.0
      %vm2432 = vcmp.lt.f32.partialorder %v2336, 16.0
      %vm2433 = vcmp.lt.f32.partialorder %v2337, 16.0
      %vm2434 = vcmp.lt.f32.partialorder %v2338, 16.0
      %vm2435 = vcmp.lt.f32.partialorder %v2339, 16.0
      %vm2436 = vcmp.lt.f32.partialorder %v2340, 16.0
      %vm2437 = vcmp.lt.f32.partialorder %v2341, 16.0
      %vm2438 = vcmp.lt.f32.partialorder %v2342, 16.0
      %vm2439 = vcmp.lt.f32.partialorder %v2343, 16.0
      %vm2440 = vcmp.lt.f32.partialorder %v2344, 16.0
      %vm2441 = vcmp.lt.f32.partialorder %v2345, 16.0
      %vm2442 = vcmp.lt.f32.partialorder %v2346, 16.0
      %vm2443 = vcmp.lt.f32.partialorder %v2347, 16.0
      %vm2444 = vcmp.lt.f32.partialorder %v2348, 16.0
      %vm2445 = vcmp.lt.f32.partialorder %v2349, 16.0
      %vm2446 = vcmp.lt.f32.partialorder %v2350, 16.0
      %vm2447 = vcmp.lt.f32.partialorder %v2351, 16.0
      %vm2448 = vcmp.lt.f32.partialorder %v2352, 16.0
      %vm2449 = vcmp.lt.f32.partialorder %v2353, 16.0
      %vm2450 = vcmp.lt.f32.partialorder %v2354, 16.0
      %vm2451 = vmand %vm2355, %vm2403
      %vm2452 = vmand %vm2356, %vm2404
      %vm2453 = vmand %vm2357, %vm2405
      %vm2454 = vmand %vm2358, %vm2406
      %vm2455 = vmand %vm2359, %vm2407
      %vm2456 = vmand %vm2360, %vm2408
      %vm2457 = vmand %vm2361, %vm2409
      %vm2458 = vmand %vm2362, %vm2410
      %vm2459 = vmand %vm2363, %vm2411
      %vm2460 = vmand %vm2364, %vm2412
      %vm2461 = vmand %vm2365, %vm2413
      %vm2462 = vmand %vm2366, %vm2414
      %vm2463 = vmand %vm2367, %vm2415
      %vm2464 = vmand %vm2368, %vm2416
      %vm2465 = vmand %vm2369, %vm2417
      %vm2466 = vmand %vm2370, %vm2418
      %vm2467 = vmand %vm2371, %vm2419
      %vm2468 = vmand %vm2372, %vm2420
      %vm2469 = vmand %vm2373, %vm2421
      %vm2470 = vmand %vm2374, %vm2422
      %vm2471 = vmand %vm2375, %vm2423
      %vm2472 = vmand %vm2376, %vm2424
      %vm2473 = vmand %vm2377, %vm2425
      %vm2474 = vmand %vm2378, %vm2426
      %vm2475 = vmand %vm2379, %vm2427
      %vm2476 = vmand %vm2380, %vm2428
      %vm2477 = vmand %vm2381, %vm2429
      %vm2478 = vmand %vm2382, %vm2430
      %vm2479 = vmand %vm2383, %vm2431
      %vm2480 = vmand %vm2384, %vm2432
      %vm2481 = vmand %vm2385, %vm2433
      %vm2482 = vmand %vm2386, %vm2434
      %vm2483 = vmand %vm2387, %vm2435
      %vm2484 = vmand %vm2388, %vm2436
      %vm2485 = vmand %vm2389, %vm2437
      %vm2486 = vmand %vm2390, %vm2438
      %vm2487 = vmand %vm2391, %vm2439
      %vm2488 = vmand %vm2392, %vm2440
      %vm2489 = vmand %vm2393, %vm2441
      %vm2490 = vmand %vm2394, %vm2442
      %vm2491 = vmand %vm2395, %vm2443
      %vm2492 = vmand %vm2396, %vm2444
      %vm2493 = vmand %vm2397, %vm2445
      %vm2494 = vmand %vm2398, %vm2446
      %vm2495 = vmand %vm2399, %vm2447
      %vm2496 = vmand %vm2400, %vm2448
      %vm2497 = vmand %vm2401, %vm2449
      %vm2498 = vmand %vm2402, %vm2450
      %v2499 = vld [vmem:[%s2] sm:$0x1]
      %v2501 = vlaneseq
      %v2502 = vshrl.u32 %v2501, 7
      %v2503 = vsub.s32 0, %v2502
      %v2504 = vrot.slane %v2499, %v2503
      %v2511 = vunpack.c.l.b16 %v1773
      %v2512 = vunpack.c.l.b16 %v1774
      %v2513 = vunpack.c.l.b16 %v1775
      %v2514 = vunpack.c.l.b16 %v1776
      %v2515 = vunpack.c.l.b16 %v1777
      %v2516 = vpack.c.b16 %v2512, %v2511
      %v2517 = vpack.c.b16 %v2514, %v2513
      %v2518 = vpack.c.b16 %v2515, %v2515
      %vm2521 = vcmask 293888
      %v2522 = vsel %vm2521, %v1726, 0
      %v2524 = vsel %vm2521, %v1728, 0
      %v2526 = vsel %vm2521, %v1730, 0
      %v2528 = vsel %vm2521, %v1732, 0
      %v2530 = vsel %vm2521, %v1734, 0
      %v2532 = vsel %vm2521, %v1736, 0
      %v2534 = vsel %vm2521, %v1738, 0
      %v2536 = vsel %vm2521, %v1740, 0
      %v2538 = vsel %vm2521, %v1742, 0
      %v2540 = vsel %vm2521, %v1744, 0
      %v2542 = vsel %vm2521, %v1746, 0
      %v2544 = vsel %vm2521, %v1748, 0
      %v2546 = vsel %vm2521, %v1750, 0
      %v2548 = vsel %vm2521, %v1752, 0
      %v2550 = vsel %vm2521, %v1754, 0
      %v2552 = vsel %vm2521, %v1756, 0
      %v2554 = vsel %vm2521, %v1758, 0
      %v2556 = vsel %vm2521, %v1760, 0
      %v2558 = vsel %vm2521, %v1762, 0
      %v2560 = vsel %vm2521, %v1764, 0
      %v2562 = vsel %vm2521, %v1766, 0
      %v2564 = vsel %vm2521, %v1768, 0
      %v2566 = vsel %vm2521, %v1770, 0
      %v2568 = vsel %vm2521, %v1772, 0
      %vm2570 = vcmask 1041408
      %v2572 = vsel %vm2570, %v2518, 0
      %2574 = vmatprep.subr.bf16.mxu0 0
      %2575 = vmatpush1.bf16.msra.mxu0 %v2516
      %2576 = vmatprep.subr.bf16.mxu0 0
      %2577 = vmatpush1.bf16.msra.mxu0 %v2517
      %2578 = vmatprep.subr.bf16.mxu0 0
      %2579 = vmatpush1.bf16.msra.mxu0 %v2572
      %2580 = vmatprep.subr.bf16.mxu0 0
      %2581 = vmatpush1.bf16.msra.mxu0 0
      %2582 = vmatprep.subr.bf16.mxu0 0
      %2583 = vmatpush1.bf16.msra.mxu0 0
      %2584 = vmatprep.subr.bf16.mxu0 0
      %2585 = vmatpush1.bf16.msra.mxu0 0
      %2586 = vmatprep.subr.bf16.mxu0 0
      %2587 = vmatpush1.bf16.msra.mxu0 0
      %2588 = vmatprep.subr.bf16.mxu0 0
      %2589 = vmatpush1.bf16.msra.mxu0 0
      %2590 = vmatprep.subr.bf16.mxu0 0
      %2591 = vmatpush1.bf16.msra.mxu0 0
      %2592 = vmatprep.subr.bf16.mxu0 0
      %2593 = vmatpush1.bf16.msra.mxu0 0
      %2594 = vmatprep.subr.bf16.mxu0 0
      %2595 = vmatpush1.bf16.msra.mxu0 0
      %2596 = vmatprep.subr.bf16.mxu0 0
      %2597 = vmatpush1.bf16.msra.mxu0 0
      %2598 = vmatprep.subr.bf16.mxu0 0
      %2599 = vmatpush1.bf16.msra.mxu0 0
      %2600 = vmatprep.subr.bf16.mxu0 0
      %2601 = vmatpush1.bf16.msra.mxu0 0
      %2602 = vmatprep.subr.bf16.mxu0 0
      %2603 = vmatpush1.bf16.msra.mxu0 0
      %2604 = vmatprep.subr.bf16.mxu0 0
      %2605 = vmatpush1.bf16.msra.mxu0 0
      %2606 = vmatprep.mubr.bf16.mxu0 0
      %2607 = vmatmul.mubr.bf16.gmra.mrb[0].mxu0 %v2522
      %v2608 = vpop.f32.mrb[0].mxu0
      %v2609 = vadd.f32 %v2504, %v2608
      %v2610 = vpop.f32.mrb[0].mxu0
      %v2611 = vpop.f32.mrb[0].mxu0
      %v2612 = vadd.f32 %v2504, %v2611
      %v2613 = vpop.f32.mrb[0].mxu0
      %2614 = vmatprep.mubr.bf16.mxu0 0
      %2615 = vmatmul.mubr.bf16.gmra.mrb[0].mxu0 %v2524
      %v2616 = vpop.f32.mrb[0].mxu0
      %v2617 = vadd.f32 %v2504, %v2616
      %v2618 = vpop.f32.mrb[0].mxu0
      %v2619 = vpop.f32.mrb[0].mxu0
      %v2620 = vadd.f32 %v2504, %v2619
      %v2621 = vpop.f32.mrb[0].mxu0
      %2622 = vmatprep.mubr.bf16.mxu0 0
      %2623 = vmatmul.mubr.bf16.gmra.mrb[0].mxu0 %v2526
      %v2624 = vpop.f32.mrb[0].mxu0
      %v2625 = vadd.f32 %v2504, %v2624
      %v2626 = vpop.f32.mrb[0].mxu0
      %v2627 = vpop.f32.mrb[0].mxu0
      %v2628 = vadd.f32 %v2504, %v2627
      %v2629 = vpop.f32.mrb[0].mxu0
      %2630 = vmatprep.mubr.bf16.mxu0 0
      %2631 = vmatmul.mubr.bf16.gmra.mrb[0].mxu0 %v2528
      %v2632 = vpop.f32.mrb[0].mxu0
      %v2633 = vadd.f32 %v2504, %v2632
      %v2634 = vpop.f32.mrb[0].mxu0
      %v2635 = vpop.f32.mrb[0].mxu0
      %v2636 = vadd.f32 %v2504, %v2635
      %v2637 = vpop.f32.mrb[0].mxu0
      %2638 = vmatprep.mubr.bf16.mxu0 0
      %2639 = vmatmul.mubr.bf16.gmra.mrb[0].mxu0 %v2530
      %v2640 = vpop.f32.mrb[0].mxu0
      %v2641 = vadd.f32 %v2504, %v2640
      %v2642 = vpop.f32.mrb[0].mxu0
      %v2643 = vpop.f32.mrb[0].mxu0
      %v2644 = vadd.f32 %v2504, %v2643
      %v2645 = vpop.f32.mrb[0].mxu0
      %2646 = vmatprep.mubr.bf16.mxu0 0
      %2647 = vmatmul.mubr.bf16.gmra.mrb[0].mxu0 %v2532
      %v2648 = vpop.f32.mrb[0].mxu0
      %v2649 = vadd.f32 %v2504, %v2648
      %v2650 = vpop.f32.mrb[0].mxu0
      %v2651 = vpop.f32.mrb[0].mxu0
      %v2652 = vadd.f32 %v2504, %v2651
      %v2653 = vpop.f32.mrb[0].mxu0
      %2654 = vmatprep.mubr.bf16.mxu0 0
      %2655 = vmatmul.mubr.bf16.gmra.mrb[0].mxu0 %v2534
      %v2656 = vpop.f32.mrb[0].mxu0
      %v2657 = vadd.f32 %v2504, %v2656
      %v2658 = vpop.f32.mrb[0].mxu0
      %v2659 = vpop.f32.mrb[0].mxu0
      %v2660 = vadd.f32 %v2504, %v2659
      %v2661 = vpop.f32.mrb[0].mxu0
      %2662 = vmatprep.mubr.bf16.mxu0 0
      %2663 = vmatmul.mubr.bf16.gmra.mrb[0].mxu0 %v2536
      %v2664 = vpop.f32.mrb[0].mxu0
      %v2665 = vadd.f32 %v2504, %v2664
      %v2666 = vpop.f32.mrb[0].mxu0
      %v2667 = vpop.f32.mrb[0].mxu0
      %v2668 = vadd.f32 %v2504, %v2667
      %v2669 = vpop.f32.mrb[0].mxu0
      %2670 = vmatprep.mubr.bf16.mxu0 0
      %2671 = vmatmul.mubr.bf16.gmra.mrb[0].mxu0 %v2538
      %v2672 = vpop.f32.mrb[0].mxu0
      %v2673 = vadd.f32 %v2504, %v2672
      %v2674 = vpop.f32.mrb[0].mxu0
      %v2675 = vpop.f32.mrb[0].mxu0
      %v2676 = vadd.f32 %v2504, %v2675
      %v2677 = vpop.f32.mrb[0].mxu0
      %2678 = vmatprep.mubr.bf16.mxu0 0
      %2679 = vmatmul.mubr.bf16.gmra.mrb[0].mxu0 %v2540
      %v2680 = vpop.f32.mrb[0].mxu0
      %v2681 = vadd.f32 %v2504, %v2680
      %v2682 = vpop.f32.mrb[0].mxu0
      %v2683 = vpop.f32.mrb[0].mxu0
      %v2684 = vadd.f32 %v2504, %v2683
      %v2685 = vpop.f32.mrb[0].mxu0
      %2686 = vmatprep.mubr.bf16.mxu0 0
      %2687 = vmatmul.mubr.bf16.gmra.mrb[0].mxu0 %v2542
      %v2688 = vpop.f32.mrb[0].mxu0
      %v2689 = vadd.f32 %v2504, %v2688
      %v2690 = vpop.f32.mrb[0].mxu0
      %v2691 = vpop.f32.mrb[0].mxu0
      %v2692 = vadd.f32 %v2504, %v2691
      %v2693 = vpop.f32.mrb[0].mxu0
      %2694 = vmatprep.mubr.bf16.mxu0 0
      %2695 = vmatmul.mubr.bf16.gmra.mrb[0].mxu0 %v2544
      %v2696 = vpop.f32.mrb[0].mxu0
      %v2697 = vadd.f32 %v2504, %v2696
      %v2698 = vpop.f32.mrb[0].mxu0
      %v2699 = vpop.f32.mrb[0].mxu0
      %v2700 = vadd.f32 %v2504, %v2699
      %v2701 = vpop.f32.mrb[0].mxu0
      %2702 = vmatprep.mubr.bf16.mxu0 0
      %2703 = vmatmul.mubr.bf16.gmra.mrb[0].mxu0 %v2546
      %v2704 = vpop.f32.mrb[0].mxu0
      %v2705 = vadd.f32 %v2504, %v2704
      %v2706 = vpop.f32.mrb[0].mxu0
      %v2707 = vpop.f32.mrb[0].mxu0
      %v2708 = vadd.f32 %v2504, %v2707
      %v2709 = vpop.f32.mrb[0].mxu0
      %2710 = vmatprep.mubr.bf16.mxu0 0
      %2711 = vmatmul.mubr.bf16.gmra.mrb[0].mxu0 %v2548
      %v2712 = vpop.f32.mrb[0].mxu0
      %v2713 = vadd.f32 %v2504, %v2712
      %v2714 = vpop.f32.mrb[0].mxu0
      %v2715 = vpop.f32.mrb[0].mxu0
      %v2716 = vadd.f32 %v2504, %v2715
      %v2717 = vpop.f32.mrb[0].mxu0
      %2718 = vmatprep.mubr.bf16.mxu0 0
      %2719 = vmatmul.mubr.bf16.gmra.mrb[0].mxu0 %v2550
      %v2720 = vpop.f32.mrb[0].mxu0
      %v2721 = vadd.f32 %v2504, %v2720
      %v2722 = vpop.f32.mrb[0].mxu0
      %v2723 = vpop.f32.mrb[0].mxu0
      %v2724 = vadd.f32 %v2504, %v2723
      %v2725 = vpop.f32.mrb[0].mxu0
      %2726 = vmatprep.mubr.bf16.mxu0 0
      %2727 = vmatmul.mubr.bf16.gmra.mrb[0].mxu0 %v2552
      %v2728 = vpop.f32.mrb[0].mxu0
      %v2729 = vadd.f32 %v2504, %v2728
      %v2730 = vpop.f32.mrb[0].mxu0
      %v2731 = vpop.f32.mrb[0].mxu0
      %v2732 = vadd.f32 %v2504, %v2731
      %v2733 = vpop.f32.mrb[0].mxu0
      %2734 = vmatprep.mubr.bf16.mxu0 0
      %2735 = vmatmul.mubr.bf16.gmra.mrb[0].mxu0 %v2554
      %v2736 = vpop.f32.mrb[0].mxu0
      %v2737 = vadd.f32 %v2504, %v2736
      %v2738 = vpop.f32.mrb[0].mxu0
      %v2739 = vpop.f32.mrb[0].mxu0
      %v2740 = vadd.f32 %v2504, %v2739
      %v2741 = vpop.f32.mrb[0].mxu0
      %2742 = vmatprep.mubr.bf16.mxu0 0
      %2743 = vmatmul.mubr.bf16.gmra.mrb[0].mxu0 %v2556
      %v2744 = vpop.f32.mrb[0].mxu0
      %v2745 = vadd.f32 %v2504, %v2744
      %v2746 = vpop.f32.mrb[0].mxu0
      %v2747 = vpop.f32.mrb[0].mxu0
      %v2748 = vadd.f32 %v2504, %v2747
      %v2749 = vpop.f32.mrb[0].mxu0
      %2750 = vmatprep.mubr.bf16.mxu0 0
      %2751 = vmatmul.mubr.bf16.gmra.mrb[0].mxu0 %v2558
      %v2752 = vpop.f32.mrb[0].mxu0
      %v2753 = vadd.f32 %v2504, %v2752
      %v2754 = vpop.f32.mrb[0].mxu0
      %v2755 = vpop.f32.mrb[0].mxu0
      %v2756 = vadd.f32 %v2504, %v2755
      %v2757 = vpop.f32.mrb[0].mxu0
      %2758 = vmatprep.mubr.bf16.mxu0 0
      %2759 = vmatmul.mubr.bf16.gmra.mrb[0].mxu0 %v2560
      %v2760 = vpop.f32.mrb[0].mxu0
      %v2761 = vadd.f32 %v2504, %v2760
      %v2762 = vpop.f32.mrb[0].mxu0
      %v2763 = vpop.f32.mrb[0].mxu0
      %v2764 = vadd.f32 %v2504, %v2763
      %v2765 = vpop.f32.mrb[0].mxu0
      %2766 = vmatprep.mubr.bf16.mxu0 0
      %2767 = vmatmul.mubr.bf16.gmra.mrb[0].mxu0 %v2562
      %v2768 = vpop.f32.mrb[0].mxu0
      %v2769 = vadd.f32 %v2504, %v2768
      %v2770 = vpop.f32.mrb[0].mxu0
      %v2771 = vpop.f32.mrb[0].mxu0
      %v2772 = vadd.f32 %v2504, %v2771
      %v2773 = vpop.f32.mrb[0].mxu0
      %2774 = vmatprep.mubr.bf16.mxu0 0
      %2775 = vmatmul.mubr.bf16.gmra.mrb[0].mxu0 %v2564
      %v2776 = vpop.f32.mrb[0].mxu0
      %v2777 = vadd.f32 %v2504, %v2776
      %v2778 = vpop.f32.mrb[0].mxu0
      %v2779 = vpop.f32.mrb[0].mxu0
      %v2780 = vadd.f32 %v2504, %v2779
      %v2781 = vpop.f32.mrb[0].mxu0
      %2782 = vmatprep.mubr.bf16.mxu0 0
      %2783 = vmatmul.mubr.bf16.gmra.mrb[0].mxu0 %v2566
      %v2784 = vpop.f32.mrb[0].mxu0
      %v2785 = vadd.f32 %v2504, %v2784
      %v2786 = vpop.f32.mrb[0].mxu0
      %v2787 = vpop.f32.mrb[0].mxu0
      %v2788 = vadd.f32 %v2504, %v2787
      %v2789 = vpop.f32.mrb[0].mxu0
      %2790 = vmatprep.mubr.bf16.mxu0 0
      %2791 = vmatmul.mubr.bf16.gmra.mrb[0].mxu0 %v2568
      %v2792 = vpop.f32.mrb[0].mxu0
      %v2793 = vadd.f32 %v2504, %v2792
      %v2794 = vpop.f32.mrb[0].mxu0
      %v2795 = vpop.f32.mrb[0].mxu0
      %v2796 = vadd.f32 %v2504, %v2795
      %v2797 = vpop.f32.mrb[0].mxu0
      %2798 = vdwg.mxu0
      %v2799 = vmax.f32 %v2609, 0.0
      %v2800 = vmax.f32 %v2612, 0.0
      %v2801 = vmax.f32 %v2617, 0.0
      %v2802 = vmax.f32 %v2620, 0.0
      %v2803 = vmax.f32 %v2625, 0.0
      %v2804 = vmax.f32 %v2628, 0.0
      %v2805 = vmax.f32 %v2633, 0.0
      %v2806 = vmax.f32 %v2636, 0.0
      %v2807 = vmax.f32 %v2641, 0.0
      %v2808 = vmax.f32 %v2644, 0.0
      %v2809 = vmax.f32 %v2649, 0.0
      %v2810 = vmax.f32 %v2652, 0.0
      %v2811 = vmax.f32 %v2657, 0.0
      %v2812 = vmax.f32 %v2660, 0.0
      %v2813 = vmax.f32 %v2665, 0.0
      %v2814 = vmax.f32 %v2668, 0.0
      %v2815 = vmax.f32 %v2673, 0.0
      %v2816 = vmax.f32 %v2676, 0.0
      %v2817 = vmax.f32 %v2681, 0.0
      %v2818 = vmax.f32 %v2684, 0.0
      %v2819 = vmax.f32 %v2689, 0.0
      %v2820 = vmax.f32 %v2692, 0.0
      %v2821 = vmax.f32 %v2697, 0.0
      %v2822 = vmax.f32 %v2700, 0.0
      %v2823 = vmax.f32 %v2705, 0.0
      %v2824 = vmax.f32 %v2708, 0.0
      %v2825 = vmax.f32 %v2713, 0.0
      %v2826 = vmax.f32 %v2716, 0.0
      %v2827 = vmax.f32 %v2721, 0.0
      %v2828 = vmax.f32 %v2724, 0.0
      %v2829 = vmax.f32 %v2729, 0.0
      %v2830 = vmax.f32 %v2732, 0.0
      %v2831 = vmax.f32 %v2737, 0.0
      %v2832 = vmax.f32 %v2740, 0.0
      %v2833 = vmax.f32 %v2745, 0.0
      %v2834 = vmax.f32 %v2748, 0.0
      %v2835 = vmax.f32 %v2753, 0.0
      %v2836 = vmax.f32 %v2756, 0.0
      %v2837 = vmax.f32 %v2761, 0.0
      %v2838 = vmax.f32 %v2764, 0.0
      %v2839 = vmax.f32 %v2769, 0.0
      %v2840 = vmax.f32 %v2772, 0.0
      %v2841 = vmax.f32 %v2777, 0.0
      %v2842 = vmax.f32 %v2780, 0.0
      %v2843 = vmax.f32 %v2785, 0.0
      %v2844 = vmax.f32 %v2788, 0.0
      %v2845 = vmax.f32 %v2793, 0.0
      %v2846 = vmax.f32 %v2796, 0.0
      %v2847 = vsel %vm2451, 1, 0
      %v2848 = vsel %vm2452, 1, 0
      %v2849 = vsel %vm2453, 1, 0
      %v2850 = vsel %vm2454, 1, 0
      %v2851 = vsel %vm2455, 1, 0
      %v2852 = vsel %vm2456, 1, 0
      %v2853 = vsel %vm2457, 1, 0
      %v2854 = vsel %vm2458, 1, 0
      %v2855 = vsel %vm2459, 1, 0
      %v2856 = vsel %vm2460, 1, 0
      %v2857 = vsel %vm2461, 1, 0
      %v2858 = vsel %vm2462, 1, 0
      %v2859 = vsel %vm2463, 1, 0
      %v2860 = vsel %vm2464, 1, 0
      %v2861 = vsel %vm2465, 1, 0
      %v2862 = vsel %vm2466, 1, 0
      %v2863 = vsel %vm2467, 1, 0
      %v2864 = vsel %vm2468, 1, 0
      %v2865 = vsel %vm2469, 1, 0
      %v2866 = vsel %vm2470, 1, 0
      %v2867 = vsel %vm2471, 1, 0
      %v2868 = vsel %vm2472, 1, 0
      %v2869 = vsel %vm2473, 1, 0
      %v2870 = vsel %vm2474, 1, 0
      %v2871 = vsel %vm2475, 1, 0
      %v2872 = vsel %vm2476, 1, 0
      %v2873 = vsel %vm2477, 1, 0
      %v2874 = vsel %vm2478, 1, 0
      %v2875 = vsel %vm2479, 1, 0
      %v2876 = vsel %vm2480, 1, 0
      %v2877 = vsel %vm2481, 1, 0
      %v2878 = vsel %vm2482, 1, 0
      %v2879 = vsel %vm2483, 1, 0
      %v2880 = vsel %vm2484, 1, 0
      %v2881 = vsel %vm2485, 1, 0
      %v2882 = vsel %vm2486, 1, 0
      %v2883 = vsel %vm2487, 1, 0
      %v2884 = vsel %vm2488, 1, 0
      %v2885 = vsel %vm2489, 1, 0
      %v2886 = vsel %vm2490, 1, 0
      %v2887 = vsel %vm2491, 1, 0
      %v2888 = vsel %vm2492, 1, 0
      %v2889 = vsel %vm2493, 1, 0
      %v2890 = vsel %vm2494, 1, 0
      %v2891 = vsel %vm2495, 1, 0
      %v2892 = vsel %vm2496, 1, 0
      %v2893 = vsel %vm2497, 1, 0
      %v2894 = vsel %vm2498, 1, 0
      %vm2895 = vcmp.eq.s32.totalorder %v2847, 1
      %vm2896 = vcmp.eq.s32.totalorder %v2848, 1
      %vm2897 = vcmp.eq.s32.totalorder %v2849, 1
      %vm2898 = vcmp.eq.s32.totalorder %v2850, 1
      %vm2899 = vcmp.eq.s32.totalorder %v2851, 1
      %vm2900 = vcmp.eq.s32.totalorder %v2852, 1
      %vm2901 = vcmp.eq.s32.totalorder %v2853, 1
      %vm2902 = vcmp.eq.s32.totalorder %v2854, 1
      %vm2903 = vcmp.eq.s32.totalorder %v2855, 1
      %vm2904 = vcmp.eq.s32.totalorder %v2856, 1
      %vm2905 = vcmp.eq.s32.totalorder %v2857, 1
      %vm2906 = vcmp.eq.s32.totalorder %v2858, 1
      %vm2907 = vcmp.eq.s32.totalorder %v2859, 1
      %vm2908 = vcmp.eq.s32.totalorder %v2860, 1
      %vm2909 = vcmp.eq.s32.totalorder %v2861, 1
      %vm2910 = vcmp.eq.s32.totalorder %v2862, 1
      %vm2911 = vcmp.eq.s32.totalorder %v2863, 1
      %vm2912 = vcmp.eq.s32.totalorder %v2864, 1
      %vm2913 = vcmp.eq.s32.totalorder %v2865, 1
      %vm2914 = vcmp.eq.s32.totalorder %v2866, 1
      %vm2915 = vcmp.eq.s32.totalorder %v2867, 1
      %vm2916 = vcmp.eq.s32.totalorder %v2868, 1
      %vm2917 = vcmp.eq.s32.totalorder %v2869, 1
      %vm2918 = vcmp.eq.s32.totalorder %v2870, 1
      %vm2919 = vcmp.eq.s32.totalorder %v2871, 1
      %vm2920 = vcmp.eq.s32.totalorder %v2872, 1
      %vm2921 = vcmp.eq.s32.totalorder %v2873, 1
      %vm2922 = vcmp.eq.s32.totalorder %v2874, 1
      %vm2923 = vcmp.eq.s32.totalorder %v2875, 1
      %vm2924 = vcmp.eq.s32.totalorder %v2876, 1
      %vm2925 = vcmp.eq.s32.totalorder %v2877, 1
      %vm2926 = vcmp.eq.s32.totalorder %v2878, 1
      %vm2927 = vcmp.eq.s32.totalorder %v2879, 1
      %vm2928 = vcmp.eq.s32.totalorder %v2880, 1
      %vm2929 = vcmp.eq.s32.totalorder %v2881, 1
      %vm2930 = vcmp.eq.s32.totalorder %v2882, 1
      %vm2931 = vcmp.eq.s32.totalorder %v2883, 1
      %vm2932 = vcmp.eq.s32.totalorder %v2884, 1
      %vm2933 = vcmp.eq.s32.totalorder %v2885, 1
      %vm2934 = vcmp.eq.s32.totalorder %v2886, 1
      %vm2935 = vcmp.eq.s32.totalorder %v2887, 1
      %vm2936 = vcmp.eq.s32.totalorder %v2888, 1
      %vm2937 = vcmp.eq.s32.totalorder %v2889, 1
      %vm2938 = vcmp.eq.s32.totalorder %v2890, 1
      %vm2939 = vcmp.eq.s32.totalorder %v2891, 1
      %vm2940 = vcmp.eq.s32.totalorder %v2892, 1
      %vm2941 = vcmp.eq.s32.totalorder %v2893, 1
      %vm2942 = vcmp.eq.s32.totalorder %v2894, 1
      %v2943 = vsel %vm2895, %v2799, 0.0
      %v2944 = vsel %vm2896, %v2800, 0.0
      %v2945 = vsel %vm2897, %v2801, 0.0
      %v2946 = vsel %vm2898, %v2802, 0.0
      %v2947 = vsel %vm2899, %v2803, 0.0
      %v2948 = vsel %vm2900, %v2804, 0.0
      %v2949 = vsel %vm2901, %v2805, 0.0
      %v2950 = vsel %vm2902, %v2806, 0.0
      %v2951 = vsel %vm2903, %v2807, 0.0
      %v2952 = vsel %vm2904, %v2808, 0.0
      %v2953 = vsel %vm2905, %v2809, 0.0
      %v2954 = vsel %vm2906, %v2810, 0.0
      %v2955 = vsel %vm2907, %v2811, 0.0
      %v2956 = vsel %vm2908, %v2812, 0.0
      %v2957 = vsel %vm2909, %v2813, 0.0
      %v2958 = vsel %vm2910, %v2814, 0.0
      %v2959 = vsel %vm2911, %v2815, 0.0
      %v2960 = vsel %vm2912, %v2816, 0.0
      %v2961 = vsel %vm2913, %v2817, 0.0
      %v2962 = vsel %vm2914, %v2818, 0.0
      %v2963 = vsel %vm2915, %v2819, 0.0
      %v2964 = vsel %vm2916, %v2820, 0.0
      %v2965 = vsel %vm2917, %v2821, 0.0
      %v2966 = vsel %vm2918, %v2822, 0.0
      %v2967 = vsel %vm2919, %v2823, 0.0
      %v2968 = vsel %vm2920, %v2824, 0.0
      %v2969 = vsel %vm2921, %v2825, 0.0
      %v2970 = vsel %vm2922, %v2826, 0.0
      %v2971 = vsel %vm2923, %v2827, 0.0
      %v2972 = vsel %vm2924, %v2828, 0.0
      %v2973 = vsel %vm2925, %v2829, 0.0
      %v2974 = vsel %vm2926, %v2830, 0.0
      %v2975 = vsel %vm2927, %v2831, 0.0
      %v2976 = vsel %vm2928, %v2832, 0.0
      %v2977 = vsel %vm2929, %v2833, 0.0
      %v2978 = vsel %vm2930, %v2834, 0.0
      %v2979 = vsel %vm2931, %v2835, 0.0
      %v2980 = vsel %vm2932, %v2836, 0.0
      %v2981 = vsel %vm2933, %v2837, 0.0
      %v2982 = vsel %vm2934, %v2838, 0.0
      %v2983 = vsel %vm2935, %v2839, 0.0
      %v2984 = vsel %vm2936, %v2840, 0.0
      %v2985 = vsel %vm2937, %v2841, 0.0
      %v2986 = vsel %vm2938, %v2842, 0.0
      %v2987 = vsel %vm2939, %v2843, 0.0
      %v2988 = vsel %vm2940, %v2844, 0.0
      %v2989 = vsel %vm2941, %v2845, 0.0
      %v2990 = vsel %vm2942, %v2846, 0.0
      %v2991 = vpack.c.bf16 %v2944, %v2943
      %v2992 = vpack.c.bf16 %v2946, %v2945
      %v2993 = vpack.c.bf16 %v2948, %v2947
      %v2994 = vpack.c.bf16 %v2950, %v2949
      %v2995 = vpack.c.bf16 %v2952, %v2951
      %v2996 = vpack.c.bf16 %v2954, %v2953
      %v2997 = vpack.c.bf16 %v2956, %v2955
      %v2998 = vpack.c.bf16 %v2958, %v2957
      %v2999 = vpack.c.bf16 %v2960, %v2959
      %v3000 = vpack.c.bf16 %v2962, %v2961
      %v3001 = vpack.c.bf16 %v2964, %v2963
      %v3002 = vpack.c.bf16 %v2966, %v2965
      %v3003 = vpack.c.bf16 %v2968, %v2967
      %v3004 = vpack.c.bf16 %v2970, %v2969
      %v3005 = vpack.c.bf16 %v2972, %v2971
      %v3006 = vpack.c.bf16 %v2974, %v2973
      %v3007 = vpack.c.bf16 %v2976, %v2975
      %v3008 = vpack.c.bf16 %v2978, %v2977
      %v3009 = vpack.c.bf16 %v2980, %v2979
      %v3010 = vpack.c.bf16 %v2982, %v2981
      %v3011 = vpack.c.bf16 %v2984, %v2983
      %v3012 = vpack.c.bf16 %v2986, %v2985
      %v3013 = vpack.c.bf16 %v2988, %v2987
      %v3014 = vpack.c.bf16 %v2990, %v2989
      %3015 = vst.msk [vmem:[#allocation2] sm:$0xff] %vm1381, 0
      %3016 = vst.msk [vmem:[#allocation2 + $0x8] sm:$0xff] %vm1381, 0
      %3017 = vst.msk [vmem:[#allocation2 + $0xd0] sm:$0xff] %vm1381, 0
      %3018 = vst.msk [vmem:[#allocation2 + $0xd8] sm:$0xff] %vm1381, 0
      %3019 = vst.msk [vmem:[#allocation2 + $0xe0] sm:$0xff] %vm1381, 0
      %3020 = vst.msk [vmem:[#allocation2 + $0x10] sm:$0xff] %vm1381, %v2991
      %3021 = vst.msk [vmem:[#allocation2 + $0x18] sm:$0xff] %vm1381, %v2992
      %3022 = vst.msk [vmem:[#allocation2 + $0x20] sm:$0xff] %vm1381, %v2993
      %3023 = vst.msk [vmem:[#allocation2 + $0x28] sm:$0xff] %vm1381, %v2994
      %3024 = vst.msk [vmem:[#allocation2 + $0x30] sm:$0xff] %vm1381, %v2995
      %3025 = vst.msk [vmem:[#allocation2 + $0x38] sm:$0xff] %vm1381, %v2996
      %3026 = vst.msk [vmem:[#allocation2 + $0x40] sm:$0xff] %vm1381, %v2997
      %3027 = vst.msk [vmem:[#allocation2 + $0x48] sm:$0xff] %vm1381, %v2998
      %3028 = vst.msk [vmem:[#allocation2 + $0x50] sm:$0xff] %vm1381, %v2999
      %3029 = vst.msk [vmem:[#allocation2 + $0x58] sm:$0xff] %vm1381, %v3000
      %3030 = vst.msk [vmem:[#allocation2 + $0x60] sm:$0xff] %vm1381, %v3001
      %3031 = vst.msk [vmem:[#allocation2 + $0x68] sm:$0xff] %vm1381, %v3002
      %3032 = vst.msk [vmem:[#allocation2 + $0x70] sm:$0xff] %vm1381, %v3003
      %3033 = vst.msk [vmem:[#allocation2 + $0x78] sm:$0xff] %vm1381, %v3004
      %3034 = vst.msk [vmem:[#allocation2 + $0x80] sm:$0xff] %vm1381, %v3005
      %3035 = vst.msk [vmem:[#allocation2 + $0x88] sm:$0xff] %vm1381, %v3006
      %3036 = vst.msk [vmem:[#allocation2 + $0x90] sm:$0xff] %vm1381, %v3007
      %3037 = vst.msk [vmem:[#allocation2 + $0x98] sm:$0xff] %vm1381, %v3008
      %3038 = vst.msk [vmem:[#allocation2 + $0xa0] sm:$0xff] %vm1381, %v3009
      %3039 = vst.msk [vmem:[#allocation2 + $0xa8] sm:$0xff] %vm1381, %v3010
      %3040 = vst.msk [vmem:[#allocation2 + $0xb0] sm:$0xff] %vm1381, %v3011
      %3041 = vst.msk [vmem:[#allocation2 + $0xb8] sm:$0xff] %vm1381, %v3012
      %3042 = vst.msk [vmem:[#allocation2 + $0xc0] sm:$0xff] %vm1381, %v3013
      %3043 = vst.msk [vmem:[#allocation2 + $0xc8] sm:$0xff] %vm1381, %v3014
      %v3044 = vld [vmem:[#allocation2] sm:$0xf8]
      %v3045 = vld [vmem:[#allocation2 + $0x8] sm:$0xff]
      %v3046 = vld [vmem:[#allocation2 + $0x10] sm:$0xff]
      %v3047 = vld [vmem:[#allocation2 + $0x18] sm:$0xff]
      %v3048 = vld [vmem:[#allocation2 + $0x20] sm:$0xff]
      %v3049 = vld [vmem:[#allocation2 + $0x28] sm:$0xff]
      %v3050 = vld [vmem:[#allocation2 + $0x30] sm:$0xff]
      %v3051 = vld [vmem:[#allocation2 + $0x38] sm:$0xff]
      %v3052 = vld [vmem:[#allocation2 + $0x40] sm:$0xff]
      %v3053 = vld [vmem:[#allocation2 + $0x48] sm:$0xff]
      %v3054 = vld [vmem:[#allocation2 + $0x50] sm:$0xff]
      %v3055 = vld [vmem:[#allocation2 + $0x58] sm:$0xff]
      %v3056 = vld [vmem:[#allocation2 + $0x60] sm:$0xff]
      %v3057 = vld [vmem:[#allocation2 + $0x68] sm:$0xff]
      %v3058 = vld [vmem:[#allocation2 + $0x70] sm:$0xff]
      %v3059 = vld [vmem:[#allocation2 + $0x78] sm:$0xff]
      %v3060 = vld [vmem:[#allocation2 + $0x80] sm:$0xff]
      %v3061 = vld [vmem:[#allocation2 + $0x88] sm:$0xff]
      %v3062 = vld [vmem:[#allocation2 + $0x90] sm:$0xff]
      %v3063 = vld [vmem:[#allocation2 + $0x98] sm:$0xff]
      %v3064 = vld [vmem:[#allocation2 + $0xa0] sm:$0xff]
      %v3065 = vld [vmem:[#allocation2 + $0xa8] sm:$0xff]
      %v3066 = vld [vmem:[#allocation2 + $0xb0] sm:$0xff]
      %v3067 = vld [vmem:[#allocation2 + $0xb8] sm:$0xff]
      %v3068 = vld [vmem:[#allocation2 + $0xc0] sm:$0xf]
      %v3069 = vld [vmem:[#allocation2] sm:$0xf0]
      %v3070 = vld [vmem:[#allocation2 + $0xc0] sm:$0x1f]
      %v3071 = vld [vmem:[#allocation2 + $0x8] sm:$0x80]
      %v3072 = vld [vmem:[#allocation2 + $0xc0] sm:$0xff]
      %v3073 = vld [vmem:[#allocation2 + $0xc8] sm:$0xff]
      %v3074 = vld [vmem:[#allocation2 + $0xd0] sm:$0x1]
      %v3075 = vld [vmem:[#allocation2 + $0x18] sm:$0xf8]
      %v3076 = vld [vmem:[#allocation2 + $0xd0] sm:$0xff]
      %v3077 = vld [vmem:[#allocation2 + $0xd8] sm:$0xf]
      %v3078 = vld [vmem:[#allocation2 + $0x18] sm:$0xf0]
      %v3079 = vld [vmem:[#allocation2 + $0xd8] sm:$0x1f]
      %v3081 = vshrl.u32 %v3069, 16
      %v3083 = vshll.u32 %v3069, 16
      %v3085 = vrot.slane %v3083, 1
      %v3086 = vor.u32 %v3081, %v3085
      %v3088 = vshll.u32 %v3045, 16
      %v3090 = vrot.slane %v3088, 1
      %v3091 = vsel %vm412, %v3086, %v3090
      %v3092 = vshrl.u32 %v3045, 16
      %v3094 = vor.u32 %v3092, %v3090
      %v3096 = vshll.u32 %v3046, 16
      %v3098 = vrot.slane %v3096, 1
      %v3099 = vsel %vm412, %v3094, %v3098
      %v3100 = vshrl.u32 %v3046, 16
      %v3102 = vor.u32 %v3100, %v3098
      %v3104 = vshll.u32 %v3047, 16
      %v3106 = vrot.slane %v3104, 1
      %v3107 = vsel %vm412, %v3102, %v3106
      %v3108 = vshrl.u32 %v3047, 16
      %v3110 = vor.u32 %v3108, %v3106
      %v3112 = vshll.u32 %v3048, 16
      %v3114 = vrot.slane %v3112, 1
      %v3115 = vsel %vm412, %v3110, %v3114
      %v3116 = vshrl.u32 %v3048, 16
      %v3118 = vor.u32 %v3116, %v3114
      %v3120 = vshll.u32 %v3049, 16
      %v3122 = vrot.slane %v3120, 1
      %v3123 = vsel %vm412, %v3118, %v3122
      %v3124 = vshrl.u32 %v3049, 16
      %v3126 = vor.u32 %v3124, %v3122
      %v3128 = vshll.u32 %v3050, 16
      %v3130 = vrot.slane %v3128, 1
      %v3131 = vsel %vm412, %v3126, %v3130
      %v3132 = vshrl.u32 %v3050, 16
      %v3134 = vor.u32 %v3132, %v3130
      %v3136 = vshll.u32 %v3051, 16
      %v3138 = vrot.slane %v3136, 1
      %v3139 = vsel %vm412, %v3134, %v3138
      %v3140 = vshrl.u32 %v3051, 16
      %v3142 = vor.u32 %v3140, %v3138
      %v3144 = vshll.u32 %v3052, 16
      %v3146 = vrot.slane %v3144, 1
      %v3147 = vsel %vm412, %v3142, %v3146
      %v3148 = vshrl.u32 %v3052, 16
      %v3150 = vor.u32 %v3148, %v3146
      %v3152 = vshll.u32 %v3053, 16
      %v3154 = vrot.slane %v3152, 1
      %v3155 = vsel %vm412, %v3150, %v3154
      %v3156 = vshrl.u32 %v3053, 16
      %v3158 = vor.u32 %v3156, %v3154
      %v3160 = vshll.u32 %v3054, 16
      %v3162 = vrot.slane %v3160, 1
      %v3163 = vsel %vm412, %v3158, %v3162
      %v3164 = vshrl.u32 %v3054, 16
      %v3166 = vor.u32 %v3164, %v3162
      %v3168 = vshll.u32 %v3055, 16
      %v3170 = vrot.slane %v3168, 1
      %v3171 = vsel %vm412, %v3166, %v3170
      %v3172 = vshrl.u32 %v3055, 16
      %v3174 = vor.u32 %v3172, %v3170
      %v3176 = vshll.u32 %v3056, 16
      %v3178 = vrot.slane %v3176, 1
      %v3179 = vsel %vm412, %v3174, %v3178
      %v3180 = vshrl.u32 %v3056, 16
      %v3182 = vor.u32 %v3180, %v3178
      %v3184 = vshll.u32 %v3057, 16
      %v3186 = vrot.slane %v3184, 1
      %v3187 = vsel %vm412, %v3182, %v3186
      %v3188 = vshrl.u32 %v3057, 16
      %v3190 = vor.u32 %v3188, %v3186
      %v3192 = vshll.u32 %v3058, 16
      %v3194 = vrot.slane %v3192, 1
      %v3195 = vsel %vm412, %v3190, %v3194
      %v3196 = vshrl.u32 %v3058, 16
      %v3198 = vor.u32 %v3196, %v3194
      %v3200 = vshll.u32 %v3059, 16
      %v3202 = vrot.slane %v3200, 1
      %v3203 = vsel %vm412, %v3198, %v3202
      %v3204 = vshrl.u32 %v3059, 16
      %v3206 = vor.u32 %v3204, %v3202
      %v3208 = vshll.u32 %v3060, 16
      %v3210 = vrot.slane %v3208, 1
      %v3211 = vsel %vm412, %v3206, %v3210
      %v3212 = vshrl.u32 %v3060, 16
      %v3214 = vor.u32 %v3212, %v3210
      %v3216 = vshll.u32 %v3061, 16
      %v3218 = vrot.slane %v3216, 1
      %v3219 = vsel %vm412, %v3214, %v3218
      %v3220 = vshrl.u32 %v3061, 16
      %v3222 = vor.u32 %v3220, %v3218
      %v3224 = vshll.u32 %v3062, 16
      %v3226 = vrot.slane %v3224, 1
      %v3227 = vsel %vm412, %v3222, %v3226
      %v3228 = vshrl.u32 %v3062, 16
      %v3230 = vor.u32 %v3228, %v3226
      %v3232 = vshll.u32 %v3063, 16
      %v3234 = vrot.slane %v3232, 1
      %v3235 = vsel %vm412, %v3230, %v3234
      %v3236 = vshrl.u32 %v3063, 16
      %v3238 = vor.u32 %v3236, %v3234
      %v3240 = vshll.u32 %v3064, 16
      %v3242 = vrot.slane %v3240, 1
      %v3243 = vsel %vm412, %v3238, %v3242
      %v3244 = vshrl.u32 %v3064, 16
      %v3246 = vor.u32 %v3244, %v3242
      %v3248 = vshll.u32 %v3065, 16
      %v3250 = vrot.slane %v3248, 1
      %v3251 = vsel %vm412, %v3246, %v3250
      %v3252 = vshrl.u32 %v3065, 16
      %v3254 = vor.u32 %v3252, %v3250
      %v3256 = vshll.u32 %v3066, 16
      %v3258 = vrot.slane %v3256, 1
      %v3259 = vsel %vm412, %v3254, %v3258
      %v3260 = vshrl.u32 %v3066, 16
      %v3262 = vor.u32 %v3260, %v3258
      %v3264 = vshll.u32 %v3067, 16
      %v3266 = vrot.slane %v3264, 1
      %v3267 = vsel %vm412, %v3262, %v3266
      %v3268 = vshrl.u32 %v3067, 16
      %v3270 = vor.u32 %v3268, %v3266
      %v3272 = vshll.u32 %v3068, 16
      %v3274 = vrot.slane %v3272, 1
      %v3275 = vsel %vm412, %v3270, %v3274
      %v3276 = vshrl.u32 %v3068, 16
      %v3278 = vor.u32 %v3276, %v3274
      %3279 = vrot.lane.b32.xlu0 %v3091, 4
      %v3280 = vpop.permute.xlu0 %3279
      %3281 = vrot.lane.b32.xlu0 %v3099, 4
      %v3282 = vpop.permute.xlu0 %3281
      %3283 = vrot.lane.b32.xlu0 %v3107, 4
      %v3284 = vpop.permute.xlu0 %3283
      %3285 = vrot.lane.b32.xlu0 %v3115, 4
      %v3286 = vpop.permute.xlu0 %3285
      %3287 = vrot.lane.b32.xlu0 %v3123, 4
      %v3288 = vpop.permute.xlu0 %3287
      %3289 = vrot.lane.b32.xlu0 %v3131, 4
      %v3290 = vpop.permute.xlu0 %3289
      %3291 = vrot.lane.b32.xlu0 %v3139, 4
      %v3292 = vpop.permute.xlu0 %3291
      %3293 = vrot.lane.b32.xlu0 %v3147, 4
      %v3294 = vpop.permute.xlu0 %3293
      %3295 = vrot.lane.b32.xlu0 %v3155, 4
      %v3296 = vpop.permute.xlu0 %3295
      %3297 = vrot.lane.b32.xlu0 %v3163, 4
      %v3298 = vpop.permute.xlu0 %3297
      %3299 = vrot.lane.b32.xlu0 %v3171, 4
      %v3300 = vpop.permute.xlu0 %3299
      %3301 = vrot.lane.b32.xlu0 %v3179, 4
      %v3302 = vpop.permute.xlu0 %3301
      %3303 = vrot.lane.b32.xlu0 %v3187, 4
      %v3304 = vpop.permute.xlu0 %3303
      %3305 = vrot.lane.b32.xlu0 %v3195, 4
      %v3306 = vpop.permute.xlu0 %3305
      %3307 = vrot.lane.b32.xlu0 %v3203, 4
      %v3308 = vpop.permute.xlu0 %3307
      %3309 = vrot.lane.b32.xlu0 %v3211, 4
      %v3310 = vpop.permute.xlu0 %3309
      %3311 = vrot.lane.b32.xlu0 %v3219, 4
      %v3312 = vpop.permute.xlu0 %3311
      %3313 = vrot.lane.b32.xlu0 %v3227, 4
      %v3314 = vpop.permute.xlu0 %3313
      %3315 = vrot.lane.b32.xlu0 %v3235, 4
      %v3316 = vpop.permute.xlu0 %3315
      %3317 = vrot.lane.b32.xlu0 %v3243, 4
      %v3318 = vpop.permute.xlu0 %3317
      %3319 = vrot.lane.b32.xlu0 %v3251, 4
      %v3320 = vpop.permute.xlu0 %3319
      %3321 = vrot.lane.b32.xlu0 %v3259, 4
      %v3322 = vpop.permute.xlu0 %3321
      %3323 = vrot.lane.b32.xlu0 %v3267, 4
      %v3324 = vpop.permute.xlu0 %3323
      %3325 = vrot.lane.b32.xlu0 %v3275, 4
      %v3326 = vpop.permute.xlu0 %3325
      %3327 = vrot.lane.b32.xlu0 %v3278, 4
      %v3328 = vpop.permute.xlu0 %3327
      %v3354 = vrot.slane %v3069, 1
      %v3355 = vrot.slane %v3045, 1
      %v3356 = vsel %vm660, %v3354, %v3355
      %v3357 = vrot.slane %v3046, 1
      %v3358 = vsel %vm660, %v3355, %v3357
      %v3359 = vrot.slane %v3047, 1
      %v3360 = vsel %vm660, %v3357, %v3359
      %v3361 = vrot.slane %v3048, 1
      %v3362 = vsel %vm660, %v3359, %v3361
      %v3363 = vrot.slane %v3049, 1
      %v3364 = vsel %vm660, %v3361, %v3363
      %v3365 = vrot.slane %v3050, 1
      %v3366 = vsel %vm660, %v3363, %v3365
      %v3367 = vrot.slane %v3051, 1
      %v3368 = vsel %vm660, %v3365, %v3367
      %v3369 = vrot.slane %v3052, 1
      %v3370 = vsel %vm660, %v3367, %v3369
      %v3371 = vrot.slane %v3053, 1
      %v3372 = vsel %vm660, %v3369, %v3371
      %v3373 = vrot.slane %v3054, 1
      %v3374 = vsel %vm660, %v3371, %v3373
      %v3375 = vrot.slane %v3055, 1
      %v3376 = vsel %vm660, %v3373, %v3375
      %v3377 = vrot.slane %v3056, 1
      %v3378 = vsel %vm660, %v3375, %v3377
      %v3379 = vrot.slane %v3057, 1
      %v3380 = vsel %vm660, %v3377, %v3379
      %v3381 = vrot.slane %v3058, 1
      %v3382 = vsel %vm660, %v3379, %v3381
      %v3383 = vrot.slane %v3059, 1
      %v3384 = vsel %vm660, %v3381, %v3383
      %v3385 = vrot.slane %v3060, 1
      %v3386 = vsel %vm660, %v3383, %v3385
      %v3387 = vrot.slane %v3061, 1
      %v3388 = vsel %vm660, %v3385, %v3387
      %v3389 = vrot.slane %v3062, 1
      %v3390 = vsel %vm660, %v3387, %v3389
      %v3391 = vrot.slane %v3063, 1
      %v3392 = vsel %vm660, %v3389, %v3391
      %v3393 = vrot.slane %v3064, 1
      %v3394 = vsel %vm660, %v3391, %v3393
      %v3395 = vrot.slane %v3065, 1
      %v3396 = vsel %vm660, %v3393, %v3395
      %v3397 = vrot.slane %v3066, 1
      %v3398 = vsel %vm660, %v3395, %v3397
      %v3399 = vrot.slane %v3067, 1
      %v3400 = vsel %vm660, %v3397, %v3399
      %v3401 = vrot.slane %v3070, 1
      %v3402 = vsel %vm660, %v3399, %v3401
      %3403 = vrot.lane.b32.xlu0 %v3356, 8
      %v3404 = vpop.permute.xlu0 %3403
      %3405 = vrot.lane.b32.xlu0 %v3358, 8
      %v3406 = vpop.permute.xlu0 %3405
      %3407 = vrot.lane.b32.xlu0 %v3360, 8
      %v3408 = vpop.permute.xlu0 %3407
      %3409 = vrot.lane.b32.xlu0 %v3362, 8
      %v3410 = vpop.permute.xlu0 %3409
      %3411 = vrot.lane.b32.xlu0 %v3364, 8
      %v3412 = vpop.permute.xlu0 %3411
      %3413 = vrot.lane.b32.xlu0 %v3366, 8
      %v3414 = vpop.permute.xlu0 %3413
      %3415 = vrot.lane.b32.xlu0 %v3368, 8
      %v3416 = vpop.permute.xlu0 %3415
      %3417 = vrot.lane.b32.xlu0 %v3370, 8
      %v3418 = vpop.permute.xlu0 %3417
      %3419 = vrot.lane.b32.xlu0 %v3372, 8
      %v3420 = vpop.permute.xlu0 %3419
      %3421 = vrot.lane.b32.xlu0 %v3374, 8
      %v3422 = vpop.permute.xlu0 %3421
      %3423 = vrot.lane.b32.xlu0 %v3376, 8
      %v3424 = vpop.permute.xlu0 %3423
      %3425 = vrot.lane.b32.xlu0 %v3378, 8
      %v3426 = vpop.permute.xlu0 %3425
      %3427 = vrot.lane.b32.xlu0 %v3380, 8
      %v3428 = vpop.permute.xlu0 %3427
      %3429 = vrot.lane.b32.xlu0 %v3382, 8
      %v3430 = vpop.permute.xlu0 %3429
      %3431 = vrot.lane.b32.xlu0 %v3384, 8
      %v3432 = vpop.permute.xlu0 %3431
      %3433 = vrot.lane.b32.xlu0 %v3386, 8
      %v3434 = vpop.permute.xlu0 %3433
      %3435 = vrot.lane.b32.xlu0 %v3388, 8
      %v3436 = vpop.permute.xlu0 %3435
      %3437 = vrot.lane.b32.xlu0 %v3390, 8
      %v3438 = vpop.permute.xlu0 %3437
      %3439 = vrot.lane.b32.xlu0 %v3392, 8
      %v3440 = vpop.permute.xlu0 %3439
      %3441 = vrot.lane.b32.xlu0 %v3394, 8
      %v3442 = vpop.permute.xlu0 %3441
      %3443 = vrot.lane.b32.xlu0 %v3396, 8
      %v3444 = vpop.permute.xlu0 %3443
      %3445 = vrot.lane.b32.xlu0 %v3398, 8
      %v3446 = vpop.permute.xlu0 %3445
      %3447 = vrot.lane.b32.xlu0 %v3400, 8
      %v3448 = vpop.permute.xlu0 %3447
      %3449 = vrot.lane.b32.xlu0 %v3402, 8
      %v3450 = vpop.permute.xlu0 %3449
      %3451 = vrot.lane.b32.xlu0 %v3401, 8
      %v3452 = vpop.permute.xlu0 %3451
      %vm3456 = vcmask 1043456
      %v3457 = vrot.slane %v3071, 4
      %v3458 = vrot.slane %v3046, 4
      %v3459 = vsel %vm3456, %v3457, %v3458
      %v3460 = vrot.slane %v3047, 4
      %v3461 = vsel %vm3456, %v3458, %v3460
      %v3462 = vrot.slane %v3048, 4
      %v3463 = vsel %vm3456, %v3460, %v3462
      %v3464 = vrot.slane %v3049, 4
      %v3465 = vsel %vm3456, %v3462, %v3464
      %v3466 = vrot.slane %v3050, 4
      %v3467 = vsel %vm3456, %v3464, %v3466
      %v3468 = vrot.slane %v3051, 4
      %v3469 = vsel %vm3456, %v3466, %v3468
      %v3470 = vrot.slane %v3052, 4
      %v3471 = vsel %vm3456, %v3468, %v3470
      %v3472 = vrot.slane %v3053, 4
      %v3473 = vsel %vm3456, %v3470, %v3472
      %v3474 = vrot.slane %v3054, 4
      %v3475 = vsel %vm3456, %v3472, %v3474
      %v3476 = vrot.slane %v3055, 4
      %v3477 = vsel %vm3456, %v3474, %v3476
      %v3478 = vrot.slane %v3056, 4
      %v3479 = vsel %vm3456, %v3476, %v3478
      %v3480 = vrot.slane %v3057, 4
      %v3481 = vsel %vm3456, %v3478, %v3480
      %v3482 = vrot.slane %v3058, 4
      %v3483 = vsel %vm3456, %v3480, %v3482
      %v3484 = vrot.slane %v3059, 4
      %v3485 = vsel %vm3456, %v3482, %v3484
      %v3486 = vrot.slane %v3060, 4
      %v3487 = vsel %vm3456, %v3484, %v3486
      %v3488 = vrot.slane %v3061, 4
      %v3489 = vsel %vm3456, %v3486, %v3488
      %v3490 = vrot.slane %v3062, 4
      %v3491 = vsel %vm3456, %v3488, %v3490
      %v3492 = vrot.slane %v3063, 4
      %v3493 = vsel %vm3456, %v3490, %v3492
      %v3494 = vrot.slane %v3064, 4
      %v3495 = vsel %vm3456, %v3492, %v3494
      %v3496 = vrot.slane %v3065, 4
      %v3497 = vsel %vm3456, %v3494, %v3496
      %v3498 = vrot.slane %v3066, 4
      %v3499 = vsel %vm3456, %v3496, %v3498
      %v3500 = vrot.slane %v3067, 4
      %v3501 = vsel %vm3456, %v3498, %v3500
      %v3502 = vrot.slane %v3072, 4
      %v3503 = vsel %vm3456, %v3500, %v3502
      %v3504 = vrot.slane %v3073, 4
      %v3505 = vsel %vm3456, %v3502, %v3504
      %3506 = vrot.lane.b32.xlu0 %v3459, 12
      %v3507 = vpop.permute.xlu0 %3506
      %3508 = vrot.lane.b32.xlu0 %v3461, 12
      %v3509 = vpop.permute.xlu0 %3508
      %3510 = vrot.lane.b32.xlu0 %v3463, 12
      %v3511 = vpop.permute.xlu0 %3510
      %3512 = vrot.lane.b32.xlu0 %v3465, 12
      %v3513 = vpop.permute.xlu0 %3512
      %3514 = vrot.lane.b32.xlu0 %v3467, 12
      %v3515 = vpop.permute.xlu0 %3514
      %3516 = vrot.lane.b32.xlu0 %v3469, 12
      %v3517 = vpop.permute.xlu0 %3516
      %3518 = vrot.lane.b32.xlu0 %v3471, 12
      %v3519 = vpop.permute.xlu0 %3518
      %3520 = vrot.lane.b32.xlu0 %v3473, 12
      %v3521 = vpop.permute.xlu0 %3520
      %3522 = vrot.lane.b32.xlu0 %v3475, 12
      %v3523 = vpop.permute.xlu0 %3522
      %3524 = vrot.lane.b32.xlu0 %v3477, 12
      %v3525 = vpop.permute.xlu0 %3524
      %3526 = vrot.lane.b32.xlu0 %v3479, 12
      %v3527 = vpop.permute.xlu0 %3526
      %3528 = vrot.lane.b32.xlu0 %v3481, 12
      %v3529 = vpop.permute.xlu0 %3528
      %3530 = vrot.lane.b32.xlu0 %v3483, 12
      %v3531 = vpop.permute.xlu0 %3530
      %3532 = vrot.lane.b32.xlu0 %v3485, 12
      %v3533 = vpop.permute.xlu0 %3532
      %3534 = vrot.lane.b32.xlu0 %v3487, 12
      %v3535 = vpop.permute.xlu0 %3534
      %3536 = vrot.lane.b32.xlu0 %v3489, 12
      %v3537 = vpop.permute.xlu0 %3536
      %3538 = vrot.lane.b32.xlu0 %v3491, 12
      %v3539 = vpop.permute.xlu0 %3538
      %3540 = vrot.lane.b32.xlu0 %v3493, 12
      %v3541 = vpop.permute.xlu0 %3540
      %3542 = vrot.lane.b32.xlu0 %v3495, 12
      %v3543 = vpop.permute.xlu0 %3542
      %3544 = vrot.lane.b32.xlu0 %v3497, 12
      %v3545 = vpop.permute.xlu0 %3544
      %3546 = vrot.lane.b32.xlu0 %v3499, 12
      %v3547 = vpop.permute.xlu0 %3546
      %3548 = vrot.lane.b32.xlu0 %v3501, 12
      %v3549 = vpop.permute.xlu0 %3548
      %3550 = vrot.lane.b32.xlu0 %v3503, 12
      %v3551 = vpop.permute.xlu0 %3550
      %3552 = vrot.lane.b32.xlu0 %v3505, 12
      %v3553 = vpop.permute.xlu0 %3552
      %3554 = vrot.lane.b32.xlu0 %v3504, 12
      %v3555 = vpop.permute.xlu0 %3554
      %vm3556 = vsmask.f32 3328
      %v3557 = vrot.slane %v3100, 4
      %v3558 = vrot.slane %v3096, 5
      %v3559 = vor.u32 %v3557, %v3558
      %v3560 = vrot.slane %v3108, 4
      %v3561 = vrot.slane %v3104, 5
      %v3562 = vor.u32 %v3560, %v3561
      %v3563 = vsel %vm3556, %v3559, %v3562
      %v3564 = vrot.slane %v3116, 4
      %v3565 = vrot.slane %v3112, 5
      %v3566 = vor.u32 %v3564, %v3565
      %v3567 = vsel %vm3556, %v3562, %v3566
      %v3568 = vrot.slane %v3124, 4
      %v3569 = vrot.slane %v3120, 5
      %v3570 = vor.u32 %v3568, %v3569
      %v3571 = vsel %vm3556, %v3566, %v3570
      %v3572 = vrot.slane %v3132, 4
      %v3573 = vrot.slane %v3128, 5
      %v3574 = vor.u32 %v3572, %v3573
      %v3575 = vsel %vm3556, %v3570, %v3574
      %v3576 = vrot.slane %v3140, 4
      %v3577 = vrot.slane %v3136, 5
      %v3578 = vor.u32 %v3576, %v3577
      %v3579 = vsel %vm3556, %v3574, %v3578
      %v3580 = vrot.slane %v3148, 4
      %v3581 = vrot.slane %v3144, 5
      %v3582 = vor.u32 %v3580, %v3581
      %v3583 = vsel %vm3556, %v3578, %v3582
      %v3584 = vrot.slane %v3156, 4
      %v3585 = vrot.slane %v3152, 5
      %v3586 = vor.u32 %v3584, %v3585
      %v3587 = vsel %vm3556, %v3582, %v3586
      %v3588 = vrot.slane %v3164, 4
      %v3589 = vrot.slane %v3160, 5
      %v3590 = vor.u32 %v3588, %v3589
      %v3591 = vsel %vm3556, %v3586, %v3590
      %v3592 = vrot.slane %v3172, 4
      %v3593 = vrot.slane %v3168, 5
      %v3594 = vor.u32 %v3592, %v3593
      %v3595 = vsel %vm3556, %v3590, %v3594
      %v3596 = vrot.slane %v3180, 4
      %v3597 = vrot.slane %v3176, 5
      %v3598 = vor.u32 %v3596, %v3597
      %v3599 = vsel %vm3556, %v3594, %v3598
      %v3600 = vrot.slane %v3188, 4
      %v3601 = vrot.slane %v3184, 5
      %v3602 = vor.u32 %v3600, %v3601
      %v3603 = vsel %vm3556, %v3598, %v3602
      %v3604 = vrot.slane %v3196, 4
      %v3605 = vrot.slane %v3192, 5
      %v3606 = vor.u32 %v3604, %v3605
      %v3607 = vsel %vm3556, %v3602, %v3606
      %v3608 = vrot.slane %v3204, 4
      %v3609 = vrot.slane %v3200, 5
      %v3610 = vor.u32 %v3608, %v3609
      %v3611 = vsel %vm3556, %v3606, %v3610
      %v3612 = vrot.slane %v3212, 4
      %v3613 = vrot.slane %v3208, 5
      %v3614 = vor.u32 %v3612, %v3613
      %v3615 = vsel %vm3556, %v3610, %v3614
      %v3616 = vrot.slane %v3220, 4
      %v3617 = vrot.slane %v3216, 5
      %v3618 = vor.u32 %v3616, %v3617
      %v3619 = vsel %vm3556, %v3614, %v3618
      %v3620 = vrot.slane %v3228, 4
      %v3621 = vrot.slane %v3224, 5
      %v3622 = vor.u32 %v3620, %v3621
      %v3623 = vsel %vm3556, %v3618, %v3622
      %v3624 = vrot.slane %v3236, 4
      %v3625 = vrot.slane %v3232, 5
      %v3626 = vor.u32 %v3624, %v3625
      %v3627 = vsel %vm3556, %v3622, %v3626
      %v3628 = vrot.slane %v3244, 4
      %v3629 = vrot.slane %v3240, 5
      %v3630 = vor.u32 %v3628, %v3629
      %v3631 = vsel %vm3556, %v3626, %v3630
      %v3632 = vrot.slane %v3252, 4
      %v3633 = vrot.slane %v3248, 5
      %v3634 = vor.u32 %v3632, %v3633
      %v3635 = vsel %vm3556, %v3630, %v3634
      %v3636 = vrot.slane %v3260, 4
      %v3637 = vrot.slane %v3256, 5
      %v3638 = vor.u32 %v3636, %v3637
      %v3639 = vsel %vm3556, %v3634, %v3638
      %v3640 = vrot.slane %v3268, 4
      %v3641 = vrot.slane %v3264, 5
      %v3642 = vor.u32 %v3640, %v3641
      %v3643 = vsel %vm3556, %v3638, %v3642
      %v3645 = vshrl.u32 %v3072, 16
      %v3647 = vrot.slane %v3645, 4
      %v3648 = vshll.u32 %v3072, 16
      %v3650 = vrot.slane %v3648, 5
      %v3651 = vor.u32 %v3647, %v3650
      %v3652 = vsel %vm3556, %v3642, %v3651
      %v3654 = vshrl.u32 %v3073, 16
      %v3656 = vrot.slane %v3654, 4
      %v3657 = vshll.u32 %v3073, 16
      %v3659 = vrot.slane %v3657, 5
      %v3660 = vor.u32 %v3656, %v3659
      %v3661 = vsel %vm3556, %v3651, %v3660
      %3662 = vrot.lane.b32.xlu0 %v3559, 16
      %v3663 = vpop.permute.xlu0 %3662
      %3664 = vrot.lane.b32.xlu0 %v3563, 16
      %v3665 = vpop.permute.xlu0 %3664
      %3666 = vrot.lane.b32.xlu0 %v3567, 16
      %v3667 = vpop.permute.xlu0 %3666
      %3668 = vrot.lane.b32.xlu0 %v3571, 16
      %v3669 = vpop.permute.xlu0 %3668
      %3670 = vrot.lane.b32.xlu0 %v3575, 16
      %v3671 = vpop.permute.xlu0 %3670
      %3672 = vrot.lane.b32.xlu0 %v3579, 16
      %v3673 = vpop.permute.xlu0 %3672
      %3674 = vrot.lane.b32.xlu0 %v3583, 16
      %v3675 = vpop.permute.xlu0 %3674
      %3676 = vrot.lane.b32.xlu0 %v3587, 16
      %v3677 = vpop.permute.xlu0 %3676
      %3678 = vrot.lane.b32.xlu0 %v3591, 16
      %v3679 = vpop.permute.xlu0 %3678
      %3680 = vrot.lane.b32.xlu0 %v3595, 16
      %v3681 = vpop.permute.xlu0 %3680
      %3682 = vrot.lane.b32.xlu0 %v3599, 16
      %v3683 = vpop.permute.xlu0 %3682
      %3684 = vrot.lane.b32.xlu0 %v3603, 16
      %v3685 = vpop.permute.xlu0 %3684
      %3686 = vrot.lane.b32.xlu0 %v3607, 16
      %v3687 = vpop.permute.xlu0 %3686
      %3688 = vrot.lane.b32.xlu0 %v3611, 16
      %v3689 = vpop.permute.xlu0 %3688
      %3690 = vrot.lane.b32.xlu0 %v3615, 16
      %v3691 = vpop.permute.xlu0 %3690
      %3692 = vrot.lane.b32.xlu0 %v3619, 16
      %v3693 = vpop.permute.xlu0 %3692
      %3694 = vrot.lane.b32.xlu0 %v3623, 16
      %v3695 = vpop.permute.xlu0 %3694
      %3696 = vrot.lane.b32.xlu0 %v3627, 16
      %v3697 = vpop.permute.xlu0 %3696
      %3698 = vrot.lane.b32.xlu0 %v3631, 16
      %v3699 = vpop.permute.xlu0 %3698
      %3700 = vrot.lane.b32.xlu0 %v3635, 16
      %v3701 = vpop.permute.xlu0 %3700
      %3702 = vrot.lane.b32.xlu0 %v3639, 16
      %v3703 = vpop.permute.xlu0 %3702
      %3704 = vrot.lane.b32.xlu0 %v3643, 16
      %v3705 = vpop.permute.xlu0 %3704
      %3706 = vrot.lane.b32.xlu0 %v3652, 16
      %v3707 = vpop.permute.xlu0 %3706
      %3708 = vrot.lane.b32.xlu0 %v3661, 16
      %v3709 = vpop.permute.xlu0 %3708
      %3710 = vrot.lane.b32.xlu0 %v3660, 16
      %v3711 = vpop.permute.xlu0 %3710
      %vm3713 = vcmask 1042432
      %v3714 = vrot.slane %v3046, 5
      %v3715 = vrot.slane %v3047, 5
      %v3716 = vsel %vm3713, %v3714, %v3715
      %v3717 = vrot.slane %v3048, 5
      %v3718 = vsel %vm3713, %v3715, %v3717
      %v3719 = vrot.slane %v3049, 5
      %v3720 = vsel %vm3713, %v3717, %v3719
      %v3721 = vrot.slane %v3050, 5
      %v3722 = vsel %vm3713, %v3719, %v3721
      %v3723 = vrot.slane %v3051, 5
      %v3724 = vsel %vm3713, %v3721, %v3723
      %v3725 = vrot.slane %v3052, 5
      %v3726 = vsel %vm3713, %v3723, %v3725
      %v3727 = vrot.slane %v3053, 5
      %v3728 = vsel %vm3713, %v3725, %v3727
      %v3729 = vrot.slane %v3054, 5
      %v3730 = vsel %vm3713, %v3727, %v3729
      %v3731 = vrot.slane %v3055, 5
      %v3732 = vsel %vm3713, %v3729, %v3731
      %v3733 = vrot.slane %v3056, 5
      %v3734 = vsel %vm3713, %v3731, %v3733
      %v3735 = vrot.slane %v3057, 5
      %v3736 = vsel %vm3713, %v3733, %v3735
      %v3737 = vrot.slane %v3058, 5
      %v3738 = vsel %vm3713, %v3735, %v3737
      %v3739 = vrot.slane %v3059, 5
      %v3740 = vsel %vm3713, %v3737, %v3739
      %v3741 = vrot.slane %v3060, 5
      %v3742 = vsel %vm3713, %v3739, %v3741
      %v3743 = vrot.slane %v3061, 5
      %v3744 = vsel %vm3713, %v3741, %v3743
      %v3745 = vrot.slane %v3062, 5
      %v3746 = vsel %vm3713, %v3743, %v3745
      %v3747 = vrot.slane %v3063, 5
      %v3748 = vsel %vm3713, %v3745, %v3747
      %v3749 = vrot.slane %v3064, 5
      %v3750 = vsel %vm3713, %v3747, %v3749
      %v3751 = vrot.slane %v3065, 5
      %v3752 = vsel %vm3713, %v3749, %v3751
      %v3753 = vrot.slane %v3066, 5
      %v3754 = vsel %vm3713, %v3751, %v3753
      %v3755 = vrot.slane %v3067, 5
      %v3756 = vsel %vm3713, %v3753, %v3755
      %v3757 = vrot.slane %v3072, 5
      %v3758 = vsel %vm3713, %v3755, %v3757
      %v3759 = vrot.slane %v3073, 5
      %v3760 = vsel %vm3713, %v3757, %v3759
      %v3761 = vrot.slane %v3074, 5
      %v3762 = vsel %vm3713, %v3759, %v3761
      %3763 = vrot.lane.b32.xlu0 %v3714, 20
      %v3764 = vpop.permute.xlu0 %3763
      %3765 = vrot.lane.b32.xlu0 %v3716, 20
      %v3766 = vpop.permute.xlu0 %3765
      %3767 = vrot.lane.b32.xlu0 %v3718, 20
      %v3768 = vpop.permute.xlu0 %3767
      %3769 = vrot.lane.b32.xlu0 %v3720, 20
      %v3770 = vpop.permute.xlu0 %3769
      %3771 = vrot.lane.b32.xlu0 %v3722, 20
      %v3772 = vpop.permute.xlu0 %3771
      %3773 = vrot.lane.b32.xlu0 %v3724, 20
      %v3774 = vpop.permute.xlu0 %3773
      %3775 = vrot.lane.b32.xlu0 %v3726, 20
      %v3776 = vpop.permute.xlu0 %3775
      %3777 = vrot.lane.b32.xlu0 %v3728, 20
      %v3778 = vpop.permute.xlu0 %3777
      %3779 = vrot.lane.b32.xlu0 %v3730, 20
      %v3780 = vpop.permute.xlu0 %3779
      %3781 = vrot.lane.b32.xlu0 %v3732, 20
      %v3782 = vpop.permute.xlu0 %3781
      %3783 = vrot.lane.b32.xlu0 %v3734, 20
      %v3784 = vpop.permute.xlu0 %3783
      %3785 = vrot.lane.b32.xlu0 %v3736, 20
      %v3786 = vpop.permute.xlu0 %3785
      %3787 = vrot.lane.b32.xlu0 %v3738, 20
      %v3788 = vpop.permute.xlu0 %3787
      %3789 = vrot.lane.b32.xlu0 %v3740, 20
      %v3790 = vpop.permute.xlu0 %3789
      %3791 = vrot.lane.b32.xlu0 %v3742, 20
      %v3792 = vpop.permute.xlu0 %3791
      %3793 = vrot.lane.b32.xlu0 %v3744, 20
      %v3794 = vpop.permute.xlu0 %3793
      %3795 = vrot.lane.b32.xlu0 %v3746, 20
      %v3796 = vpop.permute.xlu0 %3795
      %3797 = vrot.lane.b32.xlu0 %v3748, 20
      %v3798 = vpop.permute.xlu0 %3797
      %3799 = vrot.lane.b32.xlu0 %v3750, 20
      %v3800 = vpop.permute.xlu0 %3799
      %3801 = vrot.lane.b32.xlu0 %v3752, 20
      %v3802 = vpop.permute.xlu0 %3801
      %3803 = vrot.lane.b32.xlu0 %v3754, 20
      %v3804 = vpop.permute.xlu0 %3803
      %3805 = vrot.lane.b32.xlu0 %v3756, 20
      %v3806 = vpop.permute.xlu0 %3805
      %3807 = vrot.lane.b32.xlu0 %v3758, 20
      %v3808 = vpop.permute.xlu0 %3807
      %3809 = vrot.lane.b32.xlu0 %v3760, 20
      %v3810 = vpop.permute.xlu0 %3809
      %3811 = vrot.lane.b32.xlu0 %v3762, 20
      %v3812 = vpop.permute.xlu0 %3811
      %3816 = vrot.lane.b32.xlu0 %v3075, 24
      %v3817 = vpop.permute.xlu0 %3816
      %3818 = vrot.lane.b32.xlu0 %v3048, 24
      %v3819 = vpop.permute.xlu0 %3818
      %3820 = vrot.lane.b32.xlu0 %v3049, 24
      %v3821 = vpop.permute.xlu0 %3820
      %3822 = vrot.lane.b32.xlu0 %v3050, 24
      %v3823 = vpop.permute.xlu0 %3822
      %3824 = vrot.lane.b32.xlu0 %v3051, 24
      %v3825 = vpop.permute.xlu0 %3824
      %3826 = vrot.lane.b32.xlu0 %v3052, 24
      %v3827 = vpop.permute.xlu0 %3826
      %3828 = vrot.lane.b32.xlu0 %v3053, 24
      %v3829 = vpop.permute.xlu0 %3828
      %3830 = vrot.lane.b32.xlu0 %v3054, 24
      %v3831 = vpop.permute.xlu0 %3830
      %3832 = vrot.lane.b32.xlu0 %v3055, 24
      %v3833 = vpop.permute.xlu0 %3832
      %3834 = vrot.lane.b32.xlu0 %v3056, 24
      %v3835 = vpop.permute.xlu0 %3834
      %3836 = vrot.lane.b32.xlu0 %v3057, 24
      %v3837 = vpop.permute.xlu0 %3836
      %3838 = vrot.lane.b32.xlu0 %v3058, 24
      %v3839 = vpop.permute.xlu0 %3838
      %3840 = vrot.lane.b32.xlu0 %v3059, 24
      %v3841 = vpop.permute.xlu0 %3840
      %3842 = vrot.lane.b32.xlu0 %v3060, 24
      %v3843 = vpop.permute.xlu0 %3842
      %3844 = vrot.lane.b32.xlu0 %v3061, 24
      %v3845 = vpop.permute.xlu0 %3844
      %3846 = vrot.lane.b32.xlu0 %v3062, 24
      %v3847 = vpop.permute.xlu0 %3846
      %3848 = vrot.lane.b32.xlu0 %v3063, 24
      %v3849 = vpop.permute.xlu0 %3848
      %3850 = vrot.lane.b32.xlu0 %v3064, 24
      %v3851 = vpop.permute.xlu0 %3850
      %3852 = vrot.lane.b32.xlu0 %v3065, 24
      %v3853 = vpop.permute.xlu0 %3852
      %3854 = vrot.lane.b32.xlu0 %v3066, 24
      %v3855 = vpop.permute.xlu0 %3854
      %3856 = vrot.lane.b32.xlu0 %v3067, 24
      %v3857 = vpop.permute.xlu0 %3856
      %3858 = vrot.lane.b32.xlu0 %v3072, 24
      %v3859 = vpop.permute.xlu0 %3858
      %3860 = vrot.lane.b32.xlu0 %v3073, 24
      %v3861 = vpop.permute.xlu0 %3860
      %3862 = vrot.lane.b32.xlu0 %v3076, 24
      %v3863 = vpop.permute.xlu0 %3862
      %3864 = vrot.lane.b32.xlu0 %v3077, 24
      %v3865 = vpop.permute.xlu0 %3864
      %v3867 = vshrl.u32 %v3078, 16
      %v3869 = vshll.u32 %v3078, 16
      %v3871 = vrot.slane %v3869, 1
      %v3872 = vor.u32 %v3867, %v3871
      %v3873 = vsel %vm412, %v3872, %v3114
      %v3874 = vrot.slane %v3648, 1
      %v3875 = vsel %vm412, %v3270, %v3874
      %v3876 = vor.u32 %v3645, %v3874
      %v3877 = vrot.slane %v3657, 1
      %v3878 = vsel %vm412, %v3876, %v3877
      %v3879 = vor.u32 %v3654, %v3877
      %v3881 = vshll.u32 %v3076, 16
      %v3883 = vrot.slane %v3881, 1
      %v3884 = vsel %vm412, %v3879, %v3883
      %v3885 = vshrl.u32 %v3076, 16
      %v3887 = vor.u32 %v3885, %v3883
      %v3889 = vshll.u32 %v3077, 16
      %v3891 = vrot.slane %v3889, 1
      %v3892 = vsel %vm412, %v3887, %v3891
      %v3893 = vshrl.u32 %v3077, 16
      %v3895 = vor.u32 %v3893, %v3891
      %3896 = vrot.lane.b32.xlu0 %v3873, 28
      %v3897 = vpop.permute.xlu0 %3896
      %3898 = vrot.lane.b32.xlu0 %v3123, 28
      %v3899 = vpop.permute.xlu0 %3898
      %3900 = vrot.lane.b32.xlu0 %v3131, 28
      %v3901 = vpop.permute.xlu0 %3900
      %3902 = vrot.lane.b32.xlu0 %v3139, 28
      %v3903 = vpop.permute.xlu0 %3902
      %3904 = vrot.lane.b32.xlu0 %v3147, 28
      %v3905 = vpop.permute.xlu0 %3904
      %3906 = vrot.lane.b32.xlu0 %v3155, 28
      %v3907 = vpop.permute.xlu0 %3906
      %3908 = vrot.lane.b32.xlu0 %v3163, 28
      %v3909 = vpop.permute.xlu0 %3908
      %3910 = vrot.lane.b32.xlu0 %v3171, 28
      %v3911 = vpop.permute.xlu0 %3910
      %3912 = vrot.lane.b32.xlu0 %v3179, 28
      %v3913 = vpop.permute.xlu0 %3912
      %3914 = vrot.lane.b32.xlu0 %v3187, 28
      %v3915 = vpop.permute.xlu0 %3914
      %3916 = vrot.lane.b32.xlu0 %v3195, 28
      %v3917 = vpop.permute.xlu0 %3916
      %3918 = vrot.lane.b32.xlu0 %v3203, 28
      %v3919 = vpop.permute.xlu0 %3918
      %3920 = vrot.lane.b32.xlu0 %v3211, 28
      %v3921 = vpop.permute.xlu0 %3920
      %3922 = vrot.lane.b32.xlu0 %v3219, 28
      %v3923 = vpop.permute.xlu0 %3922
      %3924 = vrot.lane.b32.xlu0 %v3227, 28
      %v3925 = vpop.permute.xlu0 %3924
      %3926 = vrot.lane.b32.xlu0 %v3235, 28
      %v3927 = vpop.permute.xlu0 %3926
      %3928 = vrot.lane.b32.xlu0 %v3243, 28
      %v3929 = vpop.permute.xlu0 %3928
      %3930 = vrot.lane.b32.xlu0 %v3251, 28
      %v3931 = vpop.permute.xlu0 %3930
      %3932 = vrot.lane.b32.xlu0 %v3259, 28
      %v3933 = vpop.permute.xlu0 %3932
      %3934 = vrot.lane.b32.xlu0 %v3267, 28
      %v3935 = vpop.permute.xlu0 %3934
      %3936 = vrot.lane.b32.xlu0 %v3875, 28
      %v3937 = vpop.permute.xlu0 %3936
      %3938 = vrot.lane.b32.xlu0 %v3878, 28
      %v3939 = vpop.permute.xlu0 %3938
      %3940 = vrot.lane.b32.xlu0 %v3884, 28
      %v3941 = vpop.permute.xlu0 %3940
      %3942 = vrot.lane.b32.xlu0 %v3892, 28
      %v3943 = vpop.permute.xlu0 %3942
      %3944 = vrot.lane.b32.xlu0 %v3895, 28
      %v3945 = vpop.permute.xlu0 %3944
      %v3948 = vrot.slane %v3078, 1
      %v3949 = vsel %vm660, %v3948, %v3361
      %v3950 = vrot.slane %v3072, 1
      %v3951 = vsel %vm660, %v3399, %v3950
      %v3952 = vrot.slane %v3073, 1
      %v3953 = vsel %vm660, %v3950, %v3952
      %v3954 = vrot.slane %v3076, 1
      %v3955 = vsel %vm660, %v3952, %v3954
      %v3956 = vrot.slane %v3079, 1
      %v3957 = vsel %vm660, %v3954, %v3956
      %3958 = vrot.lane.b32.xlu0 %v3949, 32
      %v3959 = vpop.permute.xlu0 %3958
      %3960 = vrot.lane.b32.xlu0 %v3364, 32
      %v3961 = vpop.permute.xlu0 %3960
      %3962 = vrot.lane.b32.xlu0 %v3366, 32
      %v3963 = vpop.permute.xlu0 %3962
      %3964 = vrot.lane.b32.xlu0 %v3368, 32
      %v3965 = vpop.permute.xlu0 %3964
      %3966 = vrot.lane.b32.xlu0 %v3370, 32
      %v3967 = vpop.permute.xlu0 %3966
      %3968 = vrot.lane.b32.xlu0 %v3372, 32
      %v3969 = vpop.permute.xlu0 %3968
      %3970 = vrot.lane.b32.xlu0 %v3374, 32
      %v3971 = vpop.permute.xlu0 %3970
      %3972 = vrot.lane.b32.xlu0 %v3376, 32
      %v3973 = vpop.permute.xlu0 %3972
      %3974 = vrot.lane.b32.xlu0 %v3378, 32
      %v3975 = vpop.permute.xlu0 %3974
      %3976 = vrot.lane.b32.xlu0 %v3380, 32
      %v3977 = vpop.permute.xlu0 %3976
      %3978 = vrot.lane.b32.xlu0 %v3382, 32
      %v3979 = vpop.permute.xlu0 %3978
      %3980 = vrot.lane.b32.xlu0 %v3384, 32
      %v3981 = vpop.permute.xlu0 %3980
      %3982 = vrot.lane.b32.xlu0 %v3386, 32
      %v3983 = vpop.permute.xlu0 %3982
      %3984 = vrot.lane.b32.xlu0 %v3388, 32
      %v3985 = vpop.permute.xlu0 %3984
      %3986 = vrot.lane.b32.xlu0 %v3390, 32
      %v3987 = vpop.permute.xlu0 %3986
      %3988 = vrot.lane.b32.xlu0 %v3392, 32
      %v3989 = vpop.permute.xlu0 %3988
      %3990 = vrot.lane.b32.xlu0 %v3394, 32
      %v3991 = vpop.permute.xlu0 %3990
      %3992 = vrot.lane.b32.xlu0 %v3396, 32
      %v3993 = vpop.permute.xlu0 %3992
      %3994 = vrot.lane.b32.xlu0 %v3398, 32
      %v3995 = vpop.permute.xlu0 %3994
      %3996 = vrot.lane.b32.xlu0 %v3400, 32
      %v3997 = vpop.permute.xlu0 %3996
      %3998 = vrot.lane.b32.xlu0 %v3951, 32
      %v3999 = vpop.permute.xlu0 %3998
      %4000 = vrot.lane.b32.xlu0 %v3953, 32
      %v4001 = vpop.permute.xlu0 %4000
      %4002 = vrot.lane.b32.xlu0 %v3955, 32
      %v4003 = vpop.permute.xlu0 %4002
      %4004 = vrot.lane.b32.xlu0 %v3957, 32
      %v4005 = vpop.permute.xlu0 %4004
      %4006 = vrot.lane.b32.xlu0 %v3956, 32
      %v4007 = vpop.permute.xlu0 %4006
      %v4010 = vsel %vm1381, %v3044, %v3280
      %v4012 = vsel %vm1381, %v3045, %v3282
      %v4014 = vsel %vm1381, %v3046, %v3284
      %v4016 = vsel %vm1381, %v3047, %v3286
      %v4018 = vsel %vm1381, %v3048, %v3288
      %v4020 = vsel %vm1381, %v3049, %v3290
      %v4022 = vsel %vm1381, %v3050, %v3292
      %v4024 = vsel %vm1381, %v3051, %v3294
      %v4026 = vsel %vm1381, %v3052, %v3296
      %v4028 = vsel %vm1381, %v3053, %v3298
      %v4030 = vsel %vm1381, %v3054, %v3300
      %v4032 = vsel %vm1381, %v3055, %v3302
      %v4034 = vsel %vm1381, %v3056, %v3304
      %v4036 = vsel %vm1381, %v3057, %v3306
      %v4038 = vsel %vm1381, %v3058, %v3308
      %v4040 = vsel %vm1381, %v3059, %v3310
      %v4042 = vsel %vm1381, %v3060, %v3312
      %v4044 = vsel %vm1381, %v3061, %v3314
      %v4046 = vsel %vm1381, %v3062, %v3316
      %v4048 = vsel %vm1381, %v3063, %v3318
      %v4050 = vsel %vm1381, %v3064, %v3320
      %v4052 = vsel %vm1381, %v3065, %v3322
      %v4054 = vsel %vm1381, %v3066, %v3324
      %v4056 = vsel %vm1381, %v3067, %v3326
      %v4058 = vsel %vm1381, %v3068, %v3328
      %v4060 = vsel %vm1430, %v4010, %v3404
      %v4062 = vsel %vm1430, %v4012, %v3406
      %v4064 = vsel %vm1430, %v4014, %v3408
      %v4066 = vsel %vm1430, %v4016, %v3410
      %v4068 = vsel %vm1430, %v4018, %v3412
      %v4070 = vsel %vm1430, %v4020, %v3414
      %v4072 = vsel %vm1430, %v4022, %v3416
      %v4074 = vsel %vm1430, %v4024, %v3418
      %v4076 = vsel %vm1430, %v4026, %v3420
      %v4078 = vsel %vm1430, %v4028, %v3422
      %v4080 = vsel %vm1430, %v4030, %v3424
      %v4082 = vsel %vm1430, %v4032, %v3426
      %v4084 = vsel %vm1430, %v4034, %v3428
      %v4086 = vsel %vm1430, %v4036, %v3430
      %v4088 = vsel %vm1430, %v4038, %v3432
      %v4090 = vsel %vm1430, %v4040, %v3434
      %v4092 = vsel %vm1430, %v4042, %v3436
      %v4094 = vsel %vm1430, %v4044, %v3438
      %v4096 = vsel %vm1430, %v4046, %v3440
      %v4098 = vsel %vm1430, %v4048, %v3442
      %v4100 = vsel %vm1430, %v4050, %v3444
      %v4102 = vsel %vm1430, %v4052, %v3446
      %v4104 = vsel %vm1430, %v4054, %v3448
      %v4106 = vsel %vm1430, %v4056, %v3450
      %v4108 = vsel %vm1430, %v4058, %v3452
      %v4110 = vsel %vm1479, %v4060, %v3507
      %v4112 = vsel %vm1479, %v4062, %v3509
      %v4114 = vsel %vm1479, %v4064, %v3511
      %v4116 = vsel %vm1479, %v4066, %v3513
      %v4118 = vsel %vm1479, %v4068, %v3515
      %v4120 = vsel %vm1479, %v4070, %v3517
      %v4122 = vsel %vm1479, %v4072, %v3519
      %v4124 = vsel %vm1479, %v4074, %v3521
      %v4126 = vsel %vm1479, %v4076, %v3523
      %v4128 = vsel %vm1479, %v4078, %v3525
      %v4130 = vsel %vm1479, %v4080, %v3527
      %v4132 = vsel %vm1479, %v4082, %v3529
      %v4134 = vsel %vm1479, %v4084, %v3531
      %v4136 = vsel %vm1479, %v4086, %v3533
      %v4138 = vsel %vm1479, %v4088, %v3535
      %v4140 = vsel %vm1479, %v4090, %v3537
      %v4142 = vsel %vm1479, %v4092, %v3539
      %v4144 = vsel %vm1479, %v4094, %v3541
      %v4146 = vsel %vm1479, %v4096, %v3543
      %v4148 = vsel %vm1479, %v4098, %v3545
      %v4150 = vsel %vm1479, %v4100, %v3547
      %v4152 = vsel %vm1479, %v4102, %v3549
      %v4154 = vsel %vm1479, %v4104, %v3551
      %v4156 = vsel %vm1479, %v4106, %v3553
      %v4158 = vsel %vm1479, %v4108, %v3555
      %v4160 = vsel %vm1528, %v4110, %v3663
      %v4162 = vsel %vm1528, %v4112, %v3665
      %v4164 = vsel %vm1528, %v4114, %v3667
      %v4166 = vsel %vm1528, %v4116, %v3669
      %v4168 = vsel %vm1528, %v4118, %v3671
      %v4170 = vsel %vm1528, %v4120, %v3673
      %v4172 = vsel %vm1528, %v4122, %v3675
      %v4174 = vsel %vm1528, %v4124, %v3677
      %v4176 = vsel %vm1528, %v4126, %v3679
      %v4178 = vsel %vm1528, %v4128, %v3681
      %v4180 = vsel %vm1528, %v4130, %v3683
      %v4182 = vsel %vm1528, %v4132, %v3685
      %v4184 = vsel %vm1528, %v4134, %v3687
      %v4186 = vsel %vm1528, %v4136, %v3689
      %v4188 = vsel %vm1528, %v4138, %v3691
      %v4190 = vsel %vm1528, %v4140, %v3693
      %v4192 = vsel %vm1528, %v4142, %v3695
      %v4194 = vsel %vm1528, %v4144, %v3697
      %v4196 = vsel %vm1528, %v4146, %v3699
      %v4198 = vsel %vm1528, %v4148, %v3701
      %v4200 = vsel %vm1528, %v4150, %v3703
      %v4202 = vsel %vm1528, %v4152, %v3705
      %v4204 = vsel %vm1528, %v4154, %v3707
      %v4206 = vsel %vm1528, %v4156, %v3709
      %v4208 = vsel %vm1528, %v4158, %v3711
      %v4210 = vsel %vm1577, %v4160, %v3764
      %v4212 = vsel %vm1577, %v4162, %v3766
      %v4214 = vsel %vm1577, %v4164, %v3768
      %v4216 = vsel %vm1577, %v4166, %v3770
      %v4218 = vsel %vm1577, %v4168, %v3772
      %v4220 = vsel %vm1577, %v4170, %v3774
      %v4222 = vsel %vm1577, %v4172, %v3776
      %v4224 = vsel %vm1577, %v4174, %v3778
      %v4226 = vsel %vm1577, %v4176, %v3780
      %v4228 = vsel %vm1577, %v4178, %v3782
      %v4230 = vsel %vm1577, %v4180, %v3784
      %v4232 = vsel %vm1577, %v4182, %v3786
      %v4234 = vsel %vm1577, %v4184, %v3788
      %v4236 = vsel %vm1577, %v4186, %v3790
      %v4238 = vsel %vm1577, %v4188, %v3792
      %v4240 = vsel %vm1577, %v4190, %v3794
      %v4242 = vsel %vm1577, %v4192, %v3796
      %v4244 = vsel %vm1577, %v4194, %v3798
      %v4246 = vsel %vm1577, %v4196, %v3800
      %v4248 = vsel %vm1577, %v4198, %v3802
      %v4250 = vsel %vm1577, %v4200, %v3804
      %v4252 = vsel %vm1577, %v4202, %v3806
      %v4254 = vsel %vm1577, %v4204, %v3808
      %v4256 = vsel %vm1577, %v4206, %v3810
      %v4258 = vsel %vm1577, %v4208, %v3812
      %v4260 = vsel %vm1626, %v4210, %v3817
      %v4262 = vsel %vm1626, %v4212, %v3819
      %v4264 = vsel %vm1626, %v4214, %v3821
      %v4266 = vsel %vm1626, %v4216, %v3823
      %v4268 = vsel %vm1626, %v4218, %v3825
      %v4270 = vsel %vm1626, %v4220, %v3827
      %v4272 = vsel %vm1626, %v4222, %v3829
      %v4274 = vsel %vm1626, %v4224, %v3831
      %v4276 = vsel %vm1626, %v4226, %v3833
      %v4278 = vsel %vm1626, %v4228, %v3835
      %v4280 = vsel %vm1626, %v4230, %v3837
      %v4282 = vsel %vm1626, %v4232, %v3839
      %v4284 = vsel %vm1626, %v4234, %v3841
      %v4286 = vsel %vm1626, %v4236, %v3843
      %v4288 = vsel %vm1626, %v4238, %v3845
      %v4290 = vsel %vm1626, %v4240, %v3847
      %v4292 = vsel %vm1626, %v4242, %v3849
      %v4294 = vsel %vm1626, %v4244, %v3851
      %v4296 = vsel %vm1626, %v4246, %v3853
      %v4298 = vsel %vm1626, %v4248, %v3855
      %v4300 = vsel %vm1626, %v4250, %v3857
      %v4302 = vsel %vm1626, %v4252, %v3859
      %v4304 = vsel %vm1626, %v4254, %v3861
      %v4306 = vsel %vm1626, %v4256, %v3863
      %v4308 = vsel %vm1626, %v4258, %v3865
      %v4310 = vsel %vm1675, %v4260, %v3897
      %v4312 = vsel %vm1675, %v4262, %v3899
      %v4314 = vsel %vm1675, %v4264, %v3901
      %v4316 = vsel %vm1675, %v4266, %v3903
      %v4318 = vsel %vm1675, %v4268, %v3905
      %v4320 = vsel %vm1675, %v4270, %v3907
      %v4322 = vsel %vm1675, %v4272, %v3909
      %v4324 = vsel %vm1675, %v4274, %v3911
      %v4326 = vsel %vm1675, %v4276, %v3913
      %v4328 = vsel %vm1675, %v4278, %v3915
      %v4330 = vsel %vm1675, %v4280, %v3917
      %v4332 = vsel %vm1675, %v4282, %v3919
      %v4334 = vsel %vm1675, %v4284, %v3921
      %v4336 = vsel %vm1675, %v4286, %v3923
      %v4338 = vsel %vm1675, %v4288, %v3925
      %v4340 = vsel %vm1675, %v4290, %v3927
      %v4342 = vsel %vm1675, %v4292, %v3929
      %v4344 = vsel %vm1675, %v4294, %v3931
      %v4346 = vsel %vm1675, %v4296, %v3933
      %v4348 = vsel %vm1675, %v4298, %v3935
      %v4350 = vsel %vm1675, %v4300, %v3937
      %v4352 = vsel %vm1675, %v4302, %v3939
      %v4354 = vsel %vm1675, %v4304, %v3941
      %v4356 = vsel %vm1675, %v4306, %v3943
      %v4358 = vsel %vm1675, %v4308, %v3945
      %v4360 = vsel %vm1724, %v4310, %v3959
      %v4362 = vsel %vm1724, %v4312, %v3961
      %v4364 = vsel %vm1724, %v4314, %v3963
      %v4366 = vsel %vm1724, %v4316, %v3965
      %v4368 = vsel %vm1724, %v4318, %v3967
      %v4370 = vsel %vm1724, %v4320, %v3969
      %v4372 = vsel %vm1724, %v4322, %v3971
      %v4374 = vsel %vm1724, %v4324, %v3973
      %v4376 = vsel %vm1724, %v4326, %v3975
      %v4378 = vsel %vm1724, %v4328, %v3977
      %v4380 = vsel %vm1724, %v4330, %v3979
      %v4382 = vsel %vm1724, %v4332, %v3981
      %v4384 = vsel %vm1724, %v4334, %v3983
      %v4386 = vsel %vm1724, %v4336, %v3985
      %v4388 = vsel %vm1724, %v4338, %v3987
      %v4390 = vsel %vm1724, %v4340, %v3989
      %v4392 = vsel %vm1724, %v4342, %v3991
      %v4394 = vsel %vm1724, %v4344, %v3993
      %v4396 = vsel %vm1724, %v4346, %v3995
      %v4398 = vsel %vm1724, %v4348, %v3997
      %v4400 = vsel %vm1724, %v4350, %v3999
      %v4402 = vsel %vm1724, %v4352, %v4001
      %v4404 = vsel %vm1724, %v4354, %v4003
      %v4406 = vsel %vm1724, %v4356, %v4005
      %v4408 = vsel %vm1724, %v4358, %v4007
      %v4409 = vld [vmem:[%s3] sm:$0xf]
      %v4410 = vld [vmem:[%s3 + $0x4] sm:$0xf]
      %v4411 = vld [vmem:[%s3 + $0x8] sm:$0xf]
      %v4412 = vld [vmem:[%s3 + $0xc] sm:$0xf]
      %v4413 = vld [vmem:[%s3 + $0x10] sm:$0x3]
      %v4414 = vld [vmem:[%s220 + $0xc] sm:$0xf]
      %v4415 = vld [vmem:[%s220 + $0x10] sm:$0xf]
      %v4416 = vld [vmem:[%s220 + $0x14] sm:$0xf]
      %v4417 = vld [vmem:[%s220 + $0x18] sm:$0xf]
      %v4418 = vld [vmem:[%s220 + $0x1c] sm:$0xf]
      %v4419 = vld [vmem:[%s220 + $0x20] sm:$0xf]
      %v4420 = vld [vmem:[%s220 + $0x24] sm:$0xf]
      %v4421 = vld [vmem:[%s220 + $0x28] sm:$0xf]
      %v4422 = vld [vmem:[%s220 + $0x2c] sm:$0xf]
      %v4423 = vld [vmem:[%s220 + $0x30] sm:$0xf]
      %v4424 = vld [vmem:[%s220 + $0x34] sm:$0xf]
      %v4425 = vld [vmem:[%s220 + $0x38] sm:$0xf]
      %v4426 = vld [vmem:[%s220 + $0x3c] sm:$0xf]
      %v4427 = vld [vmem:[%s220 + $0x40] sm:$0xf]
      %v4428 = vld [vmem:[%s220 + $0x44] sm:$0xf]
      %v4429 = vld [vmem:[%s220 + $0x48] sm:$0xf]
      %v4430 = vld [vmem:[%s220 + $0x4c] sm:$0xf]
      %v4431 = vld [vmem:[%s220 + $0x50] sm:$0xf]
      %v4432 = vld [vmem:[%s220 + $0x54] sm:$0xf]
      %v4433 = vld [vmem:[%s220 + $0x58] sm:$0xf]
      %v4434 = vld [vmem:[%s220 + $0x5c] sm:$0xf]
      %v4435 = vld [vmem:[%s220 + $0x60] sm:$0xf]
      %v4436 = vld [vmem:[%s220 + $0x64] sm:$0xf]
      %v4437 = vld [vmem:[%s220 + $0x68] sm:$0xf]
      %v4438 = vld [vmem:[%s220 + $0x6c] sm:$0xf]
      %v4439 = vld [vmem:[%s220 + $0x70] sm:$0xf]
      %v4440 = vld [vmem:[%s220 + $0x74] sm:$0xf]
      %v4441 = vld [vmem:[%s220 + $0x78] sm:$0xf]
      %v4442 = vld [vmem:[%s220 + $0x7c] sm:$0xf]
      %v4443 = vld [vmem:[%s220 + $0x80] sm:$0xf]
      %v4444 = vld [vmem:[%s220 + $0x84] sm:$0xf]
      %v4445 = vld [vmem:[%s220 + $0x88] sm:$0xf]
      %v4446 = vld [vmem:[%s220 + $0x8c] sm:$0xf]
      %v4447 = vld [vmem:[%s220 + $0x90] sm:$0xf]
      %v4448 = vld [vmem:[%s220 + $0x94] sm:$0xf]
      %v4449 = vld [vmem:[%s220 + $0x98] sm:$0xf]
      %v4450 = vld [vmem:[%s220 + $0x9c] sm:$0xf]
      %v4451 = vld [vmem:[%s220 + $0xa0] sm:$0xf]
      %v4452 = vld [vmem:[%s220 + $0xa4] sm:$0xf]
      %v4453 = vld [vmem:[%s220 + $0xa8] sm:$0xf]
      %v4454 = vld [vmem:[%s220 + $0xac] sm:$0xf]
      %v4455 = vld [vmem:[%s220 + $0xb0] sm:$0xf]
      %v4456 = vld [vmem:[%s220 + $0xb4] sm:$0xf]
      %v4457 = vld [vmem:[%s220 + $0xb8] sm:$0xf]
      %v4458 = vld [vmem:[%s220 + $0xbc] sm:$0xf]
      %v4459 = vld [vmem:[%s220 + $0xc0] sm:$0xf]
      %v4460 = vld [vmem:[%s220 + $0xc4] sm:$0xf]
      %v4461 = vld [vmem:[%s220 + $0xc8] sm:$0xf]
      %v4462 = vld [vmem:[%s220 + $0xcc] sm:$0x1]
      %v4463 = vunpack.c.l.bf16 %v4414
      %v4464 = vunpack.c.l.bf16 %v4415
      %v4465 = vunpack.c.l.bf16 %v4416
      %v4466 = vunpack.c.l.bf16 %v4417
      %v4467 = vunpack.c.l.bf16 %v4418
      %v4468 = vunpack.c.l.bf16 %v4419
      %v4469 = vunpack.c.l.bf16 %v4420
      %v4470 = vunpack.c.l.bf16 %v4421
      %v4471 = vunpack.c.l.bf16 %v4422
      %v4472 = vunpack.c.l.bf16 %v4423
      %v4473 = vunpack.c.l.bf16 %v4424
      %v4474 = vunpack.c.l.bf16 %v4425
      %v4475 = vunpack.c.l.bf16 %v4426
      %v4476 = vunpack.c.l.bf16 %v4427
      %v4477 = vunpack.c.l.bf16 %v4428
      %v4478 = vunpack.c.l.bf16 %v4429
      %v4479 = vunpack.c.l.bf16 %v4430
      %v4480 = vunpack.c.l.bf16 %v4431
      %v4481 = vunpack.c.l.bf16 %v4432
      %v4482 = vunpack.c.l.bf16 %v4433
      %v4483 = vunpack.c.l.bf16 %v4434
      %v4484 = vunpack.c.l.bf16 %v4435
      %v4485 = vunpack.c.l.bf16 %v4436
      %v4486 = vunpack.c.l.bf16 %v4437
      %v4487 = vunpack.c.l.bf16 %v4438
      %v4488 = vunpack.c.l.bf16 %v4439
      %v4489 = vunpack.c.l.bf16 %v4440
      %v4490 = vunpack.c.l.bf16 %v4441
      %v4491 = vunpack.c.l.bf16 %v4442
      %v4492 = vunpack.c.l.bf16 %v4443
      %v4493 = vunpack.c.l.bf16 %v4444
      %v4494 = vunpack.c.l.bf16 %v4445
      %v4495 = vunpack.c.l.bf16 %v4446
      %v4496 = vunpack.c.l.bf16 %v4447
      %v4497 = vunpack.c.l.bf16 %v4448
      %v4498 = vunpack.c.l.bf16 %v4449
      %v4499 = vunpack.c.l.bf16 %v4450
      %v4500 = vunpack.c.l.bf16 %v4451
      %v4501 = vunpack.c.l.bf16 %v4452
      %v4502 = vunpack.c.l.bf16 %v4453
      %v4503 = vunpack.c.l.bf16 %v4454
      %v4504 = vunpack.c.l.bf16 %v4455
      %v4505 = vunpack.c.l.bf16 %v4456
      %v4506 = vunpack.c.l.bf16 %v4457
      %v4507 = vunpack.c.l.bf16 %v4458
      %v4508 = vunpack.c.l.bf16 %v4459
      %v4509 = vunpack.c.l.bf16 %v4460
      %v4510 = vunpack.c.l.bf16 %v4461
      %v4511 = vunpack.c.l.bf16 %v4462
      %v4512 = vld [vmem:[%s4] sm:$0x1]
      %v4514 = vlaneseq
      %v4515 = vshrl.u32 %v4514, 7
      %v4516 = vsub.s32 0, %v4515
      %v4517 = vrot.slane %v4512, %v4516
      %vm4519 = vsmask.f32 4352
      %v4520 = vshrl.u32 %v4360, 16
      %v4522 = vrot.slane %v4520, 3
      %v4523 = vshll.u32 %v4360, 16
      %v4525 = vrot.slane %v4523, 4
      %v4526 = vor.u32 %v4522, %v4525
      %v4527 = vshrl.u32 %v4362, 16
      %v4529 = vrot.slane %v4527, 3
      %v4530 = vshll.u32 %v4362, 16
      %v4532 = vrot.slane %v4530, 4
      %v4533 = vor.u32 %v4529, %v4532
      %v4534 = vsel %vm4519, %v4526, %v4533
      %v4535 = vshrl.u32 %v4364, 16
      %v4537 = vrot.slane %v4535, 3
      %v4538 = vshll.u32 %v4364, 16
      %v4540 = vrot.slane %v4538, 4
      %v4541 = vor.u32 %v4537, %v4540
      %v4542 = vsel %vm4519, %v4533, %v4541
      %v4543 = vshrl.u32 %v4366, 16
      %v4545 = vrot.slane %v4543, 3
      %v4546 = vshll.u32 %v4366, 16
      %v4548 = vrot.slane %v4546, 4
      %v4549 = vor.u32 %v4545, %v4548
      %v4550 = vsel %vm4519, %v4541, %v4549
      %v4551 = vshrl.u32 %v4368, 16
      %v4553 = vrot.slane %v4551, 3
      %v4554 = vshll.u32 %v4368, 16
      %v4556 = vrot.slane %v4554, 4
      %v4557 = vor.u32 %v4553, %v4556
      %v4558 = vsel %vm4519, %v4549, %v4557
      %v4559 = vshrl.u32 %v4370, 16
      %v4561 = vrot.slane %v4559, 3
      %v4562 = vshll.u32 %v4370, 16
      %v4564 = vrot.slane %v4562, 4
      %v4565 = vor.u32 %v4561, %v4564
      %v4566 = vsel %vm4519, %v4557, %v4565
      %v4567 = vshrl.u32 %v4372, 16
      %v4569 = vrot.slane %v4567, 3
      %v4570 = vshll.u32 %v4372, 16
      %v4572 = vrot.slane %v4570, 4
      %v4573 = vor.u32 %v4569, %v4572
      %v4574 = vsel %vm4519, %v4565, %v4573
      %v4575 = vshrl.u32 %v4374, 16
      %v4577 = vrot.slane %v4575, 3
      %v4578 = vshll.u32 %v4374, 16
      %v4580 = vrot.slane %v4578, 4
      %v4581 = vor.u32 %v4577, %v4580
      %v4582 = vsel %vm4519, %v4573, %v4581
      %v4583 = vshrl.u32 %v4376, 16
      %v4585 = vrot.slane %v4583, 3
      %v4586 = vshll.u32 %v4376, 16
      %v4588 = vrot.slane %v4586, 4
      %v4589 = vor.u32 %v4585, %v4588
      %v4590 = vsel %vm4519, %v4581, %v4589
      %v4591 = vshrl.u32 %v4378, 16
      %v4593 = vrot.slane %v4591, 3
      %v4594 = vshll.u32 %v4378, 16
      %v4596 = vrot.slane %v4594, 4
      %v4597 = vor.u32 %v4593, %v4596
      %v4598 = vsel %vm4519, %v4589, %v4597
      %v4599 = vshrl.u32 %v4380, 16
      %v4601 = vrot.slane %v4599, 3
      %v4602 = vshll.u32 %v4380, 16
      %v4604 = vrot.slane %v4602, 4
      %v4605 = vor.u32 %v4601, %v4604
      %v4606 = vsel %vm4519, %v4597, %v4605
      %v4607 = vshrl.u32 %v4382, 16
      %v4609 = vrot.slane %v4607, 3
      %v4610 = vshll.u32 %v4382, 16
      %v4612 = vrot.slane %v4610, 4
      %v4613 = vor.u32 %v4609, %v4612
      %v4614 = vsel %vm4519, %v4605, %v4613
      %v4615 = vshrl.u32 %v4384, 16
      %v4617 = vrot.slane %v4615, 3
      %v4618 = vshll.u32 %v4384, 16
      %v4620 = vrot.slane %v4618, 4
      %v4621 = vor.u32 %v4617, %v4620
      %v4622 = vsel %vm4519, %v4613, %v4621
      %v4623 = vshrl.u32 %v4386, 16
      %v4625 = vrot.slane %v4623, 3
      %v4626 = vshll.u32 %v4386, 16
      %v4628 = vrot.slane %v4626, 4
      %v4629 = vor.u32 %v4625, %v4628
      %v4630 = vsel %vm4519, %v4621, %v4629
      %v4631 = vshrl.u32 %v4388, 16
      %v4633 = vrot.slane %v4631, 3
      %v4634 = vshll.u32 %v4388, 16
      %v4636 = vrot.slane %v4634, 4
      %v4637 = vor.u32 %v4633, %v4636
      %v4638 = vsel %vm4519, %v4629, %v4637
      %v4639 = vshrl.u32 %v4390, 16
      %v4641 = vrot.slane %v4639, 3
      %v4642 = vshll.u32 %v4390, 16
      %v4644 = vrot.slane %v4642, 4
      %v4645 = vor.u32 %v4641, %v4644
      %v4646 = vsel %vm4519, %v4637, %v4645
      %v4647 = vshrl.u32 %v4392, 16
      %v4649 = vrot.slane %v4647, 3
      %v4650 = vshll.u32 %v4392, 16
      %v4652 = vrot.slane %v4650, 4
      %v4653 = vor.u32 %v4649, %v4652
      %v4654 = vsel %vm4519, %v4645, %v4653
      %v4655 = vshrl.u32 %v4394, 16
      %v4657 = vrot.slane %v4655, 3
      %v4658 = vshll.u32 %v4394, 16
      %v4660 = vrot.slane %v4658, 4
      %v4661 = vor.u32 %v4657, %v4660
      %v4662 = vsel %vm4519, %v4653, %v4661
      %v4663 = vshrl.u32 %v4396, 16
      %v4665 = vrot.slane %v4663, 3
      %v4666 = vshll.u32 %v4396, 16
      %v4668 = vrot.slane %v4666, 4
      %v4669 = vor.u32 %v4665, %v4668
      %v4670 = vsel %vm4519, %v4661, %v4669
      %v4671 = vshrl.u32 %v4398, 16
      %v4673 = vrot.slane %v4671, 3
      %v4674 = vshll.u32 %v4398, 16
      %v4676 = vrot.slane %v4674, 4
      %v4677 = vor.u32 %v4673, %v4676
      %v4678 = vsel %vm4519, %v4669, %v4677
      %v4679 = vshrl.u32 %v4400, 16
      %v4681 = vrot.slane %v4679, 3
      %v4682 = vshll.u32 %v4400, 16
      %v4684 = vrot.slane %v4682, 4
      %v4685 = vor.u32 %v4681, %v4684
      %v4686 = vsel %vm4519, %v4677, %v4685
      %v4687 = vshrl.u32 %v4402, 16
      %v4689 = vrot.slane %v4687, 3
      %v4690 = vshll.u32 %v4402, 16
      %v4692 = vrot.slane %v4690, 4
      %v4693 = vor.u32 %v4689, %v4692
      %v4694 = vsel %vm4519, %v4685, %v4693
      %v4695 = vshrl.u32 %v4404, 16
      %v4697 = vrot.slane %v4695, 3
      %v4698 = vshll.u32 %v4404, 16
      %v4700 = vrot.slane %v4698, 4
      %v4701 = vor.u32 %v4697, %v4700
      %v4702 = vsel %vm4519, %v4693, %v4701
      %v4703 = vshrl.u32 %v4406, 16
      %v4705 = vrot.slane %v4703, 3
      %v4706 = vshll.u32 %v4406, 16
      %v4708 = vrot.slane %v4706, 4
      %v4709 = vor.u32 %v4705, %v4708
      %v4710 = vsel %vm4519, %v4701, %v4709
      %v4711 = vshrl.u32 %v4408, 16
      %v4713 = vrot.slane %v4711, 3
      %v4714 = vshll.u32 %v4408, 16
      %v4716 = vrot.slane %v4714, 4
      %v4717 = vor.u32 %v4713, %v4716
      %v4718 = vsel %vm4519, %v4709, %v4717
      %v4724 = vunpack.c.l.b16 %v4409
      %v4725 = vunpack.c.l.b16 %v4410
      %v4726 = vunpack.c.l.b16 %v4411
      %v4727 = vunpack.c.l.b16 %v4412
      %v4728 = vunpack.c.l.b16 %v4413
      %v4729 = vpack.c.b16 %v4725, %v4724
      %v4730 = vpack.c.b16 %v4727, %v4726
      %v4731 = vpack.c.b16 %v4728, %v4728
      %v4735 = vsel %vm2521, %v4534, 0
      %v4738 = vsel %vm2521, %v4542, 0
      %v4741 = vsel %vm2521, %v4550, 0
      %v4744 = vsel %vm2521, %v4558, 0
      %v4747 = vsel %vm2521, %v4566, 0
      %v4750 = vsel %vm2521, %v4574, 0
      %v4753 = vsel %vm2521, %v4582, 0
      %v4756 = vsel %vm2521, %v4590, 0
      %v4759 = vsel %vm2521, %v4598, 0
      %v4762 = vsel %vm2521, %v4606, 0
      %v4765 = vsel %vm2521, %v4614, 0
      %v4768 = vsel %vm2521, %v4622, 0
      %v4771 = vsel %vm2521, %v4630, 0
      %v4774 = vsel %vm2521, %v4638, 0
      %v4777 = vsel %vm2521, %v4646, 0
      %v4780 = vsel %vm2521, %v4654, 0
      %v4783 = vsel %vm2521, %v4662, 0
      %v4786 = vsel %vm2521, %v4670, 0
      %v4789 = vsel %vm2521, %v4678, 0
      %v4792 = vsel %vm2521, %v4686, 0
      %v4795 = vsel %vm2521, %v4694, 0
      %v4798 = vsel %vm2521, %v4702, 0
      %v4801 = vsel %vm2521, %v4710, 0
      %v4804 = vsel %vm2521, %v4718, 0
      %v4807 = vsel %vm2570, %v4731, 0
      %4809 = vmatprep.subr.bf16.mxu0 0
      %4810 = vmatpush1.bf16.msra.mxu0 %v4729
      %4811 = vmatprep.subr.bf16.mxu0 0
      %4812 = vmatpush1.bf16.msra.mxu0 %v4730
      %4813 = vmatprep.subr.bf16.mxu0 0
      %4814 = vmatpush1.bf16.msra.mxu0 %v4807
      %4815 = vmatprep.subr.bf16.mxu0 0
      %4816 = vmatpush1.bf16.msra.mxu0 0
      %4817 = vmatprep.subr.bf16.mxu0 0
      %4818 = vmatpush1.bf16.msra.mxu0 0
      %4819 = vmatprep.subr.bf16.mxu0 0
      %4820 = vmatpush1.bf16.msra.mxu0 0
      %4821 = vmatprep.subr.bf16.mxu0 0
      %4822 = vmatpush1.bf16.msra.mxu0 0
      %4823 = vmatprep.subr.bf16.mxu0 0
      %4824 = vmatpush1.bf16.msra.mxu0 0
      %4825 = vmatprep.subr.bf16.mxu0 0
      %4826 = vmatpush1.bf16.msra.mxu0 0
      %4827 = vmatprep.subr.bf16.mxu0 0
      %4828 = vmatpush1.bf16.msra.mxu0 0
      %4829 = vmatprep.subr.bf16.mxu0 0
      %4830 = vmatpush1.bf16.msra.mxu0 0
      %4831 = vmatprep.subr.bf16.mxu0 0
      %4832 = vmatpush1.bf16.msra.mxu0 0
      %4833 = vmatprep.subr.bf16.mxu0 0
      %4834 = vmatpush1.bf16.msra.mxu0 0
      %4835 = vmatprep.subr.bf16.mxu0 0
      %4836 = vmatpush1.bf16.msra.mxu0 0
      %4837 = vmatprep.subr.bf16.mxu0 0
      %4838 = vmatpush1.bf16.msra.mxu0 0
      %4839 = vmatprep.subr.bf16.mxu0 0
      %4840 = vmatpush1.bf16.msra.mxu0 0
      %4841 = vmatprep.mubr.bf16.mxu0 0
      %4842 = vmatmul.mubr.bf16.gmra.mrb[0].mxu0 %v4735
      %v4843 = vpop.f32.mrb[0].mxu0
      %v4844 = vadd.f32 %v4517, %v4843
      %v4845 = vpop.f32.mrb[0].mxu0
      %v4846 = vpop.f32.mrb[0].mxu0
      %v4847 = vadd.f32 %v4517, %v4846
      %v4848 = vpop.f32.mrb[0].mxu0
      %4849 = vmatprep.mubr.bf16.mxu0 0
      %4850 = vmatmul.mubr.bf16.gmra.mrb[0].mxu0 %v4738
      %v4851 = vpop.f32.mrb[0].mxu0
      %v4852 = vadd.f32 %v4517, %v4851
      %v4853 = vpop.f32.mrb[0].mxu0
      %v4854 = vpop.f32.mrb[0].mxu0
      %v4855 = vadd.f32 %v4517, %v4854
      %v4856 = vpop.f32.mrb[0].mxu0
      %4857 = vmatprep.mubr.bf16.mxu0 0
      %4858 = vmatmul.mubr.bf16.gmra.mrb[0].mxu0 %v4741
      %v4859 = vpop.f32.mrb[0].mxu0
      %v4860 = vadd.f32 %v4517, %v4859
      %v4861 = vpop.f32.mrb[0].mxu0
      %v4862 = vpop.f32.mrb[0].mxu0
      %v4863 = vadd.f32 %v4517, %v4862
      %v4864 = vpop.f32.mrb[0].mxu0
      %4865 = vmatprep.mubr.bf16.mxu0 0
      %4866 = vmatmul.mubr.bf16.gmra.mrb[0].mxu0 %v4744
      %v4867 = vpop.f32.mrb[0].mxu0
      %v4868 = vadd.f32 %v4517, %v4867
      %v4869 = vpop.f32.mrb[0].mxu0
      %v4870 = vpop.f32.mrb[0].mxu0
      %v4871 = vadd.f32 %v4517, %v4870
      %v4872 = vpop.f32.mrb[0].mxu0
      %4873 = vmatprep.mubr.bf16.mxu0 0
      %4874 = vmatmul.mubr.bf16.gmra.mrb[0].mxu0 %v4747
      %v4875 = vpop.f32.mrb[0].mxu0
      %v4876 = vadd.f32 %v4517, %v4875
      %v4877 = vpop.f32.mrb[0].mxu0
      %v4878 = vpop.f32.mrb[0].mxu0
      %v4879 = vadd.f32 %v4517, %v4878
      %v4880 = vpop.f32.mrb[0].mxu0
      %4881 = vmatprep.mubr.bf16.mxu0 0
      %4882 = vmatmul.mubr.bf16.gmra.mrb[0].mxu0 %v4750
      %v4883 = vpop.f32.mrb[0].mxu0
      %v4884 = vadd.f32 %v4517, %v4883
      %v4885 = vpop.f32.mrb[0].mxu0
      %v4886 = vpop.f32.mrb[0].mxu0
      %v4887 = vadd.f32 %v4517, %v4886
      %v4888 = vpop.f32.mrb[0].mxu0
      %4889 = vmatprep.mubr.bf16.mxu0 0
      %4890 = vmatmul.mubr.bf16.gmra.mrb[0].mxu0 %v4753
      %v4891 = vpop.f32.mrb[0].mxu0
      %v4892 = vadd.f32 %v4517, %v4891
      %v4893 = vpop.f32.mrb[0].mxu0
      %v4894 = vpop.f32.mrb[0].mxu0
      %v4895 = vadd.f32 %v4517, %v4894
      %v4896 = vpop.f32.mrb[0].mxu0
      %4897 = vmatprep.mubr.bf16.mxu0 0
      %4898 = vmatmul.mubr.bf16.gmra.mrb[0].mxu0 %v4756
      %v4899 = vpop.f32.mrb[0].mxu0
      %v4900 = vadd.f32 %v4517, %v4899
      %v4901 = vpop.f32.mrb[0].mxu0
      %v4902 = vpop.f32.mrb[0].mxu0
      %v4903 = vadd.f32 %v4517, %v4902
      %v4904 = vpop.f32.mrb[0].mxu0
      %4905 = vmatprep.mubr.bf16.mxu0 0
      %4906 = vmatmul.mubr.bf16.gmra.mrb[0].mxu0 %v4759
      %v4907 = vpop.f32.mrb[0].mxu0
      %v4908 = vadd.f32 %v4517, %v4907
      %v4909 = vpop.f32.mrb[0].mxu0
      %v4910 = vpop.f32.mrb[0].mxu0
      %v4911 = vadd.f32 %v4517, %v4910
      %v4912 = vpop.f32.mrb[0].mxu0
      %4913 = vmatprep.mubr.bf16.mxu0 0
      %4914 = vmatmul.mubr.bf16.gmra.mrb[0].mxu0 %v4762
      %v4915 = vpop.f32.mrb[0].mxu0
      %v4916 = vadd.f32 %v4517, %v4915
      %v4917 = vpop.f32.mrb[0].mxu0
      %v4918 = vpop.f32.mrb[0].mxu0
      %v4919 = vadd.f32 %v4517, %v4918
      %v4920 = vpop.f32.mrb[0].mxu0
      %4921 = vmatprep.mubr.bf16.mxu0 0
      %4922 = vmatmul.mubr.bf16.gmra.mrb[0].mxu0 %v4765
      %v4923 = vpop.f32.mrb[0].mxu0
      %v4924 = vadd.f32 %v4517, %v4923
      %v4925 = vpop.f32.mrb[0].mxu0
      %v4926 = vpop.f32.mrb[0].mxu0
      %v4927 = vadd.f32 %v4517, %v4926
      %v4928 = vpop.f32.mrb[0].mxu0
      %4929 = vmatprep.mubr.bf16.mxu0 0
      %4930 = vmatmul.mubr.bf16.gmra.mrb[0].mxu0 %v4768
      %v4931 = vpop.f32.mrb[0].mxu0
      %v4932 = vadd.f32 %v4517, %v4931
      %v4933 = vpop.f32.mrb[0].mxu0
      %v4934 = vpop.f32.mrb[0].mxu0
      %v4935 = vadd.f32 %v4517, %v4934
      %v4936 = vpop.f32.mrb[0].mxu0
      %4937 = vmatprep.mubr.bf16.mxu0 0
      %4938 = vmatmul.mubr.bf16.gmra.mrb[0].mxu0 %v4771
      %v4939 = vpop.f32.mrb[0].mxu0
      %v4940 = vadd.f32 %v4517, %v4939
      %v4941 = vpop.f32.mrb[0].mxu0
      %v4942 = vpop.f32.mrb[0].mxu0
      %v4943 = vadd.f32 %v4517, %v4942
      %v4944 = vpop.f32.mrb[0].mxu0
      %4945 = vmatprep.mubr.bf16.mxu0 0
      %4946 = vmatmul.mubr.bf16.gmra.mrb[0].mxu0 %v4774
      %v4947 = vpop.f32.mrb[0].mxu0
      %v4948 = vadd.f32 %v4517, %v4947
      %v4949 = vpop.f32.mrb[0].mxu0
      %v4950 = vpop.f32.mrb[0].mxu0
      %v4951 = vadd.f32 %v4517, %v4950
      %v4952 = vpop.f32.mrb[0].mxu0
      %4953 = vmatprep.mubr.bf16.mxu0 0
      %4954 = vmatmul.mubr.bf16.gmra.mrb[0].mxu0 %v4777
      %v4955 = vpop.f32.mrb[0].mxu0
      %v4956 = vadd.f32 %v4517, %v4955
      %v4957 = vpop.f32.mrb[0].mxu0
      %v4958 = vpop.f32.mrb[0].mxu0
      %v4959 = vadd.f32 %v4517, %v4958
      %v4960 = vpop.f32.mrb[0].mxu0
      %4961 = vmatprep.mubr.bf16.mxu0 0
      %4962 = vmatmul.mubr.bf16.gmra.mrb[0].mxu0 %v4780
      %v4963 = vpop.f32.mrb[0].mxu0
      %v4964 = vadd.f32 %v4517, %v4963
      %v4965 = vpop.f32.mrb[0].mxu0
      %v4966 = vpop.f32.mrb[0].mxu0
      %v4967 = vadd.f32 %v4517, %v4966
      %v4968 = vpop.f32.mrb[0].mxu0
      %4969 = vmatprep.mubr.bf16.mxu0 0
      %4970 = vmatmul.mubr.bf16.gmra.mrb[0].mxu0 %v4783
      %v4971 = vpop.f32.mrb[0].mxu0
      %v4972 = vadd.f32 %v4517, %v4971
      %v4973 = vpop.f32.mrb[0].mxu0
      %v4974 = vpop.f32.mrb[0].mxu0
      %v4975 = vadd.f32 %v4517, %v4974
      %v4976 = vpop.f32.mrb[0].mxu0
      %4977 = vmatprep.mubr.bf16.mxu0 0
      %4978 = vmatmul.mubr.bf16.gmra.mrb[0].mxu0 %v4786
      %v4979 = vpop.f32.mrb[0].mxu0
      %v4980 = vadd.f32 %v4517, %v4979
      %v4981 = vpop.f32.mrb[0].mxu0
      %v4982 = vpop.f32.mrb[0].mxu0
      %v4983 = vadd.f32 %v4517, %v4982
      %v4984 = vpop.f32.mrb[0].mxu0
      %4985 = vmatprep.mubr.bf16.mxu0 0
      %4986 = vmatmul.mubr.bf16.gmra.mrb[0].mxu0 %v4789
      %v4987 = vpop.f32.mrb[0].mxu0
      %v4988 = vadd.f32 %v4517, %v4987
      %v4989 = vpop.f32.mrb[0].mxu0
      %v4990 = vpop.f32.mrb[0].mxu0
      %v4991 = vadd.f32 %v4517, %v4990
      %v4992 = vpop.f32.mrb[0].mxu0
      %4993 = vmatprep.mubr.bf16.mxu0 0
      %4994 = vmatmul.mubr.bf16.gmra.mrb[0].mxu0 %v4792
      %v4995 = vpop.f32.mrb[0].mxu0
      %v4996 = vadd.f32 %v4517, %v4995
      %v4997 = vpop.f32.mrb[0].mxu0
      %v4998 = vpop.f32.mrb[0].mxu0
      %v4999 = vadd.f32 %v4517, %v4998
      %v5000 = vpop.f32.mrb[0].mxu0
      %5001 = vmatprep.mubr.bf16.mxu0 0
      %5002 = vmatmul.mubr.bf16.gmra.mrb[0].mxu0 %v4795
      %v5003 = vpop.f32.mrb[0].mxu0
      %v5004 = vadd.f32 %v4517, %v5003
      %v5005 = vpop.f32.mrb[0].mxu0
      %v5006 = vpop.f32.mrb[0].mxu0
      %v5007 = vadd.f32 %v4517, %v5006
      %v5008 = vpop.f32.mrb[0].mxu0
      %5009 = vmatprep.mubr.bf16.mxu0 0
      %5010 = vmatmul.mubr.bf16.gmra.mrb[0].mxu0 %v4798
      %v5011 = vpop.f32.mrb[0].mxu0
      %v5012 = vadd.f32 %v4517, %v5011
      %v5013 = vpop.f32.mrb[0].mxu0
      %v5014 = vpop.f32.mrb[0].mxu0
      %v5015 = vadd.f32 %v4517, %v5014
      %v5016 = vpop.f32.mrb[0].mxu0
      %5017 = vmatprep.mubr.bf16.mxu0 0
      %5018 = vmatmul.mubr.bf16.gmra.mrb[0].mxu0 %v4801
      %v5019 = vpop.f32.mrb[0].mxu0
      %v5020 = vadd.f32 %v4517, %v5019
      %v5021 = vpop.f32.mrb[0].mxu0
      %v5022 = vpop.f32.mrb[0].mxu0
      %v5023 = vadd.f32 %v4517, %v5022
      %v5024 = vpop.f32.mrb[0].mxu0
      %5025 = vmatprep.mubr.bf16.mxu0 0
      %5026 = vmatmul.mubr.bf16.gmra.mrb[0].mxu0 %v4804
      %v5027 = vpop.f32.mrb[0].mxu0
      %v5028 = vadd.f32 %v4517, %v5027
      %v5029 = vpop.f32.mrb[0].mxu0
      %v5030 = vpop.f32.mrb[0].mxu0
      %v5031 = vadd.f32 %v4517, %v5030
      %v5032 = vpop.f32.mrb[0].mxu0
      %5033 = vdwg.mxu0
      %vm5083 = vcmask 1046528
      %v5084 = vrot.slane %v4463, 1
      %v5085 = vrot.slane %v4464, 1
      %v5086 = vsel %vm5083, %v5084, %v5085
      %v5087 = vrot.slane %v4465, 1
      %v5088 = vsel %vm5083, %v5085, %v5087
      %v5089 = vrot.slane %v4466, 1
      %v5090 = vsel %vm5083, %v5087, %v5089
      %v5091 = vrot.slane %v4467, 1
      %v5092 = vsel %vm5083, %v5089, %v5091
      %v5093 = vrot.slane %v4468, 1
      %v5094 = vsel %vm5083, %v5091, %v5093
      %v5095 = vrot.slane %v4469, 1
      %v5096 = vsel %vm5083, %v5093, %v5095
      %v5097 = vrot.slane %v4470, 1
      %v5098 = vsel %vm5083, %v5095, %v5097
      %v5099 = vrot.slane %v4471, 1
      %v5100 = vsel %vm5083, %v5097, %v5099
      %v5101 = vrot.slane %v4472, 1
      %v5102 = vsel %vm5083, %v5099, %v5101
      %v5103 = vrot.slane %v4473, 1
      %v5104 = vsel %vm5083, %v5101, %v5103
      %v5105 = vrot.slane %v4474, 1
      %v5106 = vsel %vm5083, %v5103, %v5105
      %v5107 = vrot.slane %v4475, 1
      %v5108 = vsel %vm5083, %v5105, %v5107
      %v5109 = vrot.slane %v4476, 1
      %v5110 = vsel %vm5083, %v5107, %v5109
      %v5111 = vrot.slane %v4477, 1
      %v5112 = vsel %vm5083, %v5109, %v5111
      %v5113 = vrot.slane %v4478, 1
      %v5114 = vsel %vm5083, %v5111, %v5113
      %v5115 = vrot.slane %v4479, 1
      %v5116 = vsel %vm5083, %v5113, %v5115
      %v5117 = vrot.slane %v4480, 1
      %v5118 = vsel %vm5083, %v5115, %v5117
      %v5119 = vrot.slane %v4481, 1
      %v5120 = vsel %vm5083, %v5117, %v5119
      %v5121 = vrot.slane %v4482, 1
      %v5122 = vsel %vm5083, %v5119, %v5121
      %v5123 = vrot.slane %v4483, 1
      %v5124 = vsel %vm5083, %v5121, %v5123
      %v5125 = vrot.slane %v4484, 1
      %v5126 = vsel %vm5083, %v5123, %v5125
      %v5127 = vrot.slane %v4485, 1
      %v5128 = vsel %vm5083, %v5125, %v5127
      %v5129 = vrot.slane %v4486, 1
      %v5130 = vsel %vm5083, %v5127, %v5129
      %v5131 = vrot.slane %v4487, 1
      %v5132 = vsel %vm5083, %v5129, %v5131
      %v5133 = vrot.slane %v4488, 1
      %v5134 = vsel %vm5083, %v5131, %v5133
      %v5135 = vrot.slane %v4489, 1
      %v5136 = vsel %vm5083, %v5133, %v5135
      %v5137 = vrot.slane %v4490, 1
      %v5138 = vsel %vm5083, %v5135, %v5137
      %v5139 = vrot.slane %v4491, 1
      %v5140 = vsel %vm5083, %v5137, %v5139
      %v5141 = vrot.slane %v4492, 1
      %v5142 = vsel %vm5083, %v5139, %v5141
      %v5143 = vrot.slane %v4493, 1
      %v5144 = vsel %vm5083, %v5141, %v5143
      %v5145 = vrot.slane %v4494, 1
      %v5146 = vsel %vm5083, %v5143, %v5145
      %v5147 = vrot.slane %v4495, 1
      %v5148 = vsel %vm5083, %v5145, %v5147
      %v5149 = vrot.slane %v4496, 1
      %v5150 = vsel %vm5083, %v5147, %v5149
      %v5151 = vrot.slane %v4497, 1
      %v5152 = vsel %vm5083, %v5149, %v5151
      %v5153 = vrot.slane %v4498, 1
      %v5154 = vsel %vm5083, %v5151, %v5153
      %v5155 = vrot.slane %v4499, 1
      %v5156 = vsel %vm5083, %v5153, %v5155
      %v5157 = vrot.slane %v4500, 1
      %v5158 = vsel %vm5083, %v5155, %v5157
      %v5159 = vrot.slane %v4501, 1
      %v5160 = vsel %vm5083, %v5157, %v5159
      %v5161 = vrot.slane %v4502, 1
      %v5162 = vsel %vm5083, %v5159, %v5161
      %v5163 = vrot.slane %v4503, 1
      %v5164 = vsel %vm5083, %v5161, %v5163
      %v5165 = vrot.slane %v4504, 1
      %v5166 = vsel %vm5083, %v5163, %v5165
      %v5167 = vrot.slane %v4505, 1
      %v5168 = vsel %vm5083, %v5165, %v5167
      %v5169 = vrot.slane %v4506, 1
      %v5170 = vsel %vm5083, %v5167, %v5169
      %v5171 = vrot.slane %v4507, 1
      %v5172 = vsel %vm5083, %v5169, %v5171
      %v5173 = vrot.slane %v4508, 1
      %v5174 = vsel %vm5083, %v5171, %v5173
      %v5175 = vrot.slane %v4509, 1
      %v5176 = vsel %vm5083, %v5173, %v5175
      %v5177 = vrot.slane %v4510, 1
      %v5178 = vsel %vm5083, %v5175, %v5177
      %v5179 = vrot.slane %v4511, 1
      %v5180 = vsel %vm5083, %v5177, %v5179
      %v5229 = vadd.f32 %v4844, %v5086
      %v5230 = vadd.f32 %v4847, %v5088
      %v5231 = vadd.f32 %v4852, %v5090
      %v5232 = vadd.f32 %v4855, %v5092
      %v5233 = vadd.f32 %v4860, %v5094
      %v5234 = vadd.f32 %v4863, %v5096
      %v5235 = vadd.f32 %v4868, %v5098
      %v5236 = vadd.f32 %v4871, %v5100
      %v5237 = vadd.f32 %v4876, %v5102
      %v5238 = vadd.f32 %v4879, %v5104
      %v5239 = vadd.f32 %v4884, %v5106
      %v5240 = vadd.f32 %v4887, %v5108
      %v5241 = vadd.f32 %v4892, %v5110
      %v5242 = vadd.f32 %v4895, %v5112
      %v5243 = vadd.f32 %v4900, %v5114
      %v5244 = vadd.f32 %v4903, %v5116
      %v5245 = vadd.f32 %v4908, %v5118
      %v5246 = vadd.f32 %v4911, %v5120
      %v5247 = vadd.f32 %v4916, %v5122
      %v5248 = vadd.f32 %v4919, %v5124
      %v5249 = vadd.f32 %v4924, %v5126
      %v5250 = vadd.f32 %v4927, %v5128
      %v5251 = vadd.f32 %v4932, %v5130
      %v5252 = vadd.f32 %v4935, %v5132
      %v5253 = vadd.f32 %v4940, %v5134
      %v5254 = vadd.f32 %v4943, %v5136
      %v5255 = vadd.f32 %v4948, %v5138
      %v5256 = vadd.f32 %v4951, %v5140
      %v5257 = vadd.f32 %v4956, %v5142
      %v5258 = vadd.f32 %v4959, %v5144
      %v5259 = vadd.f32 %v4964, %v5146
      %v5260 = vadd.f32 %v4967, %v5148
      %v5261 = vadd.f32 %v4972, %v5150
      %v5262 = vadd.f32 %v4975, %v5152
      %v5263 = vadd.f32 %v4980, %v5154
      %v5264 = vadd.f32 %v4983, %v5156
      %v5265 = vadd.f32 %v4988, %v5158
      %v5266 = vadd.f32 %v4991, %v5160
      %v5267 = vadd.f32 %v4996, %v5162
      %v5268 = vadd.f32 %v4999, %v5164
      %v5269 = vadd.f32 %v5004, %v5166
      %v5270 = vadd.f32 %v5007, %v5168
      %v5271 = vadd.f32 %v5012, %v5170
      %v5272 = vadd.f32 %v5015, %v5172
      %v5273 = vadd.f32 %v5020, %v5174
      %v5274 = vadd.f32 %v5023, %v5176
      %v5275 = vadd.f32 %v5028, %v5178
      %v5276 = vadd.f32 %v5031, %v5180
      %v5277 = vmax.f32 %v5229, 0.0
      %v5278 = vmax.f32 %v5230, 0.0
      %v5279 = vmax.f32 %v5231, 0.0
      %v5280 = vmax.f32 %v5232, 0.0
      %v5281 = vmax.f32 %v5233, 0.0
      %v5282 = vmax.f32 %v5234, 0.0
      %v5283 = vmax.f32 %v5235, 0.0
      %v5284 = vmax.f32 %v5236, 0.0
      %v5285 = vmax.f32 %v5237, 0.0
      %v5286 = vmax.f32 %v5238, 0.0
      %v5287 = vmax.f32 %v5239, 0.0
      %v5288 = vmax.f32 %v5240, 0.0
      %v5289 = vmax.f32 %v5241, 0.0
      %v5290 = vmax.f32 %v5242, 0.0
      %v5291 = vmax.f32 %v5243, 0.0
      %v5292 = vmax.f32 %v5244, 0.0
      %v5293 = vmax.f32 %v5245, 0.0
      %v5294 = vmax.f32 %v5246, 0.0
      %v5295 = vmax.f32 %v5247, 0.0
      %v5296 = vmax.f32 %v5248, 0.0
      %v5297 = vmax.f32 %v5249, 0.0
      %v5298 = vmax.f32 %v5250, 0.0
      %v5299 = vmax.f32 %v5251, 0.0
      %v5300 = vmax.f32 %v5252, 0.0
      %v5301 = vmax.f32 %v5253, 0.0
      %v5302 = vmax.f32 %v5254, 0.0
      %v5303 = vmax.f32 %v5255, 0.0
      %v5304 = vmax.f32 %v5256, 0.0
      %v5305 = vmax.f32 %v5257, 0.0
      %v5306 = vmax.f32 %v5258, 0.0
      %v5307 = vmax.f32 %v5259, 0.0
      %v5308 = vmax.f32 %v5260, 0.0
      %v5309 = vmax.f32 %v5261, 0.0
      %v5310 = vmax.f32 %v5262, 0.0
      %v5311 = vmax.f32 %v5263, 0.0
      %v5312 = vmax.f32 %v5264, 0.0
      %v5313 = vmax.f32 %v5265, 0.0
      %v5314 = vmax.f32 %v5266, 0.0
      %v5315 = vmax.f32 %v5267, 0.0
      %v5316 = vmax.f32 %v5268, 0.0
      %v5317 = vmax.f32 %v5269, 0.0
      %v5318 = vmax.f32 %v5270, 0.0
      %v5319 = vmax.f32 %v5271, 0.0
      %v5320 = vmax.f32 %v5272, 0.0
      %v5321 = vmax.f32 %v5273, 0.0
      %v5322 = vmax.f32 %v5274, 0.0
      %v5323 = vmax.f32 %v5275, 0.0
      %v5324 = vmax.f32 %v5276, 0.0
      %v5325 = vpack.c.bf16 %v5278, %v5277
      %v5326 = vpack.c.bf16 %v5280, %v5279
      %v5327 = vpack.c.bf16 %v5282, %v5281
      %v5328 = vpack.c.bf16 %v5284, %v5283
      %v5329 = vpack.c.bf16 %v5286, %v5285
      %v5330 = vpack.c.bf16 %v5288, %v5287
      %v5331 = vpack.c.bf16 %v5290, %v5289
      %v5332 = vpack.c.bf16 %v5292, %v5291
      %v5333 = vpack.c.bf16 %v5294, %v5293
      %v5334 = vpack.c.bf16 %v5296, %v5295
      %v5335 = vpack.c.bf16 %v5298, %v5297
      %v5336 = vpack.c.bf16 %v5300, %v5299
      %v5337 = vpack.c.bf16 %v5302, %v5301
      %v5338 = vpack.c.bf16 %v5304, %v5303
      %v5339 = vpack.c.bf16 %v5306, %v5305
      %v5340 = vpack.c.bf16 %v5308, %v5307
      %v5341 = vpack.c.bf16 %v5310, %v5309
      %v5342 = vpack.c.bf16 %v5312, %v5311
      %v5343 = vpack.c.bf16 %v5314, %v5313
      %v5344 = vpack.c.bf16 %v5316, %v5315
      %v5345 = vpack.c.bf16 %v5318, %v5317
      %v5346 = vpack.c.bf16 %v5320, %v5319
      %v5347 = vpack.c.bf16 %v5322, %v5321
      %v5348 = vpack.c.bf16 %v5324, %v5323
      %v5373 = vunpack.c.l.b16 %v5325
      %v5374 = vunpack.c.h.b16 %v5325
      %v5375 = vunpack.c.l.b16 %v5326
      %v5376 = vunpack.c.h.b16 %v5326
      %v5377 = vunpack.c.l.b16 %v5327
      %v5378 = vunpack.c.h.b16 %v5327
      %v5379 = vunpack.c.l.b16 %v5328
      %v5380 = vunpack.c.h.b16 %v5328
      %v5381 = vunpack.c.l.b16 %v5329
      %v5382 = vunpack.c.h.b16 %v5329
      %v5383 = vunpack.c.l.b16 %v5330
      %v5384 = vunpack.c.h.b16 %v5330
      %v5385 = vunpack.c.l.b16 %v5331
      %v5386 = vunpack.c.h.b16 %v5331
      %v5387 = vunpack.c.l.b16 %v5332
      %v5388 = vunpack.c.h.b16 %v5332
      %v5389 = vunpack.c.l.b16 %v5333
      %v5390 = vunpack.c.h.b16 %v5333
      %v5391 = vunpack.c.l.b16 %v5334
      %v5392 = vunpack.c.h.b16 %v5334
      %v5393 = vunpack.c.l.b16 %v5335
      %v5394 = vunpack.c.h.b16 %v5335
      %v5395 = vunpack.c.l.b16 %v5336
      %v5396 = vunpack.c.h.b16 %v5336
      %v5397 = vunpack.c.l.b16 %v5337
      %v5398 = vunpack.c.h.b16 %v5337
      %v5399 = vunpack.c.l.b16 %v5338
      %v5400 = vunpack.c.h.b16 %v5338
      %v5401 = vunpack.c.l.b16 %v5339
      %v5402 = vunpack.c.h.b16 %v5339
      %v5403 = vunpack.c.l.b16 %v5340
      %v5404 = vunpack.c.h.b16 %v5340
      %v5405 = vunpack.c.l.b16 %v5341
      %v5406 = vunpack.c.h.b16 %v5341
      %v5407 = vunpack.c.l.b16 %v5342
      %v5408 = vunpack.c.h.b16 %v5342
      %v5409 = vunpack.c.l.b16 %v5343
      %v5410 = vunpack.c.h.b16 %v5343
      %v5411 = vunpack.c.l.b16 %v5344
      %v5412 = vunpack.c.h.b16 %v5344
      %v5413 = vunpack.c.l.b16 %v5345
      %v5414 = vunpack.c.h.b16 %v5345
      %v5415 = vunpack.c.l.b16 %v5346
      %v5416 = vunpack.c.h.b16 %v5346
      %v5417 = vunpack.c.l.b16 %v5347
      %v5418 = vunpack.c.h.b16 %v5347
      %v5419 = vunpack.c.l.b16 %v5348
      %v5420 = vunpack.c.h.b16 %v5348
      %v5421 = vpack.c.b16 %v5373, %v5373
      %v5422 = vpack.c.b16 %v5374, %v5374
      %v5423 = vpack.c.b16 %v5375, %v5375
      %v5424 = vpack.c.b16 %v5376, %v5376
      %v5425 = vpack.c.b16 %v5377, %v5377
      %v5426 = vpack.c.b16 %v5378, %v5378
      %v5427 = vpack.c.b16 %v5379, %v5379
      %v5428 = vpack.c.b16 %v5380, %v5380
      %v5429 = vpack.c.b16 %v5381, %v5381
      %v5430 = vpack.c.b16 %v5382, %v5382
      %v5431 = vpack.c.b16 %v5383, %v5383
      %v5432 = vpack.c.b16 %v5384, %v5384
      %v5433 = vpack.c.b16 %v5385, %v5385
      %v5434 = vpack.c.b16 %v5386, %v5386
      %v5435 = vpack.c.b16 %v5387, %v5387
      %v5436 = vpack.c.b16 %v5388, %v5388
      %v5437 = vpack.c.b16 %v5389, %v5389
      %v5438 = vpack.c.b16 %v5390, %v5390
      %v5439 = vpack.c.b16 %v5391, %v5391
      %v5440 = vpack.c.b16 %v5392, %v5392
      %v5441 = vpack.c.b16 %v5393, %v5393
      %v5442 = vpack.c.b16 %v5394, %v5394
      %v5443 = vpack.c.b16 %v5395, %v5395
      %v5444 = vpack.c.b16 %v5396, %v5396
      %v5445 = vpack.c.b16 %v5397, %v5397
      %v5446 = vpack.c.b16 %v5398, %v5398
      %v5447 = vpack.c.b16 %v5399, %v5399
      %v5448 = vpack.c.b16 %v5400, %v5400
      %v5449 = vpack.c.b16 %v5401, %v5401
      %v5450 = vpack.c.b16 %v5402, %v5402
      %v5451 = vpack.c.b16 %v5403, %v5403
      %v5452 = vpack.c.b16 %v5404, %v5404
      %v5453 = vpack.c.b16 %v5405, %v5405
      %v5454 = vpack.c.b16 %v5406, %v5406
      %v5455 = vpack.c.b16 %v5407, %v5407
      %v5456 = vpack.c.b16 %v5408, %v5408
      %v5457 = vpack.c.b16 %v5409, %v5409
      %v5458 = vpack.c.b16 %v5410, %v5410
      %v5459 = vpack.c.b16 %v5411, %v5411
      %v5460 = vpack.c.b16 %v5412, %v5412
      %v5461 = vpack.c.b16 %v5413, %v5413
      %v5462 = vpack.c.b16 %v5414, %v5414
      %v5463 = vpack.c.b16 %v5415, %v5415
      %v5464 = vpack.c.b16 %v5416, %v5416
      %v5465 = vpack.c.b16 %v5417, %v5417
      %v5466 = vpack.c.b16 %v5418, %v5418
      %v5467 = vpack.c.b16 %v5419, %v5419
      %v5468 = vpack.c.b16 %v5420, %v5420
      %vm5517 = vcmask 27648
      %5518 = vst.msk [vmem:[%s226] sm:$0xf] %vm5517, %v5421
      %5519 = vst.msk [vmem:[%s226 + $0x4] sm:$0xf] %vm5517, %v5422
      %5520 = vst.msk [vmem:[%s226 + $0x8] sm:$0xf] %vm5517, %v5423
      %5521 = vst.msk [vmem:[%s226 + $0xc] sm:$0xf] %vm5517, %v5424
      %5522 = vst.msk [vmem:[%s226 + $0x10] sm:$0xf] %vm5517, %v5425
      %5523 = vst.msk [vmem:[%s226 + $0x14] sm:$0xf] %vm5517, %v5426
      %5524 = vst.msk [vmem:[%s226 + $0x18] sm:$0xf] %vm5517, %v5427
      %5525 = vst.msk [vmem:[%s226 + $0x1c] sm:$0xf] %vm5517, %v5428
      %5526 = vst.msk [vmem:[%s226 + $0x20] sm:$0xf] %vm5517, %v5429
      %5527 = vst.msk [vmem:[%s226 + $0x24] sm:$0xf] %vm5517, %v5430
      %5528 = vst.msk [vmem:[%s226 + $0x28] sm:$0xf] %vm5517, %v5431
      %5529 = vst.msk [vmem:[%s226 + $0x2c] sm:$0xf] %vm5517, %v5432
      %5530 = vst.msk [vmem:[%s226 + $0x30] sm:$0xf] %vm5517, %v5433
      %5531 = vst.msk [vmem:[%s226 + $0x34] sm:$0xf] %vm5517, %v5434
      %5532 = vst.msk [vmem:[%s226 + $0x38] sm:$0xf] %vm5517, %v5435
      %5533 = vst.msk [vmem:[%s226 + $0x3c] sm:$0xf] %vm5517, %v5436
      %5534 = vst.msk [vmem:[%s226 + $0x40] sm:$0xf] %vm5517, %v5437
      %5535 = vst.msk [vmem:[%s226 + $0x44] sm:$0xf] %vm5517, %v5438
      %5536 = vst.msk [vmem:[%s226 + $0x48] sm:$0xf] %vm5517, %v5439
      %5537 = vst.msk [vmem:[%s226 + $0x4c] sm:$0xf] %vm5517, %v5440
      %5538 = vst.msk [vmem:[%s226 + $0x50] sm:$0xf] %vm5517, %v5441
      %5539 = vst.msk [vmem:[%s226 + $0x54] sm:$0xf] %vm5517, %v5442
      %5540 = vst.msk [vmem:[%s226 + $0x58] sm:$0xf] %vm5517, %v5443
      %5541 = vst.msk [vmem:[%s226 + $0x5c] sm:$0xf] %vm5517, %v5444
      %5542 = vst.msk [vmem:[%s226 + $0x60] sm:$0xf] %vm5517, %v5445
      %5543 = vst.msk [vmem:[%s226 + $0x64] sm:$0xf] %vm5517, %v5446
      %5544 = vst.msk [vmem:[%s226 + $0x68] sm:$0xf] %vm5517, %v5447
      %5545 = vst.msk [vmem:[%s226 + $0x6c] sm:$0xf] %vm5517, %v5448
      %5546 = vst.msk [vmem:[%s226 + $0x70] sm:$0xf] %vm5517, %v5449
      %5547 = vst.msk [vmem:[%s226 + $0x74] sm:$0xf] %vm5517, %v5450
      %5548 = vst.msk [vmem:[%s226 + $0x78] sm:$0xf] %vm5517, %v5451
      %5549 = vst.msk [vmem:[%s226 + $0x7c] sm:$0xf] %vm5517, %v5452
      %5550 = vst.msk [vmem:[%s226 + $0x80] sm:$0xf] %vm5517, %v5453
      %5551 = vst.msk [vmem:[%s226 + $0x84] sm:$0xf] %vm5517, %v5454
      %5552 = vst.msk [vmem:[%s226 + $0x88] sm:$0xf] %vm5517, %v5455
      %5553 = vst.msk [vmem:[%s226 + $0x8c] sm:$0xf] %vm5517, %v5456
      %5554 = vst.msk [vmem:[%s226 + $0x90] sm:$0xf] %vm5517, %v5457
      %5555 = vst.msk [vmem:[%s226 + $0x94] sm:$0xf] %vm5517, %v5458
      %5556 = vst.msk [vmem:[%s226 + $0x98] sm:$0xf] %vm5517, %v5459
      %5557 = vst.msk [vmem:[%s226 + $0x9c] sm:$0xf] %vm5517, %v5460
      %5558 = vst.msk [vmem:[%s226 + $0xa0] sm:$0xf] %vm5517, %v5461
      %5559 = vst.msk [vmem:[%s226 + $0xa4] sm:$0xf] %vm5517, %v5462
      %5560 = vst.msk [vmem:[%s226 + $0xa8] sm:$0xf] %vm5517, %v5463
      %5561 = vst.msk [vmem:[%s226 + $0xac] sm:$0xf] %vm5517, %v5464
      %5562 = vst.msk [vmem:[%s226 + $0xb0] sm:$0xf] %vm5517, %v5465
      %5563 = vst.msk [vmem:[%s226 + $0xb4] sm:$0xf] %vm5517, %v5466
      %5564 = vst.msk [vmem:[%s226 + $0xb8] sm:$0xf] %vm5517, %v5467
      %5565 = vst.msk [vmem:[%s226 + $0xbc] sm:$0xf] %vm5517, %v5468
      %5566 = vst.msk [vmem:[%s226 + $0xc0] sm:$0xf] %vm5517, 0
      %5567 = vst.msk [vmem:[%s226 + $0xc4] sm:$0xf] %vm5517, 0
      %5568 = vst.msk [vmem:[%s226 + $0xc8] sm:$0xf] %vm5517, 0
      %5569 = vst.msk [vmem:[%s226 + $0xcc] sm:$0xf] %vm5517, 0
      %5570 = vst.msk [vmem:[%s226 + $0xd0] sm:$0xf] %vm5517, 0
      %5571 = vst.msk [vmem:[%s226 + $0xd4] sm:$0xf] %vm5517, 0
      %5572 = vst.msk [vmem:[%s226 + $0xd8] sm:$0xf] %vm5517, 0
      %5573 = vst.msk [vmem:[%s226 + $0xdc] sm:$0xf] %vm5517, 0
      %5574 = vst.msk [vmem:[%s226 + $0xe0] sm:$0xf] %vm5517, 0
      %s5575 = smul.u32 57, %s16
      %p5576 = scmp.lt.s32.totalorder %s5575, 113
      %s5577 = scalar_select %p5576, %s5575, 113
      %s5578 = smul.addr %s5577, 4
      %s5579 = scalar_lea.vmem %s5, %s5578
      // Predicated region
      $region41: #{tpu_custom_call.1} parent=39 // pred_check
        %p5580 = pneg %p144
      $region42: #{tpu_custom_call.1} parent=39 // pred_check_branch
        %5582 = sbr.rel (%p5580) target = $region44
      $region43: #{tpu_custom_call.1} parent=39 // pred_region
        %s5583 = smul.u32 57, %s16
      $region44: #{tpu_custom_call.1} parent=39 // pred_fallthru
        _
    $region40: #{tpu_custom_call.1} parent=5 // pred_fallthru
      _
    %p5584 = scmp.le.s32.totalorder 2, %s11
    // Predicated region
    $region45: #{tpu_custom_call.1} parent=5 // pred_check
      %p5585 = pneg %p5584
    $region46: #{tpu_custom_call.1} parent=5 // pred_check_branch
      %5587 = sbr.rel (%p5585) target = $region48
    $region47: #{tpu_custom_call.1} parent=5 // pred_region
      %s5588 = ssub.s32 %s11, 2
      // Predicated region
      $region49: #{tpu_custom_call.1} parent=47 // pred_check
        %p5589 = pneg %p150
      $region50: #{tpu_custom_call.1} parent=47 // pred_check_branch
        %5591 = sbr.rel (%p5589) target = $region52
      $region51: #{tpu_custom_call.1} parent=47 // pred_region
        %s5592 = smul.u32 57, %s17
        %p5593 = scmp.lt.s32.totalorder %s5592, 113
        %s5594 = scalar_select %p5593, %s5592, 113
        %s5595 = smul.addr %s5594, 4
        %s5596 = scalar_lea.vmem %s5, %s5595
      $region52: #{tpu_custom_call.1} parent=47 // pred_fallthru
        _
    $region48: #{tpu_custom_call.1} parent=5 // pred_fallthru
      _
  $region6: #{tpu_custom_call.1} parent=0 // loop_footer
    %s15 = sadd.s32 1, %s11
  $region7: #{tpu_custom_call.1} parent=0 // loop_footer_branch
    %10 = sbr.rel target = $region3
  $region8: #{tpu_custom_call.1} parent=0 // loop_exit
    _

</llo_original>
